<compile_context>
chip_gen: v7x
topology: tpu7x:2x2x1
jax: 0.10.0
libtpu: 0.0.40
codegen_flags: <defaults>
</compile_context>

<pallas_src>
import functools

import jax
import jax.numpy as jnp
from jax.experimental import pallas as pl
from jax.experimental.pallas import tpu as pltpu

LANE = 128      # lane width / N-tile alignment
MAX_TN = 512    # max lane-tile for the matmul
MAX_TK = 1024   # K is only tiled when it exceeds this


def _round_up(x, m):
    return (x + m - 1) // m * m


def _pick_tile(padded, max_tile, align):
    """Largest multiple of `align` that divides `padded` and is <= max_tile."""
    t = min(max_tile, padded)
    while t > align and padded % t != 0:
        t -= align
    return t


# ----------------------------------------------------------------------------
# Fused matmul + bias + residual + activation Pallas kernel
# ----------------------------------------------------------------------------
def _matmul_fused_kernel(*refs, act, has_bias, has_res):
    it = iter(refs)
    a_ref = next(it)
    b_ref = next(it)
    bias_ref = next(it) if has_bias else None
    res_ref = next(it) if has_res else None
    o_ref = next(it)
    acc_ref = next(it)

    @pl.when(pl.program_id(1) == 0)
    def _init():
        acc_ref[...] = jnp.zeros_like(acc_ref)

    acc_ref[...] += jnp.dot(a_ref[...], b_ref[...],
                            preferred_element_type=jnp.float32)

    @pl.when(pl.program_id(1) == pl.num_programs(1) - 1)
    def _finalize():
        acc = acc_ref[...]
        if has_bias:
            acc = acc + bias_ref[...]
        if has_res:
            acc = acc + res_ref[...].astype(jnp.float32)
        if act == "relu":
            acc = jnp.maximum(acc, 0.0)
        elif act == "tanh":
            acc = jnp.tanh(acc)
        o_ref[...] = acc.astype(o_ref.dtype)


def matmul_fused(a, b, bias=None, residual=None, act="none",
                 out_dtype=jnp.bfloat16):
    """out = act(a @ b + bias + residual).

    a: (M, K), b: (K, N); bias: (M,) or None; residual: (M, N) or None.
    A/B cast to bf16 for the MXU, accumulation in f32 VMEM scratch.
    Lane (last) dim of the output is N (kept large / dense by callers).
    """
    M, K = a.shape
    K2, N = b.shape
    assert K == K2
    a = a.astype(jnp.bfloat16)
    b = b.astype(jnp.bfloat16)

    Np = _round_up(N, LANE)
    TN = _pick_tile(Np, MAX_TN, LANE)
    if K > MAX_TK:
        Kp = _round_up(K, LANE)
        TK = _pick_tile(Kp, MAX_TK, LANE)
    else:
        Kp, TK = K, K
    nn_ = Np // TN
    nk = Kp // TK

    if Kp != K:
        a = jnp.pad(a, ((0, 0), (0, Kp - K)))
        b = jnp.pad(b, ((0, Kp - K), (0, 0)))
    if Np != N:
        b = jnp.pad(b, ((0, 0), (0, Np - N)))

    operands = [a, b]
    in_specs = [
        pl.BlockSpec((M, TK), lambda j, k: (0, k)),
        pl.BlockSpec((TK, TN), lambda j, k: (k, j)),
    ]
    has_bias = bias is not None
    if has_bias:
        operands.append(bias.reshape(M, 1).astype(jnp.float32))
        in_specs.append(pl.BlockSpec((M, 1), lambda j, k: (0, 0)))
    has_res = residual is not None
    if has_res:
        r = residual.astype(jnp.bfloat16)
        if Np != N:
            r = jnp.pad(r, ((0, 0), (0, Np - N)))
        operands.append(r)
        in_specs.append(pl.BlockSpec((M, TN), lambda j, k: (0, j)))

    out_itemsize = jnp.dtype(out_dtype).itemsize
    flops = 2 * M * Kp * Np
    transcendentals = M * Np if act == "tanh" else 0
    bytes_accessed = 2 * (M * Kp + Kp * Np) + M * Np * out_itemsize
    if has_res:
        bytes_accessed += 2 * M * Np

    out = pl.pallas_call(
        functools.partial(_matmul_fused_kernel, act=act,
                          has_bias=has_bias, has_res=has_res),
        out_shape=jax.ShapeDtypeStruct((M, Np), out_dtype),
        grid_spec=pltpu.PrefetchScalarGridSpec(
            num_scalar_prefetch=0,
            grid=(nn_, nk),
            in_specs=in_specs,
            out_specs=pl.BlockSpec((M, TN), lambda j, k: (0, j)),
            scratch_shapes=[pltpu.VMEM((M, TN), jnp.float32)],
        ),
        compiler_params=pltpu.CompilerParams(
            dimension_semantics=("parallel", "arbitrary"),
            vmem_limit_bytes=32 * 1024 * 1024,
        ),
        cost_estimate=pl.CostEstimate(
            flops=flops, transcendentals=transcendentals,
            bytes_accessed=bytes_accessed),
    )(*operands)

    if Np != N:
        out = out[:, :N]
    return out


# ----------------------------------------------------------------------------
# Conv / conv-transpose / resize wrappers (XLA glue + Pallas matmul)
# ----------------------------------------------------------------------------
def _im2col_cnhw(x, kh, kw, pad):
    """x: (C, N, H, W) -> patches (C*kh*kw, N*Ho*Wo)."""
    C, N, H, W = x.shape
    xp = jnp.pad(x, ((0, 0), (0, 0), (pad, pad), (pad, pad)))
    Ho = H + 2 * pad - kh + 1
    Wo = W + 2 * pad - kw + 1
    taps = []
    for i in range(kh):
        for j in range(kw):
            taps.append(xp[:, :, i:i + Ho, j:j + Wo])
    patches = jnp.stack(taps, axis=1)                       # (C, kh*kw, N, Ho, Wo)
    return patches.reshape(C * kh * kw, N * Ho * Wo), Ho, Wo


def conv2d_cnhw(x, w, b, pad=0, act="none", residual=None,
                out_dtype=jnp.bfloat16):
    """x: (Cin, N, H, W); w: (Cout, Cin, kh, kw) [PyTorch Conv2d layout]."""
    Cout, Cin, kh, kw = w.shape
    _, N, H, W = x.shape
    if kh == 1 and kw == 1 and pad == 0:
        patches, Ho, Wo = x.reshape(Cin, N * H * W), H, W
    else:
        patches, Ho, Wo = _im2col_cnhw(x, kh, kw, pad)
    a = w.reshape(Cout, Cin * kh * kw)
    res2 = residual.reshape(Cout, N * Ho * Wo) if residual is not None else None
    out = matmul_fused(a, patches, b, residual=res2, act=act,
                       out_dtype=out_dtype)                 # (Cout, N*Ho*Wo)
    return out.reshape(Cout, N, Ho, Wo)


def conv_transpose2d_4x4_s2_cnhw(x, w, b, act="relu", out_dtype=jnp.bfloat16):
    """ConvTranspose2d(k=4, s=2, p=1) via polyphase decomposition.

    x: (Cin, N, H, W); w: (Cin, Cout, 4, 4) [PyTorch ConvTranspose2d layout].
    All 4 output parities are produced by a single 3x3-tap matmul over the
    ORIGINAL input (no zero-inserted tensor); only 4 of the 9 taps per parity
    carry weight, the rest are zero rows.
    """
    Cin, N, H, W = x.shape
    _, Cout, _, _ = w.shape
    w_t = jnp.transpose(w, (1, 0, 2, 3))                    # (Cout, Cin, 4, 4)
    # sel[parity][tap] -> original kernel index (or -1 for a zero tap)
    sel = ((3, 1, -1), (-1, 2, 0))
    sub_ws = []
    for ph in range(2):
        for pw in range(2):
            sub = jnp.zeros((Cout, Cin, 3, 3), w.dtype)
            for th in range(3):
                khi = sel[ph][th]
                if khi < 0:
                    continue
                for tw in range(3):
                    kwi = sel[pw][tw]
                    if kwi < 0:
                        continue
                    sub = sub.at[:, :, th, tw].set(w_t[:, :, khi, kwi])
            sub_ws.append(sub)
    w_poly = jnp.concatenate(sub_ws, axis=0)                # (4*Cout, Cin, 3, 3)
    b_poly = jnp.tile(b, 4)                                 # (4*Cout,)

    y = conv2d_cnhw(x, w_poly, b_poly, pad=1, act=act,
                    out_dtype=out_dtype)                    # (4*Cout, N, H, W)
    # Interleave the 4 parities into the 2x-upsampled grid.
    y = y.reshape(2, 2, Cout, N, H, W)
    y = jnp.transpose(y, (2, 3, 4, 0, 5, 1)).reshape(Cout, N, 2 * H, 2 * W)
    return y


def _bilinear_matrix(in_size, out_size):
    # Matches nn.Upsample(mode='bilinear', align_corners=False).
    i = jnp.arange(out_size, dtype=jnp.float32)
    src = jnp.clip((i + 0.5) * (in_size / out_size) - 0.5, 0.0, in_size - 1)
    lo = jnp.floor(src).astype(jnp.int32)
    hi = jnp.minimum(lo + 1, in_size - 1)
    frac = src - lo.astype(jnp.float32)
    m = jnp.zeros((out_size, in_size), jnp.float32)
    m = m.at[jnp.arange(out_size), lo].add(1.0 - frac)
    m = m.at[jnp.arange(out_size), hi].add(frac)
    return m


def _nearest_matrix(in_size, out_size):
    # Matches nn.Upsample(mode='nearest'): src = floor(dst * in / out).
    i = jnp.arange(out_size)
    src = jnp.clip(jnp.floor(i * (in_size / out_size)).astype(jnp.int32),
                   0, in_size - 1)
    return jnp.zeros((out_size, in_size), jnp.float32).at[i, src].set(1.0)


def resize_cnhw(x, mh, mw, out_dtype=jnp.float32):
    """Separable resize as ONE lane-dense matmul with kron(mh, mw)."""
    C, N, H, W = x.shape
    Ho, Wo = mh.shape[0], mw.shape[0]
    kr = jnp.kron(mh, mw)                                   # (Ho*Wo, H*W)
    out = matmul_fused(x.reshape(C * N, H * W), kr.T, bias=None,
                       act="none", out_dtype=out_dtype)     # (C*N, Ho*Wo)
    return out.reshape(C, N, Ho, Wo)


# ----------------------------------------------------------------------------
# Model pieces (all activations in CNHW layout, bf16)
# ----------------------------------------------------------------------------
def basic_block_cnhw(x, p):
    h = conv2d_cnhw(x, p["w1"], p["b1"], pad=1, act="relu")
    # second conv: residual add + ReLU fused into the matmul epilogue
    return conv2d_cnhw(h, p["w2"], p["b2"], pad=1, act="relu", residual=x)


def upsample_resnet_layer_cnhw(x, p):
    upsampled = conv_transpose2d_4x4_s2_cnhw(x, p["up_w"], p["up_b"], act="relu")
    out = upsampled
    for blk in p["blocks"]:
        out = basic_block_cnhw(out, blk)
    return out, upsampled


def depth_interm_conv_cnhw(x, p, img_shape):
    x = conv_transpose2d_4x4_s2_cnhw(x, p["up_w"], p["up_b"], act="relu")
    x = conv2d_cnhw(x, p["sc_w"], p["sc_b"], pad=0, act="tanh")
    mh = _bilinear_matrix(x.shape[2], img_shape[0])
    mw = _bilinear_matrix(x.shape[3], img_shape[1])
    return resize_cnhw(x, mh, mw, out_dtype=jnp.float32)


def end_conv_cnhw(x, p, img_shape):
    x = conv2d_cnhw(x, p["w"], p["b"], pad=0, act="tanh")
    mh = _nearest_matrix(x.shape[2], img_shape[0])
    mw = _nearest_matrix(x.shape[3], img_shape[1])
    return resize_cnhw(x, mh, mw, out_dtype=jnp.float32)


def depth_decoder_forward(x_nchw, params, img_shape):
    # NCHW -> channel-major CNHW once; everything downstream stays channel-major.
    x = jnp.transpose(x_nchw, (1, 0, 2, 3)).astype(jnp.bfloat16)
    interms = []
    x, _ = upsample_resnet_layer_cnhw(x, params["layers"][0])
    for i in range(1, len(params["layers"])):
        x, upsampled = upsample_resnet_layer_cnhw(x, params["layers"][i])
        interm = depth_interm_conv_cnhw(upsampled,
                                        params["interm_convs"][i - 1], img_shape)
        interms.append(jnp.transpose(interm, (1, 0, 2, 3)))        # back to NCHW
    out = end_conv_cnhw(x, params["end_conv"], img_shape)
    return {"output": jnp.transpose(out, (1, 0, 2, 3)),
            "depth_interms": interms}


# ----------------------------------------------------------------------------
# Deterministic parameter initialisation (synthetic, matches module's shapes)
# ----------------------------------------------------------------------------
def init_params(key, input_nc, output_nc, base_nc, n_blocks):
    keys = iter(jax.random.split(key, 256))

    def nrm(shape, scale=0.1):
        return (jax.random.normal(next(keys), shape) * scale).astype(jnp.float32)

    layers, in_c, feat = [], input_nc, base_nc
    for nb in n_blocks:
        layer = {
            "up_w": nrm((in_c, feat, 4, 4)),       # ConvTranspose2d weight layout
            "up_b": nrm((feat,)),
            "blocks": [
                {"w1": nrm((feat, feat, 3, 3)), "b1": nrm((feat,)),
                 "w2": nrm((feat, feat, 3, 3)), "b2": nrm((feat,))}
                for _ in range(nb)
            ],
            "output_nc": feat,
        }
        layers.append(layer)
        in_c = feat
        feat = int(feat / 2)

    interm_convs = []
    for i in range(1, len(n_blocks)):
        lnc = layers[i]["output_nc"]
        interm_convs.append({
            "up_w": nrm((lnc, output_nc, 4, 4)),
            "up_b": nrm((output_nc,)),
            "sc_w": nrm((output_nc, output_nc, 1, 1)),
            "sc_b": nrm((output_nc,)),
        })

    end = {"w": nrm((output_nc, layers[-1]["output_nc"], 1, 1)),
           "b": nrm((output_nc,))}

    return {"layers": layers, "interm_convs": interm_convs, "end_conv": end}


# ----------------------------------------------------------------------------
if __name__ == "__main__":
    # Small config: DepthDecoder(input_nc=4, output_nc=1, base_nc=8,
    #                            n_blocks=[1, 1], img_shape=(16, 16))
    input_nc, output_nc, base_nc = 4, 1, 8
    n_blocks = [1, 1]
    img_shape = (16, 16)

    key = jax.random.PRNGKey(0)
    k_x, k_p = jax.random.split(key)
    x = jax.random.normal(k_x, (2, input_nc, 4, 4), dtype=jnp.float32)  # NCHW
    params = init_params(k_p, input_nc, output_nc, base_nc, n_blocks)

    forward = jax.jit(functools.partial(depth_decoder_forward, img_shape=img_shape))
    result = forward(x, params)

    jax.block_until_ready(result["output"])
    for t in result["depth_interms"]:
        jax.block_until_ready(t)

    assert result["output"].shape == (2, output_nc, *img_shape)
    assert len(result["depth_interms"]) == len(n_blocks) - 1
    assert result["depth_interms"][0].shape == (2, output_nc, *img_shape)

    print("KERNEL_OK")
</pallas_src>

<mosaic_0001>
module attributes {stable_mosaic.version = 11 : i64} {
  func.func private @main(%arg0: i32) attributes {dimension_semantics = [#tpu.dimension_semantics<core_parallel>], iteration_bounds = array<i64: 2>, tpu.core_type = #tpu.core_type<sc_scalar_subcore>, window_params = []} {
    return
  }
}

module attributes {stable_mosaic.version = 11 : i64} {
  func.func private @main(%arg0: i32) attributes {dimension_semantics = [#tpu.dimension_semantics<core_parallel>], iteration_bounds = array<i64: 2>, tpu.core_type = #tpu.core_type<sc_scalar_subcore>, window_params = []} {
    return
  }
}

module attributes {stable_mosaic.version = 11 : i64} {
  func.func @_matmul_fused_kernel(%arg0: i32, %arg1: i32, %arg2: memref<32x36xbf16, #tpu.memory_space<vmem>>, %arg3: memref<36x128xbf16, #tpu.memory_space<vmem>>, %arg4: memref<32x1xf32, #tpu.memory_space<vmem>>, %arg5: memref<32x128xbf16, #tpu.memory_space<vmem>>, %arg6: memref<32x128xf32, #tpu.memory_space<vmem>>) attributes {dimension_semantics = [#tpu.dimension_semantics<parallel>, #tpu.dimension_semantics<arbitrary>], iteration_bounds = array<i64: 1, 1>, scalar_prefetch = 0 : i64, scratch_operands = 1 : i64, tpu.core_type = #tpu.core_type<tc>, window_params = [{transform_indices = @transform_0, window_bounds = array<i64: 32, 36>}, {transform_indices = @transform_1, window_bounds = array<i64: 36, 128>}, {pipeline_mode = #tpu.pipeline_mode<synchronous>, transform_indices = @transform_2, window_bounds = array<i64: 32, 1>}, {transform_indices = @transform_3, window_bounds = array<i64: 32, 128>}]} {
    %c0_i32 = arith.constant 0 : i32
    %0 = arith.cmpi eq, %arg1, %c0_i32 : i32
    %1 = arith.extui %0 : i1 to i32
    %c0_i32_0 = arith.constant 0 : i32
    %2 = arith.cmpi ne, %1, %c0_i32_0 : i32
    scf.if %2 {
      %cst_10 = arith.constant 0.000000e+00 : f32
      %12 = vector.broadcast %cst_10 : f32 to vector<32x128xf32>
      %c0_11 = arith.constant 0 : index
      %c0_12 = arith.constant 0 : index
      %13 = vector.load %arg6[%c0_11, %c0_12] : memref<32x128xf32, #tpu.memory_space<vmem>>, vector<32x128xf32>
      tpu.vector_store %arg6[%c0_11, %c0_12], %12 {strides = array<i32>} : memref<32x128xf32, #tpu.memory_space<vmem>>, vector<32x128xf32>,
    } else {
    }
    %c0 = arith.constant 0 : index
    %c0_1 = arith.constant 0 : index
    %3 = vector.load %arg6[%c0, %c0_1] : memref<32x128xf32, #tpu.memory_space<vmem>>, vector<32x128xf32>
    %c0_2 = arith.constant 0 : index
    %c0_3 = arith.constant 0 : index
    %4 = vector.load %arg2[%c0_2, %c0_3] : memref<32x36xbf16, #tpu.memory_space<vmem>>, vector<32x36xbf16>
    %c0_4 = arith.constant 0 : index
    %c0_5 = arith.constant 0 : index
    %5 = vector.load %arg3[%c0_4, %c0_5] : memref<36x128xbf16, #tpu.memory_space<vmem>>, vector<36x128xbf16>
    %cst = arith.constant dense<0.000000e+00> : vector<32x128xf32>
    %6 = tpu.matmul %4, %5, %cst {dimension_numbers = #tpu.dot_dimension_numbers<[1], [0], [0], [1], [0, 0, 1, 1], [], []>} : vector<32x36xbf16>, vector<36x128xbf16>, vector<32x128xf32> -> vector<32x128xf32>
    %7 = arith.addf %3, %6 : vector<32x128xf32>
    %c0_6 = arith.constant 0 : index
    %c0_7 = arith.constant 0 : index
    %8 = vector.load %arg6[%c0_6, %c0_7] : memref<32x128xf32, #tpu.memory_space<vmem>>, vector<32x128xf32>
    tpu.vector_store %arg6[%c0_6, %c0_7], %7 {strides = array<i32>} : memref<32x128xf32, #tpu.memory_space<vmem>>, vector<32x128xf32>,
    %c0_i32_8 = arith.constant 0 : i32
    %9 = arith.cmpi eq, %arg1, %c0_i32_8 : i32
    %10 = arith.extui %9 : i1 to i32
    %c0_i32_9 = arith.constant 0 : i32
    %11 = arith.cmpi ne, %10, %c0_i32_9 : i32
    scf.if %11 {
      %c0_10 = arith.constant 0 : index
      %c0_11 = arith.constant 0 : index
      %12 = vector.load %arg6[%c0_10, %c0_11] : memref<32x128xf32, #tpu.memory_space<vmem>>, vector<32x128xf32>
      %c0_12 = arith.constant 0 : index
      %c0_13 = arith.constant 0 : index
      %13 = vector.load %arg4[%c0_12, %c0_13] : memref<32x1xf32, #tpu.memory_space<vmem>>, vector<32x1xf32>
      %14 = vector.broadcast %13 : vector<32x1xf32> to vector<32x128xf32>
      %15 = arith.addf %12, %14 : vector<32x128xf32>
      %cst_14 = arith.constant 0.000000e+00 : f32
      %16 = vector.broadcast %cst_14 : f32 to vector<32x128xf32>
      %17 = arith.maximumf %15, %16 : vector<32x128xf32>
      %18 = arith.truncf %17 : vector<32x128xf32> to vector<32x128xbf16>
      %c0_15 = arith.constant 0 : index
      %c0_16 = arith.constant 0 : index
      %19 = vector.load %arg5[%c0_15, %c0_16] : memref<32x128xbf16, #tpu.memory_space<vmem>>, vector<32x128xbf16>
      tpu.vector_store %arg5[%c0_15, %c0_16], %18 {strides = array<i32>} : memref<32x128xbf16, #tpu.memory_space<vmem>>, vector<32x128xbf16>,
    } else {
    }
    return
  }
  func.func @transform_0(%arg0: i32, %arg1: i32) -> (i32, i32) {
    %c0_i32 = arith.constant 0 : i32
    %c0_i32_0 = arith.constant 0 : i32
    return %c0_i32, %arg1 : i32, i32
  }
  func.func @transform_1(%arg0: i32, %arg1: i32) -> (i32, i32) {
    %c0_i32 = arith.constant 0 : i32
    return %arg1, %arg0 : i32, i32
  }
  func.func @transform_2(%arg0: i32, %arg1: i32) -> (i32, i32) {
    %c0_i32 = arith.constant 0 : i32
    %c0_i32_0 = arith.constant 0 : i32
    %c0_i32_1 = arith.constant 0 : i32
    return %c0_i32, %c0_i32_0 : i32, i32
  }
  func.func @transform_3(%arg0: i32, %arg1: i32) -> (i32, i32) {
    %c0_i32 = arith.constant 0 : i32
    %c0_i32_0 = arith.constant 0 : i32
    return %c0_i32, %arg0 : i32, i32
  }
}

module attributes {stable_mosaic.version = 11 : i64} {
  func.func @_matmul_fused_kernel(%arg0: i32, %arg1: i32, %arg2: memref<8x72xbf16, #tpu.memory_space<vmem>>, %arg3: memref<72x128xbf16, #tpu.memory_space<vmem>>, %arg4: memref<8x1xf32, #tpu.memory_space<vmem>>, %arg5: memref<8x128xbf16, #tpu.memory_space<vmem>>, %arg6: memref<8x128xf32, #tpu.memory_space<vmem>>) attributes {dimension_semantics = [#tpu.dimension_semantics<parallel>, #tpu.dimension_semantics<arbitrary>], iteration_bounds = array<i64: 1, 1>, scalar_prefetch = 0 : i64, scratch_operands = 1 : i64, tpu.core_type = #tpu.core_type<tc>, window_params = [{transform_indices = @transform_0, window_bounds = array<i64: 8, 72>}, {transform_indices = @transform_1, window_bounds = array<i64: 72, 128>}, {pipeline_mode = #tpu.pipeline_mode<synchronous>, transform_indices = @transform_2, window_bounds = array<i64: 8, 1>}, {transform_indices = @transform_3, window_bounds = array<i64: 8, 128>}]} {
    %c0_i32 = arith.constant 0 : i32
    %0 = arith.cmpi eq, %arg1, %c0_i32 : i32
    %1 = arith.extui %0 : i1 to i32
    %c0_i32_0 = arith.constant 0 : i32
    %2 = arith.cmpi ne, %1, %c0_i32_0 : i32
    scf.if %2 {
      %cst_10 = arith.constant 0.000000e+00 : f32
      %12 = vector.broadcast %cst_10 : f32 to vector<8x128xf32>
      %c0_11 = arith.constant 0 : index
      %c0_12 = arith.constant 0 : index
      %13 = vector.load %arg6[%c0_11, %c0_12] : memref<8x128xf32, #tpu.memory_space<vmem>>, vector<8x128xf32>
      tpu.vector_store %arg6[%c0_11, %c0_12], %12 {strides = array<i32>} : memref<8x128xf32, #tpu.memory_space<vmem>>, vector<8x128xf32>,
    } else {
    }
    %c0 = arith.constant 0 : index
    %c0_1 = arith.constant 0 : index
    %3 = vector.load %arg6[%c0, %c0_1] : memref<8x128xf32, #tpu.memory_space<vmem>>, vector<8x128xf32>
    %c0_2 = arith.constant 0 : index
    %c0_3 = arith.constant 0 : index
    %4 = vector.load %arg2[%c0_2, %c0_3] : memref<8x72xbf16, #tpu.memory_space<vmem>>, vector<8x72xbf16>
    %c0_4 = arith.constant 0 : index
    %c0_5 = arith.constant 0 : index
    %5 = vector.load %arg3[%c0_4, %c0_5] : memref<72x128xbf16, #tpu.memory_space<vmem>>, vector<72x128xbf16>
    %cst = arith.constant dense<0.000000e+00> : vector<8x128xf32>
    %6 = tpu.matmul %4, %5, %cst {dimension_numbers = #tpu.dot_dimension_numbers<[1], [0], [0], [1], [0, 0, 1, 1], [], []>} : vector<8x72xbf16>, vector<72x128xbf16>, vector<8x128xf32> -> vector<8x128xf32>
    %7 = arith.addf %3, %6 : vector<8x128xf32>
    %c0_6 = arith.constant 0 : index
    %c0_7 = arith.constant 0 : index
    %8 = vector.load %arg6[%c0_6, %c0_7] : memref<8x128xf32, #tpu.memory_space<vmem>>, vector<8x128xf32>
    tpu.vector_store %arg6[%c0_6, %c0_7], %7 {strides = array<i32>} : memref<8x128xf32, #tpu.memory_space<vmem>>, vector<8x128xf32>,
    %c0_i32_8 = arith.constant 0 : i32
    %9 = arith.cmpi eq, %arg1, %c0_i32_8 : i32
    %10 = arith.extui %9 : i1 to i32
    %c0_i32_9 = arith.constant 0 : i32
    %11 = arith.cmpi ne, %10, %c0_i32_9 : i32
    scf.if %11 {
      %c0_10 = arith.constant 0 : index
      %c0_11 = arith.constant 0 : index
      %12 = vector.load %arg6[%c0_10, %c0_11] : memref<8x128xf32, #tpu.memory_space<vmem>>, vector<8x128xf32>
      %c0_12 = arith.constant 0 : index
      %c0_13 = arith.constant 0 : index
      %13 = vector.load %arg4[%c0_12, %c0_13] : memref<8x1xf32, #tpu.memory_space<vmem>>, vector<8x1xf32>
      %14 = vector.broadcast %13 : vector<8x1xf32> to vector<8x128xf32>
      %15 = arith.addf %12, %14 : vector<8x128xf32>
      %cst_14 = arith.constant 0.000000e+00 : f32
      %16 = vector.broadcast %cst_14 : f32 to vector<8x128xf32>
      %17 = arith.maximumf %15, %16 : vector<8x128xf32>
      %18 = arith.truncf %17 : vector<8x128xf32> to vector<8x128xbf16>
      %c0_15 = arith.constant 0 : index
      %c0_16 = arith.constant 0 : index
      %19 = vector.load %arg5[%c0_15, %c0_16] : memref<8x128xbf16, #tpu.memory_space<vmem>>, vector<8x128xbf16>
      tpu.vector_store %arg5[%c0_15, %c0_16], %18 {strides = array<i32>} : memref<8x128xbf16, #tpu.memory_space<vmem>>, vector<8x128xbf16>,
    } else {
    }
    return
  }
  func.func @transform_0(%arg0: i32, %arg1: i32) -> (i32, i32) {
    %c0_i32 = arith.constant 0 : i32
    %c0_i32_0 = arith.constant 0 : i32
    return %c0_i32, %arg1 : i32, i32
  }
  func.func @transform_1(%arg0: i32, %arg1: i32) -> (i32, i32) {
    %c0_i32 = arith.constant 0 : i32
    return %arg1, %arg0 : i32, i32
  }
  func.func @transform_2(%arg0: i32, %arg1: i32) -> (i32, i32) {
    %c0_i32 = arith.constant 0 : i32
    %c0_i32_0 = arith.constant 0 : i32
    %c0_i32_1 = arith.constant 0 : i32
    return %c0_i32, %c0_i32_0 : i32, i32
  }
  func.func @transform_3(%arg0: i32, %arg1: i32) -> (i32, i32) {
    %c0_i32 = arith.constant 0 : i32
    %c0_i32_0 = arith.constant 0 : i32
    return %c0_i32, %arg0 : i32, i32
  }
}

module attributes {stable_mosaic.version = 11 : i64} {
  func.func @_matmul_fused_kernel(%arg0: i32, %arg1: i32, %arg2: memref<8x72xbf16, #tpu.memory_space<vmem>>, %arg3: memref<72x128xbf16, #tpu.memory_space<vmem>>, %arg4: memref<8x1xf32, #tpu.memory_space<vmem>>, %arg5: memref<8x128xbf16, #tpu.memory_space<vmem>>, %arg6: memref<8x128xbf16, #tpu.memory_space<vmem>>, %arg7: memref<8x128xf32, #tpu.memory_space<vmem>>) attributes {dimension_semantics = [#tpu.dimension_semantics<parallel>, #tpu.dimension_semantics<arbitrary>], iteration_bounds = array<i64: 1, 1>, scalar_prefetch = 0 : i64, scratch_operands = 1 : i64, tpu.core_type = #tpu.core_type<tc>, window_params = [{transform_indices = @transform_0, window_bounds = array<i64: 8, 72>}, {transform_indices = @transform_1, window_bounds = array<i64: 72, 128>}, {pipeline_mode = #tpu.pipeline_mode<synchronous>, transform_indices = @transform_2, window_bounds = array<i64: 8, 1>}, {transform_indices = @transform_3, window_bounds = array<i64: 8, 128>}, {transform_indices = @transform_4, window_bounds = array<i64: 8, 128>}]} {
    %c0_i32 = arith.constant 0 : i32
    %0 = arith.cmpi eq, %arg1, %c0_i32 : i32
    %1 = arith.extui %0 : i1 to i32
    %c0_i32_0 = arith.constant 0 : i32
    %2 = arith.cmpi ne, %1, %c0_i32_0 : i32
    scf.if %2 {
      %cst_10 = arith.constant 0.000000e+00 : f32
      %12 = vector.broadcast %cst_10 : f32 to vector<8x128xf32>
      %c0_11 = arith.constant 0 : index
      %c0_12 = arith.constant 0 : index
      %13 = vector.load %arg7[%c0_11, %c0_12] : memref<8x128xf32, #tpu.memory_space<vmem>>, vector<8x128xf32>
      tpu.vector_store %arg7[%c0_11, %c0_12], %12 {strides = array<i32>} : memref<8x128xf32, #tpu.memory_space<vmem>>, vector<8x128xf32>,
    } else {
    }
    %c0 = arith.constant 0 : index
    %c0_1 = arith.constant 0 : index
    %3 = vector.load %arg7[%c0, %c0_1] : memref<8x128xf32, #tpu.memory_space<vmem>>, vector<8x128xf32>
    %c0_2 = arith.constant 0 : index
    %c0_3 = arith.constant 0 : index
    %4 = vector.load %arg2[%c0_2, %c0_3] : memref<8x72xbf16, #tpu.memory_space<vmem>>, vector<8x72xbf16>
    %c0_4 = arith.constant 0 : index
    %c0_5 = arith.constant 0 : index
    %5 = vector.load %arg3[%c0_4, %c0_5] : memref<72x128xbf16, #tpu.memory_space<vmem>>, vector<72x128xbf16>
    %cst = arith.constant dense<0.000000e+00> : vector<8x128xf32>
    %6 = tpu.matmul %4, %5, %cst {dimension_numbers = #tpu.dot_dimension_numbers<[1], [0], [0], [1], [0, 0, 1, 1], [], []>} : vector<8x72xbf16>, vector<72x128xbf16>, vector<8x128xf32> -> vector<8x128xf32>
    %7 = arith.addf %3, %6 : vector<8x128xf32>
    %c0_6 = arith.constant 0 : index
    %c0_7 = arith.constant 0 : index
    %8 = vector.load %arg7[%c0_6, %c0_7] : memref<8x128xf32, #tpu.memory_space<vmem>>, vector<8x128xf32>
    tpu.vector_store %arg7[%c0_6, %c0_7], %7 {strides = array<i32>} : memref<8x128xf32, #tpu.memory_space<vmem>>, vector<8x128xf32>,
    %c0_i32_8 = arith.constant 0 : i32
    %9 = arith.cmpi eq, %arg1, %c0_i32_8 : i32
    %10 = arith.extui %9 : i1 to i32
    %c0_i32_9 = arith.constant 0 : i32
    %11 = arith.cmpi ne, %10, %c0_i32_9 : i32
    scf.if %11 {
      %c0_10 = arith.constant 0 : index
      %c0_11 = arith.constant 0 : index
      %12 = vector.load %arg7[%c0_10, %c0_11] : memref<8x128xf32, #tpu.memory_space<vmem>>, vector<8x128xf32>
      %c0_12 = arith.constant 0 : index
      %c0_13 = arith.constant 0 : index
      %13 = vector.load %arg4[%c0_12, %c0_13] : memref<8x1xf32, #tpu.memory_space<vmem>>, vector<8x1xf32>
      %14 = vector.broadcast %13 : vector<8x1xf32> to vector<8x128xf32>
      %15 = arith.addf %12, %14 : vector<8x128xf32>
      %c0_14 = arith.constant 0 : index
      %c0_15 = arith.constant 0 : index
      %16 = vector.load %arg5[%c0_14, %c0_15] : memref<8x128xbf16, #tpu.memory_space<vmem>>, vector<8x128xbf16>
      %17 = arith.extf %16 : vector<8x128xbf16> to vector<8x128xf32>
      %18 = arith.addf %15, %17 : vector<8x128xf32>
      %cst_16 = arith.constant 0.000000e+00 : f32
      %19 = vector.broadcast %cst_16 : f32 to vector<8x128xf32>
      %20 = arith.maximumf %18, %19 : vector<8x128xf32>
      %21 = arith.truncf %20 : vector<8x128xf32> to vector<8x128xbf16>
      %c0_17 = arith.constant 0 : index
      %c0_18 = arith.constant 0 : index
      %22 = vector.load %arg6[%c0_17, %c0_18] : memref<8x128xbf16, #tpu.memory_space<vmem>>, vector<8x128xbf16>
      tpu.vector_store %arg6[%c0_17, %c0_18], %21 {strides = array<i32>} : memref<8x128xbf16, #tpu.memory_space<vmem>>, vector<8x128xbf16>,
    } else {
    }
    return
  }
  func.func @transform_0(%arg0: i32, %arg1: i32) -> (i32, i32) {
    %c0_i32 = arith.constant 0 : i32
    %c0_i32_0 = arith.constant 0 : i32
    return %c0_i32, %arg1 : i32, i32
  }
  func.func @transform_1(%arg0: i32, %arg1: i32) -> (i32, i32) {
    %c0_i32 = arith.constant 0 : i32
    return %arg1, %arg0 : i32, i32
  }
  func.func @transform_2(%arg0: i32, %arg1: i32) -> (i32, i32) {
    %c0_i32 = arith.constant 0 : i32
    %c0_i32_0 = arith.constant 0 : i32
    %c0_i32_1 = arith.constant 0 : i32
    return %c0_i32, %c0_i32_0 : i32, i32
  }
  func.func @transform_3(%arg0: i32, %arg1: i32) -> (i32, i32) {
    %c0_i32 = arith.constant 0 : i32
    %c0_i32_0 = arith.constant 0 : i32
    return %c0_i32, %arg0 : i32, i32
  }
  func.func @transform_4(%arg0: i32, %arg1: i32) -> (i32, i32) {
    %c0_i32 = arith.constant 0 : i32
    %c0_i32_0 = arith.constant 0 : i32
    return %c0_i32, %arg0 : i32, i32
  }
}

module attributes {stable_mosaic.version = 11 : i64} {
  func.func @_matmul_fused_kernel(%arg0: i32, %arg1: i32, %arg2: memref<16x72xbf16, #tpu.memory_space<vmem>>, %arg3: memref<72x128xbf16, #tpu.memory_space<vmem>>, %arg4: memref<16x1xf32, #tpu.memory_space<vmem>>, %arg5: memref<16x128xbf16, #tpu.memory_space<vmem>>, %arg6: memref<16x128xf32, #tpu.memory_space<vmem>>) attributes {dimension_semantics = [#tpu.dimension_semantics<parallel>, #tpu.dimension_semantics<arbitrary>], iteration_bounds = array<i64: 1, 1>, scalar_prefetch = 0 : i64, scratch_operands = 1 : i64, tpu.core_type = #tpu.core_type<tc>, window_params = [{transform_indices = @transform_0, window_bounds = array<i64: 16, 72>}, {transform_indices = @transform_1, window_bounds = array<i64: 72, 128>}, {pipeline_mode = #tpu.pipeline_mode<synchronous>, transform_indices = @transform_2, window_bounds = array<i64: 16, 1>}, {transform_indices = @transform_3, window_bounds = array<i64: 16, 128>}]} {
    %c0_i32 = arith.constant 0 : i32
    %0 = arith.cmpi eq, %arg1, %c0_i32 : i32
    %1 = arith.extui %0 : i1 to i32
    %c0_i32_0 = arith.constant 0 : i32
    %2 = arith.cmpi ne, %1, %c0_i32_0 : i32
    scf.if %2 {
      %cst_10 = arith.constant 0.000000e+00 : f32
      %12 = vector.broadcast %cst_10 : f32 to vector<16x128xf32>
      %c0_11 = arith.constant 0 : index
      %c0_12 = arith.constant 0 : index
      %13 = vector.load %arg6[%c0_11, %c0_12] : memref<16x128xf32, #tpu.memory_space<vmem>>, vector<16x128xf32>
      tpu.vector_store %arg6[%c0_11, %c0_12], %12 {strides = array<i32>} : memref<16x128xf32, #tpu.memory_space<vmem>>, vector<16x128xf32>,
    } else {
    }
    %c0 = arith.constant 0 : index
    %c0_1 = arith.constant 0 : index
    %3 = vector.load %arg6[%c0, %c0_1] : memref<16x128xf32, #tpu.memory_space<vmem>>, vector<16x128xf32>
    %c0_2 = arith.constant 0 : index
    %c0_3 = arith.constant 0 : index
    %4 = vector.load %arg2[%c0_2, %c0_3] : memref<16x72xbf16, #tpu.memory_space<vmem>>, vector<16x72xbf16>
    %c0_4 = arith.constant 0 : index
    %c0_5 = arith.constant 0 : index
    %5 = vector.load %arg3[%c0_4, %c0_5] : memref<72x128xbf16, #tpu.memory_space<vmem>>, vector<72x128xbf16>
    %cst = arith.constant dense<0.000000e+00> : vector<16x128xf32>
    %6 = tpu.matmul %4, %5, %cst {dimension_numbers = #tpu.dot_dimension_numbers<[1], [0], [0], [1], [0, 0, 1, 1], [], []>} : vector<16x72xbf16>, vector<72x128xbf16>, vector<16x128xf32> -> vector<16x128xf32>
    %7 = arith.addf %3, %6 : vector<16x128xf32>
    %c0_6 = arith.constant 0 : index
    %c0_7 = arith.constant 0 : index
    %8 = vector.load %arg6[%c0_6, %c0_7] : memref<16x128xf32, #tpu.memory_space<vmem>>, vector<16x128xf32>
    tpu.vector_store %arg6[%c0_6, %c0_7], %7 {strides = array<i32>} : memref<16x128xf32, #tpu.memory_space<vmem>>, vector<16x128xf32>,
    %c0_i32_8 = arith.constant 0 : i32
    %9 = arith.cmpi eq, %arg1, %c0_i32_8 : i32
    %10 = arith.extui %9 : i1 to i32
    %c0_i32_9 = arith.constant 0 : i32
    %11 = arith.cmpi ne, %10, %c0_i32_9 : i32
    scf.if %11 {
      %c0_10 = arith.constant 0 : index
      %c0_11 = arith.constant 0 : index
      %12 = vector.load %arg6[%c0_10, %c0_11] : memref<16x128xf32, #tpu.memory_space<vmem>>, vector<16x128xf32>
      %c0_12 = arith.constant 0 : index
      %c0_13 = arith.constant 0 : index
      %13 = vector.load %arg4[%c0_12, %c0_13] : memref<16x1xf32, #tpu.memory_space<vmem>>, vector<16x1xf32>
      %14 = vector.broadcast %13 : vector<16x1xf32> to vector<16x128xf32>
      %15 = arith.addf %12, %14 : vector<16x128xf32>
      %cst_14 = arith.constant 0.000000e+00 : f32
      %16 = vector.broadcast %cst_14 : f32 to vector<16x128xf32>
      %17 = arith.maximumf %15, %16 : vector<16x128xf32>
      %18 = arith.truncf %17 : vector<16x128xf32> to vector<16x128xbf16>
      %c0_15 = arith.constant 0 : index
      %c0_16 = arith.constant 0 : index
      %19 = vector.load %arg5[%c0_15, %c0_16] : memref<16x128xbf16, #tpu.memory_space<vmem>>, vector<16x128xbf16>
      tpu.vector_store %arg5[%c0_15, %c0_16], %18 {strides = array<i32>} : memref<16x128xbf16, #tpu.memory_space<vmem>>, vector<16x128xbf16>,
    } else {
    }
    return
  }
  func.func @transform_0(%arg0: i32, %arg1: i32) -> (i32, i32) {
    %c0_i32 = arith.constant 0 : i32
    %c0_i32_0 = arith.constant 0 : i32
    return %c0_i32, %arg1 : i32, i32
  }
  func.func @transform_1(%arg0: i32, %arg1: i32) -> (i32, i32) {
    %c0_i32 = arith.constant 0 : i32
    return %arg1, %arg0 : i32, i32
  }
  func.func @transform_2(%arg0: i32, %arg1: i32) -> (i32, i32) {
    %c0_i32 = arith.constant 0 : i32
    %c0_i32_0 = arith.constant 0 : i32
    %c0_i32_1 = arith.constant 0 : i32
    return %c0_i32, %c0_i32_0 : i32, i32
  }
  func.func @transform_3(%arg0: i32, %arg1: i32) -> (i32, i32) {
    %c0_i32 = arith.constant 0 : i32
    %c0_i32_0 = arith.constant 0 : i32
    return %c0_i32, %arg0 : i32, i32
  }
}

module attributes {stable_mosaic.version = 11 : i64} {
  func.func @_matmul_fused_kernel(%arg0: i32, %arg1: i32, %arg2: memref<4x36xbf16, #tpu.memory_space<vmem>>, %arg3: memref<36x512xbf16, #tpu.memory_space<vmem>>, %arg4: memref<4x1xf32, #tpu.memory_space<vmem>>, %arg5: memref<4x512xbf16, #tpu.memory_space<vmem>>, %arg6: memref<4x512xf32, #tpu.memory_space<vmem>>) attributes {dimension_semantics = [#tpu.dimension_semantics<parallel>, #tpu.dimension_semantics<arbitrary>], iteration_bounds = array<i64: 1, 1>, scalar_prefetch = 0 : i64, scratch_operands = 1 : i64, tpu.core_type = #tpu.core_type<tc>, window_params = [{transform_indices = @transform_0, window_bounds = array<i64: 4, 36>}, {transform_indices = @transform_1, window_bounds = array<i64: 36, 512>}, {pipeline_mode = #tpu.pipeline_mode<synchronous>, transform_indices = @transform_2, window_bounds = array<i64: 4, 1>}, {transform_indices = @transform_3, window_bounds = array<i64: 4, 512>}]} {
    %c0_i32 = arith.constant 0 : i32
    %0 = arith.cmpi eq, %arg1, %c0_i32 : i32
    %1 = arith.extui %0 : i1 to i32
    %c0_i32_0 = arith.constant 0 : i32
    %2 = arith.cmpi ne, %1, %c0_i32_0 : i32
    scf.if %2 {
      %cst_10 = arith.constant 0.000000e+00 : f32
      %12 = vector.broadcast %cst_10 : f32 to vector<4x512xf32>
      %c0_11 = arith.constant 0 : index
      %c0_12 = arith.constant 0 : index
      %13 = vector.load %arg6[%c0_11, %c0_12] : memref<4x512xf32, #tpu.memory_space<vmem>>, vector<4x512xf32>
      tpu.vector_store %arg6[%c0_11, %c0_12], %12 {strides = array<i32>} : memref<4x512xf32, #tpu.memory_space<vmem>>, vector<4x512xf32>,
    } else {
    }
    %c0 = arith.constant 0 : index
    %c0_1 = arith.constant 0 : index
    %3 = vector.load %arg6[%c0, %c0_1] : memref<4x512xf32, #tpu.memory_space<vmem>>, vector<4x512xf32>
    %c0_2 = arith.constant 0 : index
    %c0_3 = arith.constant 0 : index
    %4 = vector.load %arg2[%c0_2, %c0_3] : memref<4x36xbf16, #tpu.memory_space<vmem>>, vector<4x36xbf16>
    %c0_4 = arith.constant 0 : index
    %c0_5 = arith.constant 0 : index
    %5 = vector.load %arg3[%c0_4, %c0_5] : memref<36x512xbf16, #tpu.memory_space<vmem>>, vector<36x512xbf16>
    %cst = arith.constant dense<0.000000e+00> : vector<4x512xf32>
    %6 = tpu.matmul %4, %5, %cst {dimension_numbers = #tpu.dot_dimension_numbers<[1], [0], [0], [1], [0, 0, 1, 1], [], []>} : vector<4x36xbf16>, vector<36x512xbf16>, vector<4x512xf32> -> vector<4x512xf32>
    %7 = arith.addf %3, %6 : vector<4x512xf32>
    %c0_6 = arith.constant 0 : index
    %c0_7 = arith.constant 0 : index
    %8 = vector.load %arg6[%c0_6, %c0_7] : memref<4x512xf32, #tpu.memory_space<vmem>>, vector<4x512xf32>
    tpu.vector_store %arg6[%c0_6, %c0_7], %7 {strides = array<i32>} : memref<4x512xf32, #tpu.memory_space<vmem>>, vector<4x512xf32>,
    %c0_i32_8 = arith.constant 0 : i32
    %9 = arith.cmpi eq, %arg1, %c0_i32_8 : i32
    %10 = arith.extui %9 : i1 to i32
    %c0_i32_9 = arith.constant 0 : i32
    %11 = arith.cmpi ne, %10, %c0_i32_9 : i32
    scf.if %11 {
      %c0_10 = arith.constant 0 : index
      %c0_11 = arith.constant 0 : index
      %12 = vector.load %arg6[%c0_10, %c0_11] : memref<4x512xf32, #tpu.memory_space<vmem>>, vector<4x512xf32>
      %c0_12 = arith.constant 0 : index
      %c0_13 = arith.constant 0 : index
      %13 = vector.load %arg4[%c0_12, %c0_13] : memref<4x1xf32, #tpu.memory_space<vmem>>, vector<4x1xf32>
      %14 = vector.broadcast %13 : vector<4x1xf32> to vector<4x512xf32>
      %15 = arith.addf %12, %14 : vector<4x512xf32>
      %cst_14 = arith.constant 0.000000e+00 : f32
      %16 = vector.broadcast %cst_14 : f32 to vector<4x512xf32>
      %17 = arith.maximumf %15, %16 : vector<4x512xf32>
      %18 = arith.truncf %17 : vector<4x512xf32> to vector<4x512xbf16>
      %c0_15 = arith.constant 0 : index
      %c0_16 = arith.constant 0 : index
      %19 = vector.load %arg5[%c0_15, %c0_16] : memref<4x512xbf16, #tpu.memory_space<vmem>>, vector<4x512xbf16>
      tpu.vector_store %arg5[%c0_15, %c0_16], %18 {strides = array<i32>} : memref<4x512xbf16, #tpu.memory_space<vmem>>, vector<4x512xbf16>,
    } else {
    }
    return
  }
  func.func @transform_0(%arg0: i32, %arg1: i32) -> (i32, i32) {
    %c0_i32 = arith.constant 0 : i32
    %c0_i32_0 = arith.constant 0 : i32
    return %c0_i32, %arg1 : i32, i32
  }
  func.func @transform_1(%arg0: i32, %arg1: i32) -> (i32, i32) {
    %c0_i32 = arith.constant 0 : i32
    return %arg1, %arg0 : i32, i32
  }
  func.func @transform_2(%arg0: i32, %arg1: i32) -> (i32, i32) {
    %c0_i32 = arith.constant 0 : i32
    %c0_i32_0 = arith.constant 0 : i32
    %c0_i32_1 = arith.constant 0 : i32
    return %c0_i32, %c0_i32_0 : i32, i32
  }
  func.func @transform_3(%arg0: i32, %arg1: i32) -> (i32, i32) {
    %c0_i32 = arith.constant 0 : i32
    %c0_i32_0 = arith.constant 0 : i32
    return %c0_i32, %arg0 : i32, i32
  }
}

module attributes {stable_mosaic.version = 11 : i64} {
  func.func @_matmul_fused_kernel(%arg0: i32, %arg1: i32, %arg2: memref<1x1xbf16, #tpu.memory_space<vmem>>, %arg3: memref<1x512xbf16, #tpu.memory_space<vmem>>, %arg4: memref<1x1xf32, #tpu.memory_space<vmem>>, %arg5: memref<1x512xbf16, #tpu.memory_space<vmem>>, %arg6: memref<1x512xf32, #tpu.memory_space<vmem>>) attributes {dimension_semantics = [#tpu.dimension_semantics<parallel>, #tpu.dimension_semantics<arbitrary>], iteration_bounds = array<i64: 4, 1>, scalar_prefetch = 0 : i64, scratch_operands = 1 : i64, tpu.core_type = #tpu.core_type<tc>, window_params = [{transform_indices = @transform_0, window_bounds = array<i64: 1, 1>}, {transform_indices = @transform_1, window_bounds = array<i64: 1, 512>}, {pipeline_mode = #tpu.pipeline_mode<synchronous>, transform_indices = @transform_2, window_bounds = array<i64: 1, 1>}, {transform_indices = @transform_3, window_bounds = array<i64: 1, 512>}]} {
    %c0_i32 = arith.constant 0 : i32
    %0 = arith.cmpi eq, %arg1, %c0_i32 : i32
    %1 = arith.extui %0 : i1 to i32
    %c0_i32_0 = arith.constant 0 : i32
    %2 = arith.cmpi ne, %1, %c0_i32_0 : i32
    scf.if %2 {
      %cst_10 = arith.constant 0.000000e+00 : f32
      %12 = vector.broadcast %cst_10 : f32 to vector<1x512xf32>
      %c0_11 = arith.constant 0 : index
      %c0_12 = arith.constant 0 : index
      %13 = vector.load %arg6[%c0_11, %c0_12] : memref<1x512xf32, #tpu.memory_space<vmem>>, vector<1x512xf32>
      tpu.vector_store %arg6[%c0_11, %c0_12], %12 {strides = array<i32>} : memref<1x512xf32, #tpu.memory_space<vmem>>, vector<1x512xf32>,
    } else {
    }
    %c0 = arith.constant 0 : index
    %c0_1 = arith.constant 0 : index
    %3 = vector.load %arg6[%c0, %c0_1] : memref<1x512xf32, #tpu.memory_space<vmem>>, vector<1x512xf32>
    %c0_2 = arith.constant 0 : index
    %c0_3 = arith.constant 0 : index
    %4 = vector.load %arg2[%c0_2, %c0_3] : memref<1x1xbf16, #tpu.memory_space<vmem>>, vector<1x1xbf16>
    %c0_4 = arith.constant 0 : index
    %c0_5 = arith.constant 0 : index
    %5 = vector.load %arg3[%c0_4, %c0_5] : memref<1x512xbf16, #tpu.memory_space<vmem>>, vector<1x512xbf16>
    %cst = arith.constant dense<0.000000e+00> : vector<1x512xf32>
    %6 = tpu.matmul %4, %5, %cst {dimension_numbers = #tpu.dot_dimension_numbers<[1], [0], [0], [1], [0, 0, 1, 1], [], []>} : vector<1x1xbf16>, vector<1x512xbf16>, vector<1x512xf32> -> vector<1x512xf32>
    %7 = arith.addf %3, %6 : vector<1x512xf32>
    %c0_6 = arith.constant 0 : index
    %c0_7 = arith.constant 0 : index
    %8 = vector.load %arg6[%c0_6, %c0_7] : memref<1x512xf32, #tpu.memory_space<vmem>>, vector<1x512xf32>
    tpu.vector_store %arg6[%c0_6, %c0_7], %7 {strides = array<i32>} : memref<1x512xf32, #tpu.memory_space<vmem>>, vector<1x512xf32>,
    %c0_i32_8 = arith.constant 0 : i32
    %9 = arith.cmpi eq, %arg1, %c0_i32_8 : i32
    %10 = arith.extui %9 : i1 to i32
    %c0_i32_9 = arith.constant 0 : i32
    %11 = arith.cmpi ne, %10, %c0_i32_9 : i32
    scf.if %11 {
      %c0_10 = arith.constant 0 : index
      %c0_11 = arith.constant 0 : index
      %12 = vector.load %arg6[%c0_10, %c0_11] : memref<1x512xf32, #tpu.memory_space<vmem>>, vector<1x512xf32>
      %c0_12 = arith.constant 0 : index
      %c0_13 = arith.constant 0 : index
      %13 = vector.load %arg4[%c0_12, %c0_13] : memref<1x1xf32, #tpu.memory_space<vmem>>, vector<1x1xf32>
      %14 = vector.broadcast %13 : vector<1x1xf32> to vector<1x512xf32>
      %15 = arith.addf %12, %14 : vector<1x512xf32>
      %16 = math.tanh %15 : vector<1x512xf32>
      %17 = arith.truncf %16 : vector<1x512xf32> to vector<1x512xbf16>
      %c0_14 = arith.constant 0 : index
      %c0_15 = arith.constant 0 : index
      %18 = vector.load %arg5[%c0_14, %c0_15] : memref<1x512xbf16, #tpu.memory_space<vmem>>, vector<1x512xbf16>
      tpu.vector_store %arg5[%c0_14, %c0_15], %17 {strides = array<i32>} : memref<1x512xbf16, #tpu.memory_space<vmem>>, vector<1x512xbf16>,
    } else {
    }
    return
  }
  func.func @transform_0(%arg0: i32, %arg1: i32) -> (i32, i32) {
    %c0_i32 = arith.constant 0 : i32
    %c0_i32_0 = arith.constant 0 : i32
    return %c0_i32, %arg1 : i32, i32
  }
  func.func @transform_1(%arg0: i32, %arg1: i32) -> (i32, i32) {
    %c0_i32 = arith.constant 0 : i32
    return %arg1, %arg0 : i32, i32
  }
  func.func @transform_2(%arg0: i32, %arg1: i32) -> (i32, i32) {
    %c0_i32 = arith.constant 0 : i32
    %c0_i32_0 = arith.constant 0 : i32
    %c0_i32_1 = arith.constant 0 : i32
    return %c0_i32, %c0_i32_0 : i32, i32
  }
  func.func @transform_3(%arg0: i32, %arg1: i32) -> (i32, i32) {
    %c0_i32 = arith.constant 0 : i32
    %c0_i32_0 = arith.constant 0 : i32
    return %c0_i32, %arg0 : i32, i32
  }
}

module attributes {stable_mosaic.version = 11 : i64} {
  func.func @_matmul_fused_kernel(%arg0: i32, %arg1: i32, %arg2: memref<4x36xbf16, #tpu.memory_space<vmem>>, %arg3: memref<36x512xbf16, #tpu.memory_space<vmem>>, %arg4: memref<4x1xf32, #tpu.memory_space<vmem>>, %arg5: memref<4x512xbf16, #tpu.memory_space<vmem>>, %arg6: memref<4x512xbf16, #tpu.memory_space<vmem>>, %arg7: memref<4x512xf32, #tpu.memory_space<vmem>>) attributes {dimension_semantics = [#tpu.dimension_semantics<parallel>, #tpu.dimension_semantics<arbitrary>], iteration_bounds = array<i64: 1, 1>, scalar_prefetch = 0 : i64, scratch_operands = 1 : i64, tpu.core_type = #tpu.core_type<tc>, window_params = [{transform_indices = @transform_0, window_bounds = array<i64: 4, 36>}, {transform_indices = @transform_1, window_bounds = array<i64: 36, 512>}, {pipeline_mode = #tpu.pipeline_mode<synchronous>, transform_indices = @transform_2, window_bounds = array<i64: 4, 1>}, {transform_indices = @transform_3, window_bounds = array<i64: 4, 512>}, {transform_indices = @transform_4, window_bounds = array<i64: 4, 512>}]} {
    %c0_i32 = arith.constant 0 : i32
    %0 = arith.cmpi eq, %arg1, %c0_i32 : i32
    %1 = arith.extui %0 : i1 to i32
    %c0_i32_0 = arith.constant 0 : i32
    %2 = arith.cmpi ne, %1, %c0_i32_0 : i32
    scf.if %2 {
      %cst_10 = arith.constant 0.000000e+00 : f32
      %12 = vector.broadcast %cst_10 : f32 to vector<4x512xf32>
      %c0_11 = arith.constant 0 : index
      %c0_12 = arith.constant 0 : index
      %13 = vector.load %arg7[%c0_11, %c0_12] : memref<4x512xf32, #tpu.memory_space<vmem>>, vector<4x512xf32>
      tpu.vector_store %arg7[%c0_11, %c0_12], %12 {strides = array<i32>} : memref<4x512xf32, #tpu.memory_space<vmem>>, vector<4x512xf32>,
    } else {
    }
    %c0 = arith.constant 0 : index
    %c0_1 = arith.constant 0 : index
    %3 = vector.load %arg7[%c0, %c0_1] : memref<4x512xf32, #tpu.memory_space<vmem>>, vector<4x512xf32>
    %c0_2 = arith.constant 0 : index
    %c0_3 = arith.constant 0 : index
    %4 = vector.load %arg2[%c0_2, %c0_3] : memref<4x36xbf16, #tpu.memory_space<vmem>>, vector<4x36xbf16>
    %c0_4 = arith.constant 0 : index
    %c0_5 = arith.constant 0 : index
    %5 = vector.load %arg3[%c0_4, %c0_5] : memref<36x512xbf16, #tpu.memory_space<vmem>>, vector<36x512xbf16>
    %cst = arith.constant dense<0.000000e+00> : vector<4x512xf32>
    %6 = tpu.matmul %4, %5, %cst {dimension_numbers = #tpu.dot_dimension_numbers<[1], [0], [0], [1], [0, 0, 1, 1], [], []>} : vector<4x36xbf16>, vector<36x512xbf16>, vector<4x512xf32> -> vector<4x512xf32>
    %7 = arith.addf %3, %6 : vector<4x512xf32>
    %c0_6 = arith.constant 0 : index
    %c0_7 = arith.constant 0 : index
    %8 = vector.load %arg7[%c0_6, %c0_7] : memref<4x512xf32, #tpu.memory_space<vmem>>, vector<4x512xf32>
    tpu.vector_store %arg7[%c0_6, %c0_7], %7 {strides = array<i32>} : memref<4x512xf32, #tpu.memory_space<vmem>>, vector<4x512xf32>,
    %c0_i32_8 = arith.constant 0 : i32
    %9 = arith.cmpi eq, %arg1, %c0_i32_8 : i32
    %10 = arith.extui %9 : i1 to i32
    %c0_i32_9 = arith.constant 0 : i32
    %11 = arith.cmpi ne, %10, %c0_i32_9 : i32
    scf.if %11 {
      %c0_10 = arith.constant 0 : index
      %c0_11 = arith.constant 0 : index
      %12 = vector.load %arg7[%c0_10, %c0_11] : memref<4x512xf32, #tpu.memory_space<vmem>>, vector<4x512xf32>
      %c0_12 = arith.constant 0 : index
      %c0_13 = arith.constant 0 : index
      %13 = vector.load %arg4[%c0_12, %c0_13] : memref<4x1xf32, #tpu.memory_space<vmem>>, vector<4x1xf32>
      %14 = vector.broadcast %13 : vector<4x1xf32> to vector<4x512xf32>
      %15 = arith.addf %12, %14 : vector<4x512xf32>
      %c0_14 = arith.constant 0 : index
      %c0_15 = arith.constant 0 : index
      %16 = vector.load %arg5[%c0_14, %c0_15] : memref<4x512xbf16, #tpu.memory_space<vmem>>, vector<4x512xbf16>
      %17 = arith.extf %16 : vector<4x512xbf16> to vector<4x512xf32>
      %18 = arith.addf %15, %17 : vector<4x512xf32>
      %cst_16 = arith.constant 0.000000e+00 : f32
      %19 = vector.broadcast %cst_16 : f32 to vector<4x512xf32>
      %20 = arith.maximumf %18, %19 : vector<4x512xf32>
      %21 = arith.truncf %20 : vector<4x512xf32> to vector<4x512xbf16>
      %c0_17 = arith.constant 0 : index
      %c0_18 = arith.constant 0 : index
      %22 = vector.load %arg6[%c0_17, %c0_18] : memref<4x512xbf16, #tpu.memory_space<vmem>>, vector<4x512xbf16>
      tpu.vector_store %arg6[%c0_17, %c0_18], %21 {strides = array<i32>} : memref<4x512xbf16, #tpu.memory_space<vmem>>, vector<4x512xbf16>,
    } else {
    }
    return
  }
  func.func @transform_0(%arg0: i32, %arg1: i32) -> (i32, i32) {
    %c0_i32 = arith.constant 0 : i32
    %c0_i32_0 = arith.constant 0 : i32
    return %c0_i32, %arg1 : i32, i32
  }
  func.func @transform_1(%arg0: i32, %arg1: i32) -> (i32, i32) {
    %c0_i32 = arith.constant 0 : i32
    return %arg1, %arg0 : i32, i32
  }
  func.func @transform_2(%arg0: i32, %arg1: i32) -> (i32, i32) {
    %c0_i32 = arith.constant 0 : i32
    %c0_i32_0 = arith.constant 0 : i32
    %c0_i32_1 = arith.constant 0 : i32
    return %c0_i32, %c0_i32_0 : i32, i32
  }
  func.func @transform_3(%arg0: i32, %arg1: i32) -> (i32, i32) {
    %c0_i32 = arith.constant 0 : i32
    %c0_i32_0 = arith.constant 0 : i32
    return %c0_i32, %arg0 : i32, i32
  }
  func.func @transform_4(%arg0: i32, %arg1: i32) -> (i32, i32) {
    %c0_i32 = arith.constant 0 : i32
    %c0_i32_0 = arith.constant 0 : i32
    return %c0_i32, %arg0 : i32, i32
  }
}

module attributes {stable_mosaic.version = 11 : i64} {
  func.func @_matmul_fused_kernel(%arg0: i32, %arg1: i32, %arg2: memref<1x4xbf16, #tpu.memory_space<vmem>>, %arg3: memref<4x512xbf16, #tpu.memory_space<vmem>>, %arg4: memref<1x1xf32, #tpu.memory_space<vmem>>, %arg5: memref<1x512xbf16, #tpu.memory_space<vmem>>, %arg6: memref<1x512xf32, #tpu.memory_space<vmem>>) attributes {dimension_semantics = [#tpu.dimension_semantics<parallel>, #tpu.dimension_semantics<arbitrary>], iteration_bounds = array<i64: 1, 1>, scalar_prefetch = 0 : i64, scratch_operands = 1 : i64, tpu.core_type = #tpu.core_type<tc>, window_params = [{transform_indices = @transform_0, window_bounds = array<i64: 1, 4>}, {transform_indices = @transform_1, window_bounds = array<i64: 4, 512>}, {pipeline_mode = #tpu.pipeline_mode<synchronous>, transform_indices = @transform_2, window_bounds = array<i64: 1, 1>}, {transform_indices = @transform_3, window_bounds = array<i64: 1, 512>}]} {
    %c0_i32 = arith.constant 0 : i32
    %0 = arith.cmpi eq, %arg1, %c0_i32 : i32
    %1 = arith.extui %0 : i1 to i32
    %c0_i32_0 = arith.constant 0 : i32
    %2 = arith.cmpi ne, %1, %c0_i32_0 : i32
    scf.if %2 {
      %cst_10 = arith.constant 0.000000e+00 : f32
      %12 = vector.broadcast %cst_10 : f32 to vector<1x512xf32>
      %c0_11 = arith.constant 0 : index
      %c0_12 = arith.constant 0 : index
      %13 = vector.load %arg6[%c0_11, %c0_12] : memref<1x512xf32, #tpu.memory_space<vmem>>, vector<1x512xf32>
      tpu.vector_store %arg6[%c0_11, %c0_12], %12 {strides = array<i32>} : memref<1x512xf32, #tpu.memory_space<vmem>>, vector<1x512xf32>,
    } else {
    }
    %c0 = arith.constant 0 : index
    %c0_1 = arith.constant 0 : index
    %3 = vector.load %arg6[%c0, %c0_1] : memref<1x512xf32, #tpu.memory_space<vmem>>, vector<1x512xf32>
    %c0_2 = arith.constant 0 : index
    %c0_3 = arith.constant 0 : index
    %4 = vector.load %arg2[%c0_2, %c0_3] : memref<1x4xbf16, #tpu.memory_space<vmem>>, vector<1x4xbf16>
    %c0_4 = arith.constant 0 : index
    %c0_5 = arith.constant 0 : index
    %5 = vector.load %arg3[%c0_4, %c0_5] : memref<4x512xbf16, #tpu.memory_space<vmem>>, vector<4x512xbf16>
    %cst = arith.constant dense<0.000000e+00> : vector<1x512xf32>
    %6 = tpu.matmul %4, %5, %cst {dimension_numbers = #tpu.dot_dimension_numbers<[1], [0], [0], [1], [0, 0, 1, 1], [], []>} : vector<1x4xbf16>, vector<4x512xbf16>, vector<1x512xf32> -> vector<1x512xf32>
    %7 = arith.addf %3, %6 : vector<1x512xf32>
    %c0_6 = arith.constant 0 : index
    %c0_7 = arith.constant 0 : index
    %8 = vector.load %arg6[%c0_6, %c0_7] : memref<1x512xf32, #tpu.memory_space<vmem>>, vector<1x512xf32>
    tpu.vector_store %arg6[%c0_6, %c0_7], %7 {strides = array<i32>} : memref<1x512xf32, #tpu.memory_space<vmem>>, vector<1x512xf32>,
    %c0_i32_8 = arith.constant 0 : i32
    %9 = arith.cmpi eq, %arg1, %c0_i32_8 : i32
    %10 = arith.extui %9 : i1 to i32
    %c0_i32_9 = arith.constant 0 : i32
    %11 = arith.cmpi ne, %10, %c0_i32_9 : i32
    scf.if %11 {
      %c0_10 = arith.constant 0 : index
      %c0_11 = arith.constant 0 : index
      %12 = vector.load %arg6[%c0_10, %c0_11] : memref<1x512xf32, #tpu.memory_space<vmem>>, vector<1x512xf32>
      %c0_12 = arith.constant 0 : index
      %c0_13 = arith.constant 0 : index
      %13 = vector.load %arg4[%c0_12, %c0_13] : memref<1x1xf32, #tpu.memory_space<vmem>>, vector<1x1xf32>
      %14 = vector.broadcast %13 : vector<1x1xf32> to vector<1x512xf32>
      %15 = arith.addf %12, %14 : vector<1x512xf32>
      %16 = math.tanh %15 : vector<1x512xf32>
      %17 = arith.truncf %16 : vector<1x512xf32> to vector<1x512xbf16>
      %c0_14 = arith.constant 0 : index
      %c0_15 = arith.constant 0 : index
      %18 = vector.load %arg5[%c0_14, %c0_15] : memref<1x512xbf16, #tpu.memory_space<vmem>>, vector<1x512xbf16>
      tpu.vector_store %arg5[%c0_14, %c0_15], %17 {strides = array<i32>} : memref<1x512xbf16, #tpu.memory_space<vmem>>, vector<1x512xbf16>,
    } else {
    }
    return
  }
  func.func @transform_0(%arg0: i32, %arg1: i32) -> (i32, i32) {
    %c0_i32 = arith.constant 0 : i32
    %c0_i32_0 = arith.constant 0 : i32
    return %c0_i32, %arg1 : i32, i32
  }
  func.func @transform_1(%arg0: i32, %arg1: i32) -> (i32, i32) {
    %c0_i32 = arith.constant 0 : i32
    return %arg1, %arg0 : i32, i32
  }
  func.func @transform_2(%arg0: i32, %arg1: i32) -> (i32, i32) {
    %c0_i32 = arith.constant 0 : i32
    %c0_i32_0 = arith.constant 0 : i32
    %c0_i32_1 = arith.constant 0 : i32
    return %c0_i32, %c0_i32_0 : i32, i32
  }
  func.func @transform_3(%arg0: i32, %arg1: i32) -> (i32, i32) {
    %c0_i32 = arith.constant 0 : i32
    %c0_i32_0 = arith.constant 0 : i32
    return %c0_i32, %arg0 : i32, i32
  }
}

module attributes {stable_mosaic.version = 11 : i64} {
  func.func @_matmul_fused_kernel(%arg0: i32, %arg1: i32, %arg2: memref<2x256xbf16, #tpu.memory_space<vmem>>, %arg3: memref<256x256xbf16, #tpu.memory_space<vmem>>, %arg4: memref<2x256xf32, #tpu.memory_space<vmem>>, %arg5: memref<2x256xf32, #tpu.memory_space<vmem>>) attributes {dimension_semantics = [#tpu.dimension_semantics<parallel>, #tpu.dimension_semantics<arbitrary>], iteration_bounds = array<i64: 1, 1>, scalar_prefetch = 0 : i64, scratch_operands = 1 : i64, tpu.core_type = #tpu.core_type<tc>, window_params = [{transform_indices = @transform_0, window_bounds = array<i64: 2, 256>}, {transform_indices = @transform_1, window_bounds = array<i64: 256, 256>}, {transform_indices = @transform_2, window_bounds = array<i64: 2, 256>}]} {
    %c0_i32 = arith.constant 0 : i32
    %0 = arith.cmpi eq, %arg1, %c0_i32 : i32
    %1 = arith.extui %0 : i1 to i32
    %c0_i32_0 = arith.constant 0 : i32
    %2 = arith.cmpi ne, %1, %c0_i32_0 : i32
    scf.if %2 {
      %cst_10 = arith.constant 0.000000e+00 : f32
      %12 = vector.broadcast %cst_10 : f32 to vector<2x256xf32>
      %c0_11 = arith.constant 0 : index
      %c0_12 = arith.constant 0 : index
      %13 = vector.load %arg5[%c0_11, %c0_12] : memref<2x256xf32, #tpu.memory_space<vmem>>, vector<2x256xf32>
      tpu.vector_store %arg5[%c0_11, %c0_12], %12 {strides = array<i32>} : memref<2x256xf32, #tpu.memory_space<vmem>>, vector<2x256xf32>,
    } else {
    }
    %c0 = arith.constant 0 : index
    %c0_1 = arith.constant 0 : index
    %3 = vector.load %arg5[%c0, %c0_1] : memref<2x256xf32, #tpu.memory_space<vmem>>, vector<2x256xf32>
    %c0_2 = arith.constant 0 : index
    %c0_3 = arith.constant 0 : index
    %4 = vector.load %arg2[%c0_2, %c0_3] : memref<2x256xbf16, #tpu.memory_space<vmem>>, vector<2x256xbf16>
    %c0_4 = arith.constant 0 : index
    %c0_5 = arith.constant 0 : index
    %5 = vector.load %arg3[%c0_4, %c0_5] : memref<256x256xbf16, #tpu.memory_space<vmem>>, vector<256x256xbf16>
    %cst = arith.constant dense<0.000000e+00> : vector<2x256xf32>
    %6 = tpu.matmul %4, %5, %cst {dimension_numbers = #tpu.dot_dimension_numbers<[1], [0], [0], [1], [0, 0, 1, 1], [], []>} : vector<2x256xbf16>, vector<256x256xbf16>, vector<2x256xf32> -> vector<2x256xf32>
    %7 = arith.addf %3, %6 : vector<2x256xf32>
    %c0_6 = arith.constant 0 : index
    %c0_7 = arith.constant 0 : index
    %8 = vector.load %arg5[%c0_6, %c0_7] : memref<2x256xf32, #tpu.memory_space<vmem>>, vector<2x256xf32>
    tpu.vector_store %arg5[%c0_6, %c0_7], %7 {strides = array<i32>} : memref<2x256xf32, #tpu.memory_space<vmem>>, vector<2x256xf32>,
    %c0_i32_8 = arith.constant 0 : i32
    %9 = arith.cmpi eq, %arg1, %c0_i32_8 : i32
    %10 = arith.extui %9 : i1 to i32
    %c0_i32_9 = arith.constant 0 : i32
    %11 = arith.cmpi ne, %10, %c0_i32_9 : i32
    scf.if %11 {
      %c0_10 = arith.constant 0 : index
      %c0_11 = arith.constant 0 : index
      %12 = vector.load %arg5[%c0_10, %c0_11] : memref<2x256xf32, #tpu.memory_space<vmem>>, vector<2x256xf32>
      %c0_12 = arith.constant 0 : index
      %c0_13 = arith.constant 0 : index
      %13 = vector.load %arg4[%c0_12, %c0_13] : memref<2x256xf32, #tpu.memory_space<vmem>>, vector<2x256xf32>
      tpu.vector_store %arg4[%c0_12, %c0_13], %12 {strides = array<i32>} : memref<2x256xf32, #tpu.memory_space<vmem>>, vector<2x256xf32>,
    } else {
    }
    return
  }
  func.func @transform_0(%arg0: i32, %arg1: i32) -> (i32, i32) {
    %c0_i32 = arith.constant 0 : i32
    %c0_i32_0 = arith.constant 0 : i32
    return %c0_i32, %arg1 : i32, i32
  }
  func.func @transform_1(%arg0: i32, %arg1: i32) -> (i32, i32) {
    %c0_i32 = arith.constant 0 : i32
    return %arg1, %arg0 : i32, i32
  }
  func.func @transform_2(%arg0: i32, %arg1: i32) -> (i32, i32) {
    %c0_i32 = arith.constant 0 : i32
    %c0_i32_0 = arith.constant 0 : i32
    return %c0_i32, %arg0 : i32, i32
  }
}

module attributes {stable_mosaic.version = 11 : i64} {
  func.func @_matmul_fused_kernel(%arg0: i32, %arg1: i32, %arg2: memref<2x1024xbf16, #tpu.memory_space<vmem>>, %arg3: memref<1024x256xbf16, #tpu.memory_space<vmem>>, %arg4: memref<2x256xf32, #tpu.memory_space<vmem>>, %arg5: memref<2x256xf32, #tpu.memory_space<vmem>>) attributes {dimension_semantics = [#tpu.dimension_semantics<parallel>, #tpu.dimension_semantics<arbitrary>], iteration_bounds = array<i64: 1, 1>, scalar_prefetch = 0 : i64, scratch_operands = 1 : i64, tpu.core_type = #tpu.core_type<tc>, window_params = [{transform_indices = @transform_0, window_bounds = array<i64: 2, 1024>}, {transform_indices = @transform_1, window_bounds = array<i64: 1024, 256>}, {transform_indices = @transform_2, window_bounds = array<i64: 2, 256>}]} {
    %c0_i32 = arith.constant 0 : i32
    %0 = arith.cmpi eq, %arg1, %c0_i32 : i32
    %1 = arith.extui %0 : i1 to i32
    %c0_i32_0 = arith.constant 0 : i32
    %2 = arith.cmpi ne, %1, %c0_i32_0 : i32
    scf.if %2 {
      %cst_10 = arith.constant 0.000000e+00 : f32
      %12 = vector.broadcast %cst_10 : f32 to vector<2x256xf32>
      %c0_11 = arith.constant 0 : index
      %c0_12 = arith.constant 0 : index
      %13 = vector.load %arg5[%c0_11, %c0_12] : memref<2x256xf32, #tpu.memory_space<vmem>>, vector<2x256xf32>
      tpu.vector_store %arg5[%c0_11, %c0_12], %12 {strides = array<i32>} : memref<2x256xf32, #tpu.memory_space<vmem>>, vector<2x256xf32>,
    } else {
    }
    %c0 = arith.constant 0 : index
    %c0_1 = arith.constant 0 : index
    %3 = vector.load %arg5[%c0, %c0_1] : memref<2x256xf32, #tpu.memory_space<vmem>>, vector<2x256xf32>
    %c0_2 = arith.constant 0 : index
    %c0_3 = arith.constant 0 : index
    %4 = vector.load %arg2[%c0_2, %c0_3] : memref<2x1024xbf16, #tpu.memory_space<vmem>>, vector<2x1024xbf16>
    %c0_4 = arith.constant 0 : index
    %c0_5 = arith.constant 0 : index
    %5 = vector.load %arg3[%c0_4, %c0_5] : memref<1024x256xbf16, #tpu.memory_space<vmem>>, vector<1024x256xbf16>
    %cst = arith.constant dense<0.000000e+00> : vector<2x256xf32>
    %6 = tpu.matmul %4, %5, %cst {dimension_numbers = #tpu.dot_dimension_numbers<[1], [0], [0], [1], [0, 0, 1, 1], [], []>} : vector<2x1024xbf16>, vector<1024x256xbf16>, vector<2x256xf32> -> vector<2x256xf32>
    %7 = arith.addf %3, %6 : vector<2x256xf32>
    %c0_6 = arith.constant 0 : index
    %c0_7 = arith.constant 0 : index
    %8 = vector.load %arg5[%c0_6, %c0_7] : memref<2x256xf32, #tpu.memory_space<vmem>>, vector<2x256xf32>
    tpu.vector_store %arg5[%c0_6, %c0_7], %7 {strides = array<i32>} : memref<2x256xf32, #tpu.memory_space<vmem>>, vector<2x256xf32>,
    %c0_i32_8 = arith.constant 0 : i32
    %9 = arith.cmpi eq, %arg1, %c0_i32_8 : i32
    %10 = arith.extui %9 : i1 to i32
    %c0_i32_9 = arith.constant 0 : i32
    %11 = arith.cmpi ne, %10, %c0_i32_9 : i32
    scf.if %11 {
      %c0_10 = arith.constant 0 : index
      %c0_11 = arith.constant 0 : index
      %12 = vector.load %arg5[%c0_10, %c0_11] : memref<2x256xf32, #tpu.memory_space<vmem>>, vector<2x256xf32>
      %c0_12 = arith.constant 0 : index
      %c0_13 = arith.constant 0 : index
      %13 = vector.load %arg4[%c0_12, %c0_13] : memref<2x256xf32, #tpu.memory_space<vmem>>, vector<2x256xf32>
      tpu.vector_store %arg4[%c0_12, %c0_13], %12 {strides = array<i32>} : memref<2x256xf32, #tpu.memory_space<vmem>>, vector<2x256xf32>,
    } else {
    }
    return
  }
  func.func @transform_0(%arg0: i32, %arg1: i32) -> (i32, i32) {
    %c0_i32 = arith.constant 0 : i32
    %c0_i32_0 = arith.constant 0 : i32
    return %c0_i32, %arg1 : i32, i32
  }
  func.func @transform_1(%arg0: i32, %arg1: i32) -> (i32, i32) {
    %c0_i32 = arith.constant 0 : i32
    return %arg1, %arg0 : i32, i32
  }
  func.func @transform_2(%arg0: i32, %arg1: i32) -> (i32, i32) {
    %c0_i32 = arith.constant 0 : i32
    %c0_i32_0 = arith.constant 0 : i32
    return %c0_i32, %arg0 : i32, i32
  }
}

</mosaic_0001>

<llo_original>
// kernel: tile.17
$region0: #{tile.17}
  #allocation2 [shape = 's32[1]{0}', space=sflag, size = 0x4, scoped, tag = 'scoped memory for tile.17']
  %s0 = inlined_call_operand.hbm [shape: f32[8], index: 0, kind: input, shape index: {}]
  %s1 = inlined_call_operand.vmem [shape: f32[4,8], index: 1, kind: output, shape index: {}]
  $region1: #{tile.17} parent=0
    #allocation0 [shape = 'u8[512]{0}', space=vmem, size = 0x400, scoped, tag = 'operand span for operand 0']
    #allocation1 [shape = 's32[1]{0}', space=sflag, size = 0x4, scoped, tag = 'scoped memory for tile.17']
    %2 = vsyncpa [#allocation1], 0
    // Predicated region
    $region2: #{tile.17} parent=1 // pred_check
      _
    $region3: #{tile.17} parent=1 // pred_check_branch
      %4 = sbr.rel (0) target = $region5
    $region4: #{tile.17} parent=1 // pred_region
      %s6 = ssub.s32 16, 16
      %7 = vsyncadd [#allocation1], %s6
      %s9 = sshll.u32 [#allocation0], 4
      %s10 = int_to_ptr.vmem [resolvable:$true] %s9
      %12 = dma.hbm_to_vmem [thread:$0]  %s0, 16, %s10, [#allocation1]
    $region5: #{tile.17} parent=1 // pred_fallthru
      _
    // Predicated region
    $region6: #{tile.17} parent=1 // pred_check
      _
    $region7: #{tile.17} parent=1 // pred_check_branch
      %14 = sbr.rel (0) target = $region9
    $region8: #{tile.17} parent=1 // pred_region
      %15 = dma.done [#allocation1], 16
    $region9: #{tile.17} parent=1 // pred_fallthru
      _
    %v16 = vld [vmem:[#allocation0] ss:$0 sm:$0xff]
    %17 = vst [vmem:[%s1] sm:$0xf] %v16
    %18 = vsyncpa [#allocation1], 1

// kernel: tile.0
$region0: #{tile.0}
  %s0 = inlined_call_operand.vmem [shape: f32[4,8], index: 0, kind: input, shape index: {}]
  %s1 = inlined_call_operand.vmem [shape: f32[32,1], index: 1, kind: output, shape index: {}]
  $region1: #{tile.0} parent=0
    #allocation0 [shape = 'u8[4096]{0}', space=vmem, size = 0x1000, scoped, tag = 'scoped mem for input reshape']
    %s3 = sshllo.u32 0, 4
    %v4 = vld [vmem:[%s0] sm:%s3]
    %5 = vst [vmem:[#allocation0] sm:%s3] %v4
    %v6 = vld [vmem:[#allocation0] sm:$0xf]
    %vm7 = vcmask 7168
    %8 = vst.msk [vmem:[%s1] ss:$8 sm:$0xf] %vm7, %v6
    %v9 = vld [vmem:[#allocation0] sm:$0xf]
    %10 = vrot.lane.b32.xlu0 %v9, 127
    %v11 = vpop.permute.xlu0 %10
    %vm12 = vcmask 7168
    %s13 = scalar_lea.vmem %s1, 1
    %14 = vst.msk [vmem:[%s13] ss:$8 sm:$0xf] %vm12, %v11
    %v15 = vld [vmem:[#allocation0] sm:$0xf]
    %16 = vrot.lane.b32.xlu0 %v15, 126
    %v17 = vpop.permute.xlu0 %16
    %vm18 = vcmask 7168
    %s19 = scalar_lea.vmem %s1, 2
    %20 = vst.msk [vmem:[%s19] ss:$8 sm:$0xf] %vm18, %v17
    %v21 = vld [vmem:[#allocation0] sm:$0xf]
    %22 = vrot.lane.b32.xlu0 %v21, 125
    %v23 = vpop.permute.xlu0 %22
    %vm24 = vcmask 7168
    %s25 = scalar_lea.vmem %s1, 3
    %26 = vst.msk [vmem:[%s25] ss:$8 sm:$0xf] %vm24, %v23
    %v27 = vld [vmem:[#allocation0] sm:$0xf]
    %28 = vrot.lane.b32.xlu0 %v27, 124
    %v29 = vpop.permute.xlu0 %28
    %vm30 = vcmask 7168
    %s31 = scalar_lea.vmem %s1, 4
    %32 = vst.msk [vmem:[%s31] ss:$8 sm:$0xf] %vm30, %v29
    %v33 = vld [vmem:[#allocation0] sm:$0xf]
    %34 = vrot.lane.b32.xlu0 %v33, 123
    %v35 = vpop.permute.xlu0 %34
    %vm36 = vcmask 7168
    %s37 = scalar_lea.vmem %s1, 5
    %38 = vst.msk [vmem:[%s37] ss:$8 sm:$0xf] %vm36, %v35
    %v39 = vld [vmem:[#allocation0] sm:$0xf]
    %40 = vrot.lane.b32.xlu0 %v39, 122
    %v41 = vpop.permute.xlu0 %40
    %vm42 = vcmask 7168
    %s43 = scalar_lea.vmem %s1, 6
    %44 = vst.msk [vmem:[%s43] ss:$8 sm:$0xf] %vm42, %v41
    %v45 = vld [vmem:[#allocation0] sm:$0xf]
    %46 = vrot.lane.b32.xlu0 %v45, 121
    %v47 = vpop.permute.xlu0 %46
    %vm48 = vcmask 7168
    %s49 = scalar_lea.vmem %s1, 7
    %50 = vst.msk [vmem:[%s49] ss:$8 sm:$0xf] %vm48, %v47

// kernel: depth_decoder_forward.11
$region0: #{depth_decoder_forward.11}
  #allocation0 [shape = 'u32[]', space=smem, size = 0x4, offset = 0x4, fixed_abs, tag = 'smem constant byte address 0x4 - core index']
  #allocation1 [shape = 'u32[144,128]{1,0:T(1,128)}', space=vmem, size = 0x12000, scoped, tag = 'internal scratch']
  #allocation2 [shape = 'f32[32,128]{1,0:T(8,128)}', space=vmem, size = 0x4000, scoped, tag = 'scratch operand']
  %s0 = inlined_call_operand.vmem [shape: bf16[32,36], index: 0, kind: input, shape index: {}]
  %s1 = inlined_call_operand.vmem [shape: bf16[36,128], index: 1, kind: input, shape index: {}]
  %s2 = inlined_call_operand.vmem [shape: f32[32,1], index: 2, kind: input, shape index: {}]
  %s3 = inlined_call_operand.vmem [shape: bf16[32,128], index: 3, kind: output, shape index: {}]
  %s4 = sld [smem:[#allocation0]]
  $region30: #{depth_decoder_forward.11} parent=0
    _
  %s6 = ssub.s32 1, %s4
  %s7 = scalar_select 0, %s6, %s4
  // Predicated region
  $region2: #{depth_decoder_forward.11} parent=0 // pred_check
    _
  $region3: #{depth_decoder_forward.11} parent=0 // pred_check_branch
    %9 = sbr.rel (0) target = $region5
  $region4: #{depth_decoder_forward.11} parent=0 // pred_region
    _
  $region5: #{depth_decoder_forward.11} parent=0 // pred_fallthru
    _
  // Predicated region
  $region6: #{depth_decoder_forward.11} parent=0 // pred_check
    _
  $region7: #{depth_decoder_forward.11} parent=0 // pred_check_branch
    %11 = sbr.rel (0) target = $region9
  $region8: #{depth_decoder_forward.11} parent=0 // pred_region
    _
  $region9: #{depth_decoder_forward.11} parent=0 // pred_fallthru
    _
  // Predicated region
  $region10: #{depth_decoder_forward.11} parent=0 // pred_check
    _
  $region11: #{depth_decoder_forward.11} parent=0 // pred_check_branch
    %13 = sbr.rel (0) target = $region13
  $region12: #{depth_decoder_forward.11} parent=0 // pred_region
    _
  $region13: #{depth_decoder_forward.11} parent=0 // pred_fallthru
    _
  %p15 = scmp.eq.s32.totalorder 0, 0
  // Predicated region
  $region14: #{depth_decoder_forward.11} parent=0 // pred_check
    %p16 = pneg %p15
  $region15: #{depth_decoder_forward.11} parent=0 // pred_check_branch
    %18 = sbr.rel (%p16) target = $region17
  $region16: #{depth_decoder_forward.11} parent=0 // pred_region
    %19 = vst [vmem:[#allocation2] sm:$0xff] 0.0
    %20 = vst [vmem:[#allocation2 + $0x8] sm:$0xff] 0.0
    %21 = vst [vmem:[#allocation2 + $0x10] sm:$0xff] 0.0
    %22 = vst [vmem:[#allocation2 + $0x18] sm:$0xff] 0.0
  $region17: #{depth_decoder_forward.11} parent=0 // pred_fallthru
    _
  %v23 = vld [vmem:[#allocation2] sm:$0xff]
  %v24 = vld [vmem:[#allocation2 + $0x8] sm:$0xff]
  %v25 = vld [vmem:[#allocation2 + $0x10] sm:$0xff]
  %v26 = vld [vmem:[#allocation2 + $0x18] sm:$0xff]
  %v27 = vld [vmem:[%s0] sm:$0xf]
  %v28 = vld [vmem:[%s0 + $0x4] sm:$0xf]
  %v29 = vld [vmem:[%s0 + $0x8] sm:$0xf]
  %v30 = vld [vmem:[%s0 + $0xc] sm:$0xf]
  %v31 = vld [vmem:[%s1] sm:$0xf]
  %v32 = vld [vmem:[%s1 + $0x4] sm:$0xf]
  %v33 = vld [vmem:[%s1 + $0x8] sm:$0xf]
  %v34 = vld [vmem:[%s1 + $0xc] sm:$0xf]
  %v35 = vld [vmem:[%s1 + $0x10] sm:$0x3]
  %v40 = vunpack.c.l.b16 %v27
  %v41 = vunpack.c.l.b16 %v28
  %v42 = vunpack.c.l.b16 %v29
  %v43 = vunpack.c.l.b16 %v30
  %v44 = vpack.c.b16 %v41, %v40
  %v45 = vpack.c.b16 %v43, %v42
  %v51 = vunpack.c.l.b16 %v31
  %v52 = vunpack.c.l.b16 %v32
  %v53 = vunpack.c.l.b16 %v33
  %v54 = vunpack.c.l.b16 %v34
  %v55 = vunpack.c.l.b16 %v35
  %v56 = vpack.c.b16 %v52, %v51
  %v57 = vpack.c.b16 %v54, %v53
  %v58 = vpack.c.b16 %v55, %v55
  %vm61 = vcmask 293888
  %v63 = vsel %vm61, %v44, 0
  %v66 = vsel %vm61, %v45, 0
  %vm68 = vcmask 1041408
  %v70 = vsel %vm68, %v58, 0
  %72 = vmatprep.subr.bf16.mxu0 0
  %73 = vmatpush1.bf16.msra.mxu0 %v56
  %74 = vmatprep.subr.bf16.mxu0 0
  %75 = vmatpush1.bf16.msra.mxu0 %v57
  %76 = vmatprep.subr.bf16.mxu0 0
  %77 = vmatpush1.bf16.msra.mxu0 %v70
  %78 = vmatprep.subr.bf16.mxu0 0
  %79 = vmatpush1.bf16.msra.mxu0 0
  %80 = vmatprep.subr.bf16.mxu0 0
  %81 = vmatpush1.bf16.msra.mxu0 0
  %82 = vmatprep.subr.bf16.mxu0 0
  %83 = vmatpush1.bf16.msra.mxu0 0
  %84 = vmatprep.subr.bf16.mxu0 0
  %85 = vmatpush1.bf16.msra.mxu0 0
  %86 = vmatprep.subr.bf16.mxu0 0
  %87 = vmatpush1.bf16.msra.mxu0 0
  %88 = vmatprep.subr.bf16.mxu0 0
  %89 = vmatpush1.bf16.msra.mxu0 0
  %90 = vmatprep.subr.bf16.mxu0 0
  %91 = vmatpush1.bf16.msra.mxu0 0
  %92 = vmatprep.subr.bf16.mxu0 0
  %93 = vmatpush1.bf16.msra.mxu0 0
  %94 = vmatprep.subr.bf16.mxu0 0
  %95 = vmatpush1.bf16.msra.mxu0 0
  %96 = vmatprep.subr.bf16.mxu0 0
  %97 = vmatpush1.bf16.msra.mxu0 0
  %98 = vmatprep.subr.bf16.mxu0 0
  %99 = vmatpush1.bf16.msra.mxu0 0
  %100 = vmatprep.subr.bf16.mxu0 0
  %101 = vmatpush1.bf16.msra.mxu0 0
  %102 = vmatprep.subr.bf16.mxu0 0
  %103 = vmatpush1.bf16.msra.mxu0 0
  %104 = vmatprep.mubr.bf16.mxu0 0
  %105 = vmatmul.mubr.bf16.gmra.mrb[0].mxu0 %v63
  %v106 = vpop.f32.mrb[0].mxu0
  %v107 = vadd.f32 0.0, %v106
  %v108 = vpop.f32.mrb[0].mxu0
  %v109 = vpop.f32.mrb[0].mxu0
  %v110 = vadd.f32 0.0, %v109
  %v111 = vpop.f32.mrb[0].mxu0
  %112 = vmatprep.mubr.bf16.mxu0 0
  %113 = vmatmul.mubr.bf16.gmra.mrb[0].mxu0 %v66
  %v114 = vpop.f32.mrb[0].mxu0
  %v115 = vadd.f32 0.0, %v114
  %v116 = vpop.f32.mrb[0].mxu0
  %v117 = vpop.f32.mrb[0].mxu0
  %v118 = vadd.f32 0.0, %v117
  %v119 = vpop.f32.mrb[0].mxu0
  %120 = vdwg.mxu0
  %v121 = vadd.f32 %v23, %v107
  %v122 = vadd.f32 %v24, %v110
  %v123 = vadd.f32 %v25, %v115
  %v124 = vadd.f32 %v26, %v118
  %125 = vst [vmem:[#allocation2] sm:$0xff] %v121
  %126 = vst [vmem:[#allocation2 + $0x8] sm:$0xff] %v122
  %127 = vst [vmem:[#allocation2 + $0x10] sm:$0xff] %v123
  %128 = vst [vmem:[#allocation2 + $0x18] sm:$0xff] %v124
  // Predicated region
  $region18: #{depth_decoder_forward.11} parent=0 // pred_check
    %p129 = pneg %p15
  $region19: #{depth_decoder_forward.11} parent=0 // pred_check_branch
    %131 = sbr.rel (%p129) target = $region21
  $region20: #{depth_decoder_forward.11} parent=0 // pred_region
    %v132 = vld [vmem:[#allocation2] sm:$0xff]
    %v133 = vld [vmem:[#allocation2 + $0x8] sm:$0xff]
    %v134 = vld [vmem:[#allocation2 + $0x10] sm:$0xff]
    %v135 = vld [vmem:[#allocation2 + $0x18] sm:$0xff]
    %v136 = vld [vmem:[%s2] sm:$0xff]
    %v137 = vld [vmem:[%s2 + $0x8] sm:$0xff]
    %v138 = vld [vmem:[%s2 + $0x10] sm:$0xff]
    %v139 = vld [vmem:[%s2 + $0x18] sm:$0xff]
    %141 = vset.pattern.permute.xlu0 0
    %142 = vperm.xlu0 %141, %v136
    %v143 = vpop.permute.xlu0 %142
    %146 = vset.pattern.permute.xlu0 0
    %147 = vperm.xlu0 %146, %v137
    %v148 = vpop.permute.xlu0 %147
    %151 = vset.pattern.permute.xlu0 0
    %152 = vperm.xlu0 %151, %v138
    %v153 = vpop.permute.xlu0 %152
    %156 = vset.pattern.permute.xlu0 0
    %157 = vperm.xlu0 %156, %v139
    %v158 = vpop.permute.xlu0 %157
    %v160 = vadd.f32 %v132, %v143
    %v161 = vadd.f32 %v133, %v148
    %v162 = vadd.f32 %v134, %v153
    %v163 = vadd.f32 %v135, %v158
    %v164 = vmax.f32 %v160, 0.0
    %v165 = vmax.f32 %v161, 0.0
    %v166 = vmax.f32 %v162, 0.0
    %v167 = vmax.f32 %v163, 0.0
    %v168 = vpack.c.bf16 %v165, %v164
    %v169 = vpack.c.bf16 %v167, %v166
    %v172 = vunpack.c.l.b16 %v168
    %v173 = vunpack.c.h.b16 %v168
    %v174 = vunpack.c.l.b16 %v169
    %v175 = vunpack.c.h.b16 %v169
    %v176 = vpack.c.b16 %v172, %v172
    %v177 = vpack.c.b16 %v173, %v173
    %v178 = vpack.c.b16 %v174, %v174
    %v179 = vpack.c.b16 %v175, %v175
    %184 = vst [vmem:[%s3] sm:$0xf] %v176
    %185 = vst [vmem:[%s3 + $0x4] sm:$0xf] %v177
    %186 = vst [vmem:[%s3 + $0x8] sm:$0xf] %v178
    %187 = vst [vmem:[%s3 + $0xc] sm:$0xf] %v179
  $region21: #{depth_decoder_forward.11} parent=0 // pred_fallthru
    _
  // Predicated region
  $region22: #{depth_decoder_forward.11} parent=0 // pred_check
    _
  $region23: #{depth_decoder_forward.11} parent=0 // pred_check_branch
    %189 = sbr.rel (0) target = $region25
  $region24: #{depth_decoder_forward.11} parent=0 // pred_region
    _
  $region25: #{depth_decoder_forward.11} parent=0 // pred_fallthru
    _
  // Predicated region
  $region26: #{depth_decoder_forward.11} parent=0 // pred_check
    _
  $region27: #{depth_decoder_forward.11} parent=0 // pred_check_branch
    %191 = sbr.rel (0) target = $region29
  $region28: #{depth_decoder_forward.11} parent=0 // pred_region
    _
  $region29: #{depth_decoder_forward.11} parent=0 // pred_fallthru
    _

// kernel: depth_decoder_forward.12
$region0: #{depth_decoder_forward.12}
  #allocation0 [shape = 'u32[]', space=smem, size = 0x4, offset = 0x4, fixed_abs, tag = 'smem constant byte address 0x4 - core index']
  #allocation1 [shape = 'u32[144,128]{1,0:T(1,128)}', space=vmem, size = 0x12000, scoped, tag = 'internal scratch']
  #allocation2 [shape = 'f32[8,128]{1,0:T(8,128)}', space=vmem, size = 0x1000, scoped, tag = 'scratch operand']
  %s0 = inlined_call_operand.vmem [shape: bf16[8,72], index: 0, kind: input, shape index: {}]
  %s1 = inlined_call_operand.vmem [shape: bf16[72,128], index: 1, kind: input, shape index: {}]
  %s2 = inlined_call_operand.vmem [shape: f32[8,1], index: 2, kind: input, shape index: {}]
  %s3 = inlined_call_operand.vmem [shape: bf16[8,128], index: 3, kind: output, shape index: {}]
  %s4 = sld [smem:[#allocation0]]
  $region30: #{depth_decoder_forward.12} parent=0
    _
  %s6 = ssub.s32 1, %s4
  %s7 = scalar_select 0, %s6, %s4
  // Predicated region
  $region2: #{depth_decoder_forward.12} parent=0 // pred_check
    _
  $region3: #{depth_decoder_forward.12} parent=0 // pred_check_branch
    %9 = sbr.rel (0) target = $region5
  $region4: #{depth_decoder_forward.12} parent=0 // pred_region
    _
  $region5: #{depth_decoder_forward.12} parent=0 // pred_fallthru
    _
  // Predicated region
  $region6: #{depth_decoder_forward.12} parent=0 // pred_check
    _
  $region7: #{depth_decoder_forward.12} parent=0 // pred_check_branch
    %11 = sbr.rel (0) target = $region9
  $region8: #{depth_decoder_forward.12} parent=0 // pred_region
    _
  $region9: #{depth_decoder_forward.12} parent=0 // pred_fallthru
    _
  // Predicated region
  $region10: #{depth_decoder_forward.12} parent=0 // pred_check
    _
  $region11: #{depth_decoder_forward.12} parent=0 // pred_check_branch
    %13 = sbr.rel (0) target = $region13
  $region12: #{depth_decoder_forward.12} parent=0 // pred_region
    _
  $region13: #{depth_decoder_forward.12} parent=0 // pred_fallthru
    _
  %p15 = scmp.eq.s32.totalorder 0, 0
  // Predicated region
  $region14: #{depth_decoder_forward.12} parent=0 // pred_check
    %p16 = pneg %p15
  $region15: #{depth_decoder_forward.12} parent=0 // pred_check_branch
    %18 = sbr.rel (%p16) target = $region17
  $region16: #{depth_decoder_forward.12} parent=0 // pred_region
    %19 = vst [vmem:[#allocation2] sm:$0xff] 0.0
  $region17: #{depth_decoder_forward.12} parent=0 // pred_fallthru
    _
  %v20 = vld [vmem:[#allocation2] sm:$0xff]
  %v21 = vld [vmem:[%s0] sm:$0xf]
  %v22 = vld [vmem:[%s1] sm:$0xf]
  %v23 = vld [vmem:[%s1 + $0x4] sm:$0xf]
  %v24 = vld [vmem:[%s1 + $0x8] sm:$0xf]
  %v25 = vld [vmem:[%s1 + $0xc] sm:$0xf]
  %v26 = vld [vmem:[%s1 + $0x10] sm:$0xf]
  %v27 = vld [vmem:[%s1 + $0x14] sm:$0xf]
  %v28 = vld [vmem:[%s1 + $0x18] sm:$0xf]
  %v29 = vld [vmem:[%s1 + $0x1c] sm:$0xf]
  %v30 = vld [vmem:[%s1 + $0x20] sm:$0xf]
  %v40 = vunpack.c.l.b16 %v22
  %v41 = vunpack.c.l.b16 %v23
  %v42 = vunpack.c.l.b16 %v24
  %v43 = vunpack.c.l.b16 %v25
  %v44 = vunpack.c.l.b16 %v26
  %v45 = vunpack.c.l.b16 %v27
  %v46 = vunpack.c.l.b16 %v28
  %v47 = vunpack.c.l.b16 %v29
  %v48 = vunpack.c.l.b16 %v30
  %v49 = vpack.c.b16 %v41, %v40
  %v50 = vpack.c.b16 %v43, %v42
  %v51 = vpack.c.b16 %v45, %v44
  %v52 = vpack.c.b16 %v47, %v46
  %v53 = vpack.c.b16 %v48, %v48
  %vm58 = vcmask 588800
  %v60 = vsel %vm58, %v21, 0
  %vm62 = vcmask 1043456
  %v64 = vsel %vm62, %v53, 0
  %66 = vmatprep.subr.bf16.mxu0 0
  %67 = vmatpush1.bf16.msra.mxu0 %v49
  %68 = vmatprep.subr.bf16.mxu0 0
  %69 = vmatpush1.bf16.msra.mxu0 %v50
  %70 = vmatprep.subr.bf16.mxu0 0
  %71 = vmatpush1.bf16.msra.mxu0 %v51
  %72 = vmatprep.subr.bf16.mxu0 0
  %73 = vmatpush1.bf16.msra.mxu0 %v52
  %74 = vmatprep.subr.bf16.mxu0 0
  %75 = vmatpush1.bf16.msra.mxu0 %v64
  %76 = vmatprep.subr.bf16.mxu0 0
  %77 = vmatpush1.bf16.msra.mxu0 0
  %78 = vmatprep.subr.bf16.mxu0 0
  %79 = vmatpush1.bf16.msra.mxu0 0
  %80 = vmatprep.subr.bf16.mxu0 0
  %81 = vmatpush1.bf16.msra.mxu0 0
  %82 = vmatprep.subr.bf16.mxu0 0
  %83 = vmatpush1.bf16.msra.mxu0 0
  %84 = vmatprep.subr.bf16.mxu0 0
  %85 = vmatpush1.bf16.msra.mxu0 0
  %86 = vmatprep.subr.bf16.mxu0 0
  %87 = vmatpush1.bf16.msra.mxu0 0
  %88 = vmatprep.subr.bf16.mxu0 0
  %89 = vmatpush1.bf16.msra.mxu0 0
  %90 = vmatprep.subr.bf16.mxu0 0
  %91 = vmatpush1.bf16.msra.mxu0 0
  %92 = vmatprep.subr.bf16.mxu0 0
  %93 = vmatpush1.bf16.msra.mxu0 0
  %94 = vmatprep.subr.bf16.mxu0 0
  %95 = vmatpush1.bf16.msra.mxu0 0
  %96 = vmatprep.subr.bf16.mxu0 0
  %97 = vmatpush1.bf16.msra.mxu0 0
  %98 = vmatprep.mubr.bf16.mxu0 0
  %99 = vmatmul.mubr.bf16.gmra.mrb[0].mxu0 %v60
  %v100 = vpop.f32.mrb[0].mxu0
  %v101 = vadd.f32 0.0, %v100
  %v102 = vpop.f32.mrb[0].mxu0
  %v103 = vpop.f32.mrb[0].mxu0
  %v104 = vpop.f32.mrb[0].mxu0
  %105 = vdwg.mxu0
  %v106 = vadd.f32 %v20, %v101
  %107 = vst [vmem:[#allocation2] sm:$0xff] %v106
  // Predicated region
  $region18: #{depth_decoder_forward.12} parent=0 // pred_check
    %p108 = pneg %p15
  $region19: #{depth_decoder_forward.12} parent=0 // pred_check_branch
    %110 = sbr.rel (%p108) target = $region21
  $region20: #{depth_decoder_forward.12} parent=0 // pred_region
    %v111 = vld [vmem:[#allocation2] sm:$0xff]
    %v112 = vld [vmem:[%s2] sm:$0xff]
    %114 = vset.pattern.permute.xlu0 0
    %115 = vperm.xlu0 %114, %v112
    %v116 = vpop.permute.xlu0 %115
    %v118 = vadd.f32 %v111, %v116
    %v119 = vmax.f32 %v118, 0.0
    %v120 = vpack.c.bf16 %v119, %v119
    %121 = vst [vmem:[%s3] sm:$0xf] %v120
  $region21: #{depth_decoder_forward.12} parent=0 // pred_fallthru
    _
  // Predicated region
  $region22: #{depth_decoder_forward.12} parent=0 // pred_check
    _
  $region23: #{depth_decoder_forward.12} parent=0 // pred_check_branch
    %123 = sbr.rel (0) target = $region25
  $region24: #{depth_decoder_forward.12} parent=0 // pred_region
    _
  $region25: #{depth_decoder_forward.12} parent=0 // pred_fallthru
    _
  // Predicated region
  $region26: #{depth_decoder_forward.12} parent=0 // pred_check
    _
  $region27: #{depth_decoder_forward.12} parent=0 // pred_check_branch
    %125 = sbr.rel (0) target = $region29
  $region28: #{depth_decoder_forward.12} parent=0 // pred_region
    _
  $region29: #{depth_decoder_forward.12} parent=0 // pred_fallthru
    _

// kernel: tile.22
$region0: #{tile.22}
  #allocation0 [shape = 's32[1]{0}', space=sflag, size = 0x4, scoped, tag = 'scoped memory for tile.22']
  %s0 = inlined_call_operand.vmem [shape: f32[4], index: 0, kind: input, shape index: {}]
  %s1 = inlined_call_operand.vmem [shape: f32[4,4], index: 1, kind: output, shape index: {}]
  // Predicated region
  $region2: #{tile.22} parent=0 // pred_check
    _
  $region3: #{tile.22} parent=0 // pred_check_branch
    %3 = sbr.rel (0) target = $region5
  $region4: #{tile.22} parent=0 // pred_region
    _
  $region5: #{tile.22} parent=0 // pred_fallthru
    _
  %v4 = vld [vmem:[%s0] ss:$0 sm:$0xff]
  %5 = vst [vmem:[%s1] sm:$0xf] %v4

// kernel: tile.1
$region0: #{tile.1}
  %s0 = inlined_call_operand.vmem [shape: f32[4,4], index: 0, kind: input, shape index: {}]
  %s1 = inlined_call_operand.vmem [shape: f32[16,1], index: 1, kind: output, shape index: {}]
  $region1: #{tile.1} parent=0
    #allocation0 [shape = 'u8[4096]{0}', space=vmem, size = 0x1000, scoped, tag = 'scoped mem for input reshape']
    %s3 = sshllo.u32 0, 4
    %v4 = vld [vmem:[%s0] sm:%s3]
    %5 = vst [vmem:[#allocation0] sm:%s3] %v4
    %v6 = vld [vmem:[#allocation0] sm:$0xf]
    %vm7 = vcmask 7168
    %8 = vst.msk [vmem:[%s1] ss:$4 sm:$0xf] %vm7, %v6
    %v9 = vld [vmem:[#allocation0] sm:$0xf]
    %10 = vrot.lane.b32.xlu0 %v9, 127
    %v11 = vpop.permute.xlu0 %10
    %vm12 = vcmask 7168
    %s13 = scalar_lea.vmem %s1, 1
    %14 = vst.msk [vmem:[%s13] ss:$4 sm:$0xf] %vm12, %v11
    %v15 = vld [vmem:[#allocation0] sm:$0xf]
    %16 = vrot.lane.b32.xlu0 %v15, 126
    %v17 = vpop.permute.xlu0 %16
    %vm18 = vcmask 7168
    %s19 = scalar_lea.vmem %s1, 2
    %20 = vst.msk [vmem:[%s19] ss:$4 sm:$0xf] %vm18, %v17
    %v21 = vld [vmem:[#allocation0] sm:$0xf]
    %22 = vrot.lane.b32.xlu0 %v21, 125
    %v23 = vpop.permute.xlu0 %22
    %vm24 = vcmask 7168
    %s25 = scalar_lea.vmem %s1, 3
    %26 = vst.msk [vmem:[%s25] ss:$4 sm:$0xf] %vm24, %v23

// kernel: depth_decoder_forward.13
$region0: #{depth_decoder_forward.13}
  #allocation0 [shape = 'u32[]', space=smem, size = 0x4, offset = 0x4, fixed_abs, tag = 'smem constant byte address 0x4 - core index']
  #allocation1 [shape = 'u32[144,128]{1,0:T(1,128)}', space=vmem, size = 0x12000, scoped, tag = 'internal scratch']
  #allocation2 [shape = 'f32[8,128]{1,0:T(8,128)}', space=vmem, size = 0x1000, scoped, tag = 'scratch operand']
  %s0 = inlined_call_operand.vmem [shape: bf16[8,72], index: 0, kind: input, shape index: {}]
  %s1 = inlined_call_operand.vmem [shape: bf16[72,128], index: 1, kind: input, shape index: {}]
  %s2 = inlined_call_operand.vmem [shape: f32[8,1], index: 2, kind: input, shape index: {}]
  %s3 = inlined_call_operand.vmem [shape: bf16[8,128], index: 3, kind: input, shape index: {}]
  %s4 = inlined_call_operand.vmem [shape: bf16[8,128], index: 4, kind: output, shape index: {}]
  %s5 = sld [smem:[#allocation0]]
  $region34: #{depth_decoder_forward.13} parent=0
    _
  %s7 = ssub.s32 1, %s5
  %s8 = scalar_select 0, %s7, %s5
  // Predicated region
  $region2: #{depth_decoder_forward.13} parent=0 // pred_check
    _
  $region3: #{depth_decoder_forward.13} parent=0 // pred_check_branch
    %10 = sbr.rel (0) target = $region5
  $region4: #{depth_decoder_forward.13} parent=0 // pred_region
    _
  $region5: #{depth_decoder_forward.13} parent=0 // pred_fallthru
    _
  // Predicated region
  $region6: #{depth_decoder_forward.13} parent=0 // pred_check
    _
  $region7: #{depth_decoder_forward.13} parent=0 // pred_check_branch
    %12 = sbr.rel (0) target = $region9
  $region8: #{depth_decoder_forward.13} parent=0 // pred_region
    _
  $region9: #{depth_decoder_forward.13} parent=0 // pred_fallthru
    _
  // Predicated region
  $region10: #{depth_decoder_forward.13} parent=0 // pred_check
    _
  $region11: #{depth_decoder_forward.13} parent=0 // pred_check_branch
    %14 = sbr.rel (0) target = $region13
  $region12: #{depth_decoder_forward.13} parent=0 // pred_region
    _
  $region13: #{depth_decoder_forward.13} parent=0 // pred_fallthru
    _
  // Predicated region
  $region14: #{depth_decoder_forward.13} parent=0 // pred_check
    _
  $region15: #{depth_decoder_forward.13} parent=0 // pred_check_branch
    %16 = sbr.rel (0) target = $region17
  $region16: #{depth_decoder_forward.13} parent=0 // pred_region
    _
  $region17: #{depth_decoder_forward.13} parent=0 // pred_fallthru
    _
  %p18 = scmp.eq.s32.totalorder 0, 0
  // Predicated region
  $region18: #{depth_decoder_forward.13} parent=0 // pred_check
    %p19 = pneg %p18
  $region19: #{depth_decoder_forward.13} parent=0 // pred_check_branch
    %21 = sbr.rel (%p19) target = $region21
  $region20: #{depth_decoder_forward.13} parent=0 // pred_region
    %22 = vst [vmem:[#allocation2] sm:$0xff] 0.0
  $region21: #{depth_decoder_forward.13} parent=0 // pred_fallthru
    _
  %v23 = vld [vmem:[#allocation2] sm:$0xff]
  %v24 = vld [vmem:[%s0] sm:$0xf]
  %v25 = vld [vmem:[%s1] sm:$0xf]
  %v26 = vld [vmem:[%s1 + $0x4] sm:$0xf]
  %v27 = vld [vmem:[%s1 + $0x8] sm:$0xf]
  %v28 = vld [vmem:[%s1 + $0xc] sm:$0xf]
  %v29 = vld [vmem:[%s1 + $0x10] sm:$0xf]
  %v30 = vld [vmem:[%s1 + $0x14] sm:$0xf]
  %v31 = vld [vmem:[%s1 + $0x18] sm:$0xf]
  %v32 = vld [vmem:[%s1 + $0x1c] sm:$0xf]
  %v33 = vld [vmem:[%s1 + $0x20] sm:$0xf]
  %v43 = vunpack.c.l.b16 %v25
  %v44 = vunpack.c.l.b16 %v26
  %v45 = vunpack.c.l.b16 %v27
  %v46 = vunpack.c.l.b16 %v28
  %v47 = vunpack.c.l.b16 %v29
  %v48 = vunpack.c.l.b16 %v30
  %v49 = vunpack.c.l.b16 %v31
  %v50 = vunpack.c.l.b16 %v32
  %v51 = vunpack.c.l.b16 %v33
  %v52 = vpack.c.b16 %v44, %v43
  %v53 = vpack.c.b16 %v46, %v45
  %v54 = vpack.c.b16 %v48, %v47
  %v55 = vpack.c.b16 %v50, %v49
  %v56 = vpack.c.b16 %v51, %v51
  %vm61 = vcmask 588800
  %v63 = vsel %vm61, %v24, 0
  %vm65 = vcmask 1043456
  %v67 = vsel %vm65, %v56, 0
  %69 = vmatprep.subr.bf16.mxu0 0
  %70 = vmatpush1.bf16.msra.mxu0 %v52
  %71 = vmatprep.subr.bf16.mxu0 0
  %72 = vmatpush1.bf16.msra.mxu0 %v53
  %73 = vmatprep.subr.bf16.mxu0 0
  %74 = vmatpush1.bf16.msra.mxu0 %v54
  %75 = vmatprep.subr.bf16.mxu0 0
  %76 = vmatpush1.bf16.msra.mxu0 %v55
  %77 = vmatprep.subr.bf16.mxu0 0
  %78 = vmatpush1.bf16.msra.mxu0 %v67
  %79 = vmatprep.subr.bf16.mxu0 0
  %80 = vmatpush1.bf16.msra.mxu0 0
  %81 = vmatprep.subr.bf16.mxu0 0
  %82 = vmatpush1.bf16.msra.mxu0 0
  %83 = vmatprep.subr.bf16.mxu0 0
  %84 = vmatpush1.bf16.msra.mxu0 0
  %85 = vmatprep.subr.bf16.mxu0 0
  %86 = vmatpush1.bf16.msra.mxu0 0
  %87 = vmatprep.subr.bf16.mxu0 0
  %88 = vmatpush1.bf16.msra.mxu0 0
  %89 = vmatprep.subr.bf16.mxu0 0
  %90 = vmatpush1.bf16.msra.mxu0 0
  %91 = vmatprep.subr.bf16.mxu0 0
  %92 = vmatpush1.bf16.msra.mxu0 0
  %93 = vmatprep.subr.bf16.mxu0 0
  %94 = vmatpush1.bf16.msra.mxu0 0
  %95 = vmatprep.subr.bf16.mxu0 0
  %96 = vmatpush1.bf16.msra.mxu0 0
  %97 = vmatprep.subr.bf16.mxu0 0
  %98 = vmatpush1.bf16.msra.mxu0 0
  %99 = vmatprep.subr.bf16.mxu0 0
  %100 = vmatpush1.bf16.msra.mxu0 0
  %101 = vmatprep.mubr.bf16.mxu0 0
  %102 = vmatmul.mubr.bf16.gmra.mrb[0].mxu0 %v63
  %v103 = vpop.f32.mrb[0].mxu0
  %v104 = vadd.f32 0.0, %v103
  %v105 = vpop.f32.mrb[0].mxu0
  %v106 = vpop.f32.mrb[0].mxu0
  %v107 = vpop.f32.mrb[0].mxu0
  %108 = vdwg.mxu0
  %v109 = vadd.f32 %v23, %v104
  %110 = vst [vmem:[#allocation2] sm:$0xff] %v109
  // Predicated region
  $region22: #{depth_decoder_forward.13} parent=0 // pred_check
    %p111 = pneg %p18
  $region23: #{depth_decoder_forward.13} parent=0 // pred_check_branch
    %113 = sbr.rel (%p111) target = $region25
  $region24: #{depth_decoder_forward.13} parent=0 // pred_region
    %v114 = vld [vmem:[#allocation2] sm:$0xff]
    %v115 = vld [vmem:[%s2] sm:$0xff]
    %117 = vset.pattern.permute.xlu0 0
    %118 = vperm.xlu0 %117, %v115
    %v119 = vpop.permute.xlu0 %118
    %v121 = vadd.f32 %v114, %v119
    %v122 = vld [vmem:[%s3] sm:$0xf]
    %v123 = vunpack.c.l.bf16 %v122
    %v124 = vadd.f32 %v121, %v123
    %v125 = vmax.f32 %v124, 0.0
    %v126 = vpack.c.bf16 %v125, %v125
    %127 = vst [vmem:[%s4] sm:$0xf] %v126
  $region25: #{depth_decoder_forward.13} parent=0 // pred_fallthru
    _
  // Predicated region
  $region26: #{depth_decoder_forward.13} parent=0 // pred_check
    _
  $region27: #{depth_decoder_forward.13} parent=0 // pred_check_branch
    %129 = sbr.rel (0) target = $region29
  $region28: #{depth_decoder_forward.13} parent=0 // pred_region
    _
  $region29: #{depth_decoder_forward.13} parent=0 // pred_fallthru
    _
  // Predicated region
  $region30: #{depth_decoder_forward.13} parent=0 // pred_check
    _
  $region31: #{depth_decoder_forward.13} parent=0 // pred_check_branch
    %131 = sbr.rel (0) target = $region33
  $region32: #{depth_decoder_forward.13} parent=0 // pred_region
    _
  $region33: #{depth_decoder_forward.13} parent=0 // pred_fallthru
    _

// kernel: depth_decoder_forward.14
$region0: #{depth_decoder_forward.14}
  #allocation0 [shape = 'u32[]', space=smem, size = 0x4, offset = 0x4, fixed_abs, tag = 'smem constant byte address 0x4 - core index']
  #allocation1 [shape = 'u32[144,128]{1,0:T(1,128)}', space=vmem, size = 0x12000, scoped, tag = 'internal scratch']
  #allocation2 [shape = 'f32[16,128]{1,0:T(8,128)}', space=vmem, size = 0x2000, scoped, tag = 'scratch operand']
  %s0 = inlined_call_operand.vmem [shape: bf16[16,72], index: 0, kind: input, shape index: {}]
  %s1 = inlined_call_operand.vmem [shape: bf16[72,128], index: 1, kind: input, shape index: {}]
  %s2 = inlined_call_operand.vmem [shape: f32[16,1], index: 2, kind: input, shape index: {}]
  %s3 = inlined_call_operand.vmem [shape: bf16[16,128], index: 3, kind: output, shape index: {}]
  %s4 = sld [smem:[#allocation0]]
  $region30: #{depth_decoder_forward.14} parent=0
    _
  %s6 = ssub.s32 1, %s4
  %s7 = scalar_select 0, %s6, %s4
  // Predicated region
  $region2: #{depth_decoder_forward.14} parent=0 // pred_check
    _
  $region3: #{depth_decoder_forward.14} parent=0 // pred_check_branch
    %9 = sbr.rel (0) target = $region5
  $region4: #{depth_decoder_forward.14} parent=0 // pred_region
    _
  $region5: #{depth_decoder_forward.14} parent=0 // pred_fallthru
    _
  // Predicated region
  $region6: #{depth_decoder_forward.14} parent=0 // pred_check
    _
  $region7: #{depth_decoder_forward.14} parent=0 // pred_check_branch
    %11 = sbr.rel (0) target = $region9
  $region8: #{depth_decoder_forward.14} parent=0 // pred_region
    _
  $region9: #{depth_decoder_forward.14} parent=0 // pred_fallthru
    _
  // Predicated region
  $region10: #{depth_decoder_forward.14} parent=0 // pred_check
    _
  $region11: #{depth_decoder_forward.14} parent=0 // pred_check_branch
    %13 = sbr.rel (0) target = $region13
  $region12: #{depth_decoder_forward.14} parent=0 // pred_region
    _
  $region13: #{depth_decoder_forward.14} parent=0 // pred_fallthru
    _
  %p15 = scmp.eq.s32.totalorder 0, 0
  // Predicated region
  $region14: #{depth_decoder_forward.14} parent=0 // pred_check
    %p16 = pneg %p15
  $region15: #{depth_decoder_forward.14} parent=0 // pred_check_branch
    %18 = sbr.rel (%p16) target = $region17
  $region16: #{depth_decoder_forward.14} parent=0 // pred_region
    %19 = vst [vmem:[#allocation2] sm:$0xff] 0.0
    %20 = vst [vmem:[#allocation2 + $0x8] sm:$0xff] 0.0
  $region17: #{depth_decoder_forward.14} parent=0 // pred_fallthru
    _
  %v21 = vld [vmem:[#allocation2] sm:$0xff]
  %v22 = vld [vmem:[#allocation2 + $0x8] sm:$0xff]
  %v23 = vld [vmem:[%s0] sm:$0xf]
  %v24 = vld [vmem:[%s0 + $0x4] sm:$0xf]
  %v25 = vld [vmem:[%s1] sm:$0xf]
  %v26 = vld [vmem:[%s1 + $0x4] sm:$0xf]
  %v27 = vld [vmem:[%s1 + $0x8] sm:$0xf]
  %v28 = vld [vmem:[%s1 + $0xc] sm:$0xf]
  %v29 = vld [vmem:[%s1 + $0x10] sm:$0xf]
  %v30 = vld [vmem:[%s1 + $0x14] sm:$0xf]
  %v31 = vld [vmem:[%s1 + $0x18] sm:$0xf]
  %v32 = vld [vmem:[%s1 + $0x1c] sm:$0xf]
  %v33 = vld [vmem:[%s1 + $0x20] sm:$0xf]
  %v36 = vunpack.c.l.b16 %v23
  %v37 = vunpack.c.l.b16 %v24
  %v38 = vpack.c.b16 %v37, %v36
  %v48 = vunpack.c.l.b16 %v25
  %v49 = vunpack.c.l.b16 %v26
  %v50 = vunpack.c.l.b16 %v27
  %v51 = vunpack.c.l.b16 %v28
  %v52 = vunpack.c.l.b16 %v29
  %v53 = vunpack.c.l.b16 %v30
  %v54 = vunpack.c.l.b16 %v31
  %v55 = vunpack.c.l.b16 %v32
  %v56 = vunpack.c.l.b16 %v33
  %v57 = vpack.c.b16 %v49, %v48
  %v58 = vpack.c.b16 %v51, %v50
  %v59 = vpack.c.b16 %v53, %v52
  %v60 = vpack.c.b16 %v55, %v54
  %v61 = vpack.c.b16 %v56, %v56
  %vm66 = vcmask 588800
  %v68 = vsel %vm66, %v38, 0
  %vm70 = vcmask 1043456
  %v72 = vsel %vm70, %v61, 0
  %74 = vmatprep.subr.bf16.mxu0 0
  %75 = vmatpush1.bf16.msra.mxu0 %v57
  %76 = vmatprep.subr.bf16.mxu0 0
  %77 = vmatpush1.bf16.msra.mxu0 %v58
  %78 = vmatprep.subr.bf16.mxu0 0
  %79 = vmatpush1.bf16.msra.mxu0 %v59
  %80 = vmatprep.subr.bf16.mxu0 0
  %81 = vmatpush1.bf16.msra.mxu0 %v60
  %82 = vmatprep.subr.bf16.mxu0 0
  %83 = vmatpush1.bf16.msra.mxu0 %v72
  %84 = vmatprep.subr.bf16.mxu0 0
  %85 = vmatpush1.bf16.msra.mxu0 0
  %86 = vmatprep.subr.bf16.mxu0 0
  %87 = vmatpush1.bf16.msra.mxu0 0
  %88 = vmatprep.subr.bf16.mxu0 0
  %89 = vmatpush1.bf16.msra.mxu0 0
  %90 = vmatprep.subr.bf16.mxu0 0
  %91 = vmatpush1.bf16.msra.mxu0 0
  %92 = vmatprep.subr.bf16.mxu0 0
  %93 = vmatpush1.bf16.msra.mxu0 0
  %94 = vmatprep.subr.bf16.mxu0 0
  %95 = vmatpush1.bf16.msra.mxu0 0
  %96 = vmatprep.subr.bf16.mxu0 0
  %97 = vmatpush1.bf16.msra.mxu0 0
  %98 = vmatprep.subr.bf16.mxu0 0
  %99 = vmatpush1.bf16.msra.mxu0 0
  %100 = vmatprep.subr.bf16.mxu0 0
  %101 = vmatpush1.bf16.msra.mxu0 0
  %102 = vmatprep.subr.bf16.mxu0 0
  %103 = vmatpush1.bf16.msra.mxu0 0
  %104 = vmatprep.subr.bf16.mxu0 0
  %105 = vmatpush1.bf16.msra.mxu0 0
  %106 = vmatprep.mubr.bf16.mxu0 0
  %107 = vmatmul.mubr.bf16.gmra.mrb[0].mxu0 %v68
  %v108 = vpop.f32.mrb[0].mxu0
  %v109 = vadd.f32 0.0, %v108
  %v110 = vpop.f32.mrb[0].mxu0
  %v111 = vpop.f32.mrb[0].mxu0
  %v112 = vadd.f32 0.0, %v111
  %v113 = vpop.f32.mrb[0].mxu0
  %114 = vdwg.mxu0
  %v115 = vadd.f32 %v21, %v109
  %v116 = vadd.f32 %v22, %v112
  %117 = vst [vmem:[#allocation2] sm:$0xff] %v115
  %118 = vst [vmem:[#allocation2 + $0x8] sm:$0xff] %v116
  // Predicated region
  $region18: #{depth_decoder_forward.14} parent=0 // pred_check
    %p119 = pneg %p15
  $region19: #{depth_decoder_forward.14} parent=0 // pred_check_branch
    %121 = sbr.rel (%p119) target = $region21
  $region20: #{depth_decoder_forward.14} parent=0 // pred_region
    %v122 = vld [vmem:[#allocation2] sm:$0xff]
    %v123 = vld [vmem:[#allocation2 + $0x8] sm:$0xff]
    %v124 = vld [vmem:[%s2] sm:$0xff]
    %v125 = vld [vmem:[%s2 + $0x8] sm:$0xff]
    %127 = vset.pattern.permute.xlu0 0
    %128 = vperm.xlu0 %127, %v124
    %v129 = vpop.permute.xlu0 %128
    %132 = vset.pattern.permute.xlu0 0
    %133 = vperm.xlu0 %132, %v125
    %v134 = vpop.permute.xlu0 %133
    %v136 = vadd.f32 %v122, %v129
    %v137 = vadd.f32 %v123, %v134
    %v138 = vmax.f32 %v136, 0.0
    %v139 = vmax.f32 %v137, 0.0
    %v140 = vpack.c.bf16 %v139, %v138
    %v142 = vunpack.c.l.b16 %v140
    %v143 = vunpack.c.h.b16 %v140
    %v144 = vpack.c.b16 %v142, %v142
    %v145 = vpack.c.b16 %v143, %v143
    %148 = vst [vmem:[%s3] sm:$0xf] %v144
    %149 = vst [vmem:[%s3 + $0x4] sm:$0xf] %v145
  $region21: #{depth_decoder_forward.14} parent=0 // pred_fallthru
    _
  // Predicated region
  $region22: #{depth_decoder_forward.14} parent=0 // pred_check
    _
  $region23: #{depth_decoder_forward.14} parent=0 // pred_check_branch
    %151 = sbr.rel (0) target = $region25
  $region24: #{depth_decoder_forward.14} parent=0 // pred_region
    _
  $region25: #{depth_decoder_forward.14} parent=0 // pred_fallthru
    _
  // Predicated region
  $region26: #{depth_decoder_forward.14} parent=0 // pred_check
    _
  $region27: #{depth_decoder_forward.14} parent=0 // pred_check_branch
    %153 = sbr.rel (0) target = $region29
  $region28: #{depth_decoder_forward.14} parent=0 // pred_region
    _
  $region29: #{depth_decoder_forward.14} parent=0 // pred_fallthru
    _

// kernel: depth_decoder_forward.15
$region0: #{depth_decoder_forward.15}
  #allocation0 [shape = 'u32[]', space=smem, size = 0x4, offset = 0x4, fixed_abs, tag = 'smem constant byte address 0x4 - core index']
  #allocation1 [shape = 'u32[144,128]{1,0:T(1,128)}', space=vmem, size = 0x12000, scoped, tag = 'internal scratch']
  #allocation2 [shape = 'f32[4,512]{1,0:T(4,128)}', space=vmem, size = 0x2000, scoped, tag = 'scratch operand']
  %s0 = inlined_call_operand.vmem [shape: bf16[4,36], index: 0, kind: input, shape index: {}]
  %s1 = inlined_call_operand.vmem [shape: bf16[36,512], index: 1, kind: input, shape index: {}]
  %s2 = inlined_call_operand.vmem [shape: f32[4,1], index: 2, kind: input, shape index: {}]
  %s3 = inlined_call_operand.vmem [shape: bf16[4,512], index: 3, kind: output, shape index: {}]
  %s4 = sld [smem:[#allocation0]]
  $region30: #{depth_decoder_forward.15} parent=0
    _
  %s6 = ssub.s32 1, %s4
  %s7 = scalar_select 0, %s6, %s4
  // Predicated region
  $region2: #{depth_decoder_forward.15} parent=0 // pred_check
    _
  $region3: #{depth_decoder_forward.15} parent=0 // pred_check_branch
    %9 = sbr.rel (0) target = $region5
  $region4: #{depth_decoder_forward.15} parent=0 // pred_region
    _
  $region5: #{depth_decoder_forward.15} parent=0 // pred_fallthru
    _
  // Predicated region
  $region6: #{depth_decoder_forward.15} parent=0 // pred_check
    _
  $region7: #{depth_decoder_forward.15} parent=0 // pred_check_branch
    %11 = sbr.rel (0) target = $region9
  $region8: #{depth_decoder_forward.15} parent=0 // pred_region
    _
  $region9: #{depth_decoder_forward.15} parent=0 // pred_fallthru
    _
  // Predicated region
  $region10: #{depth_decoder_forward.15} parent=0 // pred_check
    _
  $region11: #{depth_decoder_forward.15} parent=0 // pred_check_branch
    %13 = sbr.rel (0) target = $region13
  $region12: #{depth_decoder_forward.15} parent=0 // pred_region
    _
  $region13: #{depth_decoder_forward.15} parent=0 // pred_fallthru
    _
  %p15 = scmp.eq.s32.totalorder 0, 0
  // Predicated region
  $region14: #{depth_decoder_forward.15} parent=0 // pred_check
    %p16 = pneg %p15
  $region15: #{depth_decoder_forward.15} parent=0 // pred_check_branch
    %18 = sbr.rel (%p16) target = $region17
  $region16: #{depth_decoder_forward.15} parent=0 // pred_region
    %19 = vst [vmem:[#allocation2] sm:$0xff] 0.0
    %20 = vst [vmem:[#allocation2 + $0x8] sm:$0xff] 0.0
  $region17: #{depth_decoder_forward.15} parent=0 // pred_fallthru
    _
  %v21 = vld [vmem:[#allocation2] sm:$0xff]
  %v22 = vld [vmem:[#allocation2 + $0x8] sm:$0xff]
  %v23 = vld [vmem:[%s0] sm:$0x3]
  %v24 = vld [vmem:[%s1] sm:$0xff]
  %v25 = vld [vmem:[%s1 + $0x8] sm:$0xff]
  %v26 = vld [vmem:[%s1 + $0x10] sm:$0xff]
  %v27 = vld [vmem:[%s1 + $0x18] sm:$0xff]
  %v28 = vld [vmem:[%s1 + $0x20] sm:$0xff]
  %v29 = vld [vmem:[%s1 + $0x28] sm:$0xff]
  %v30 = vld [vmem:[%s1 + $0x30] sm:$0xff]
  %v31 = vld [vmem:[%s1 + $0x38] sm:$0xff]
  %v32 = vld [vmem:[%s1 + $0x40] sm:$0x33]
  %v33 = vld [vmem:[%s1 + $0x48] sm:$0x33]
  %v44 = vunpack.c.l.b16 %v24
  %v45 = vunpack.c.h.b16 %v24
  %v46 = vunpack.c.l.b16 %v25
  %v47 = vunpack.c.h.b16 %v25
  %v48 = vunpack.c.l.b16 %v26
  %v49 = vunpack.c.h.b16 %v26
  %v50 = vunpack.c.l.b16 %v27
  %v51 = vunpack.c.h.b16 %v27
  %v52 = vunpack.c.l.b16 %v28
  %v53 = vunpack.c.h.b16 %v28
  %v54 = vunpack.c.l.b16 %v29
  %v55 = vunpack.c.h.b16 %v29
  %v56 = vunpack.c.l.b16 %v30
  %v57 = vunpack.c.h.b16 %v30
  %v58 = vunpack.c.l.b16 %v31
  %v59 = vunpack.c.h.b16 %v31
  %v60 = vunpack.c.l.b16 %v32
  %v61 = vunpack.c.h.b16 %v32
  %v62 = vunpack.c.l.b16 %v33
  %v63 = vunpack.c.h.b16 %v33
  %v64 = vpack.c.b16 %v48, %v44
  %v65 = vpack.c.b16 %v49, %v45
  %v66 = vpack.c.b16 %v50, %v46
  %v67 = vpack.c.b16 %v51, %v47
  %v68 = vpack.c.b16 %v56, %v52
  %v69 = vpack.c.b16 %v57, %v53
  %v70 = vpack.c.b16 %v58, %v54
  %v71 = vpack.c.b16 %v59, %v55
  %v72 = vpack.c.b16 %v60, %v60
  %v73 = vpack.c.b16 %v61, %v61
  %v74 = vpack.c.b16 %v62, %v62
  %v75 = vpack.c.b16 %v63, %v63
  %vm84 = vcmask 293888
  %v86 = vsel %vm84, %v23, 0
  %vm88 = vcmask 1041408
  %v90 = vsel %vm88, %v72, 0
  %v93 = vsel %vm88, %v73, 0
  %v96 = vsel %vm88, %v74, 0
  %v99 = vsel %vm88, %v75, 0
  %101 = vmatprep.subr.bf16.mxu0 %v65
  %102 = vmatpush1.bf16.msra.mxu0 %v64
  %103 = vmatprep.subr.bf16.mxu0 %v69
  %104 = vmatpush1.bf16.msra.mxu0 %v68
  %105 = vmatprep.subr.bf16.mxu0 %v93
  %106 = vmatpush1.bf16.msra.mxu0 %v90
  %107 = vmatprep.subr.bf16.mxu0 0
  %108 = vmatpush1.bf16.msra.mxu0 0
  %109 = vmatprep.subr.bf16.mxu0 0
  %110 = vmatpush1.bf16.msra.mxu0 0
  %111 = vmatprep.subr.bf16.mxu0 0
  %112 = vmatpush1.bf16.msra.mxu0 0
  %113 = vmatprep.subr.bf16.mxu0 0
  %114 = vmatpush1.bf16.msra.mxu0 0
  %115 = vmatprep.subr.bf16.mxu0 0
  %116 = vmatpush1.bf16.msra.mxu0 0
  %117 = vmatprep.subr.bf16.mxu0 0
  %118 = vmatpush1.bf16.msra.mxu0 0
  %119 = vmatprep.subr.bf16.mxu0 0
  %120 = vmatpush1.bf16.msra.mxu0 0
  %121 = vmatprep.subr.bf16.mxu0 0
  %122 = vmatpush1.bf16.msra.mxu0 0
  %123 = vmatprep.subr.bf16.mxu0 0
  %124 = vmatpush1.bf16.msra.mxu0 0
  %125 = vmatprep.subr.bf16.mxu0 0
  %126 = vmatpush1.bf16.msra.mxu0 0
  %127 = vmatprep.subr.bf16.mxu0 0
  %128 = vmatpush1.bf16.msra.mxu0 0
  %129 = vmatprep.subr.bf16.mxu0 0
  %130 = vmatpush1.bf16.msra.mxu0 0
  %131 = vmatprep.subr.bf16.mxu0 0
  %132 = vmatpush1.bf16.msra.mxu0 0
  %133 = vmatprep.mubr.bf16.mxu0 0
  %134 = vmatmul.mubr.bf16.gmra.mrb[0].mxu0 %v86
  %v135 = vpop.f32.mrb[0].mxu0
  %v136 = vadd.f32 0.0, %v135
  %v137 = vpop.f32.mrb[0].mxu0
  %v138 = vadd.f32 0.0, %v137
  %v139 = vpop.f32.mrb[0].mxu0
  %v140 = vpop.f32.mrb[0].mxu0
  %141 = vdwg.mxu0
  %142 = vmatprep.subr.bf16.mxu0 %v67
  %143 = vmatpush1.bf16.msra.mxu0 %v66
  %144 = vmatprep.subr.bf16.mxu0 %v71
  %145 = vmatpush1.bf16.msra.mxu0 %v70
  %146 = vmatprep.subr.bf16.mxu0 %v99
  %147 = vmatpush1.bf16.msra.mxu0 %v96
  %148 = vmatprep.subr.bf16.mxu0 0
  %149 = vmatpush1.bf16.msra.mxu0 0
  %150 = vmatprep.subr.bf16.mxu0 0
  %151 = vmatpush1.bf16.msra.mxu0 0
  %152 = vmatprep.subr.bf16.mxu0 0
  %153 = vmatpush1.bf16.msra.mxu0 0
  %154 = vmatprep.subr.bf16.mxu0 0
  %155 = vmatpush1.bf16.msra.mxu0 0
  %156 = vmatprep.subr.bf16.mxu0 0
  %157 = vmatpush1.bf16.msra.mxu0 0
  %158 = vmatprep.subr.bf16.mxu0 0
  %159 = vmatpush1.bf16.msra.mxu0 0
  %160 = vmatprep.subr.bf16.mxu0 0
  %161 = vmatpush1.bf16.msra.mxu0 0
  %162 = vmatprep.subr.bf16.mxu0 0
  %163 = vmatpush1.bf16.msra.mxu0 0
  %164 = vmatprep.subr.bf16.mxu0 0
  %165 = vmatpush1.bf16.msra.mxu0 0
  %166 = vmatprep.subr.bf16.mxu0 0
  %167 = vmatpush1.bf16.msra.mxu0 0
  %168 = vmatprep.subr.bf16.mxu0 0
  %169 = vmatpush1.bf16.msra.mxu0 0
  %170 = vmatprep.subr.bf16.mxu0 0
  %171 = vmatpush1.bf16.msra.mxu0 0
  %172 = vmatprep.subr.bf16.mxu0 0
  %173 = vmatpush1.bf16.msra.mxu0 0
  %174 = vmatprep.mubr.bf16.mxu0 0
  %175 = vmatmul.mubr.bf16.gmra.mrb[0].mxu0 %v86
  %v176 = vpop.f32.mrb[0].mxu0
  %v177 = vadd.f32 0.0, %v176
  %v178 = vpop.f32.mrb[0].mxu0
  %v179 = vadd.f32 0.0, %v178
  %v180 = vpop.f32.mrb[0].mxu0
  %v181 = vpop.f32.mrb[0].mxu0
  %182 = vdwg.mxu0
  %v187 = vcombine.low %v136, %v138
  %v188 = vcombine.low %v177, %v179
  %v191 = vadd.f32 %v21, %v187
  %v192 = vadd.f32 %v22, %v188
  %193 = vst [vmem:[#allocation2] sm:$0xff] %v191
  %194 = vst [vmem:[#allocation2 + $0x8] sm:$0xff] %v192
  // Predicated region
  $region18: #{depth_decoder_forward.15} parent=0 // pred_check
    %p195 = pneg %p15
  $region19: #{depth_decoder_forward.15} parent=0 // pred_check_branch
    %197 = sbr.rel (%p195) target = $region21
  $region20: #{depth_decoder_forward.15} parent=0 // pred_region
    %v198 = vld [vmem:[#allocation2] sm:$0xff]
    %v199 = vld [vmem:[#allocation2 + $0x8] sm:$0xff]
    %v200 = vld [vmem:[%s2] sm:$0xf]
    %202 = vset.pattern.permute.xlu0 0
    %203 = vperm.xlu0 %202, %v200
    %v204 = vpop.permute.xlu0 %203
    %v206 = vunpack.c.l.s4 839922192
    %v207 = vunpack.c.0.s8 %v206
    %v208 = vlaneseq
    %v209 = vshrl.u32 %v208, 7
    %v210 = vsub.s32 %v207, %v209
    %v211 = vrot.slane %v204, %v210
    %v213 = vadd.f32 %v198, %v211
    %v214 = vadd.f32 %v199, %v211
    %v215 = vmax.f32 %v213, 0.0
    %v216 = vmax.f32 %v214, 0.0
    %v219 = vcombine.high %v215, %v215
    %v220 = vcombine.high %v216, %v216
    %v223 = vpack.c.bf16 %v215, %v215
    %v224 = vpack.c.bf16 %v219, %v219
    %v225 = vpack.c.bf16 %v216, %v216
    %v226 = vpack.c.bf16 %v220, %v220
    %v231 = vcombine.low %v223, %v224
    %v232 = vcombine.low %v225, %v226
    %v234 = vunpack.c.l.s4 1983009808
    %v235 = vunpack.c.0.s8 %v234
    %v236 = vlaneseq
    %v237 = vshrl.u32 %v236, 7
    %v238 = vsub.s32 %v235, %v237
    %v239 = vrot.slane %v231, %v238
    %v241 = vunpack.c.l.s4 1983009808
    %v242 = vunpack.c.0.s8 %v241
    %v243 = vlaneseq
    %v244 = vshrl.u32 %v243, 7
    %v245 = vsub.s32 %v242, %v244
    %v246 = vrot.slane %v232, %v245
    %v247 = vcombine.low %v239, %v246
    %249 = vst [vmem:[%s3] sm:$0xff] %v247
  $region21: #{depth_decoder_forward.15} parent=0 // pred_fallthru
    _
  // Predicated region
  $region22: #{depth_decoder_forward.15} parent=0 // pred_check
    _
  $region23: #{depth_decoder_forward.15} parent=0 // pred_check_branch
    %251 = sbr.rel (0) target = $region25
  $region24: #{depth_decoder_forward.15} parent=0 // pred_region
    _
  $region25: #{depth_decoder_forward.15} parent=0 // pred_fallthru
    _
  // Predicated region
  $region26: #{depth_decoder_forward.15} parent=0 // pred_check
    _
  $region27: #{depth_decoder_forward.15} parent=0 // pred_check_branch
    %253 = sbr.rel (0) target = $region29
  $region28: #{depth_decoder_forward.15} parent=0 // pred_region
    _
  $region29: #{depth_decoder_forward.15} parent=0 // pred_fallthru
    _

// kernel: tile.27
$region0: #{tile.27}
  #allocation0 [shape = 's32[1]{0}', space=sflag, size = 0x4, scoped, tag = 'scoped memory for tile.27']
  %s0 = inlined_call_operand.<no memory space> [shape: f32[], index: 0, kind: input, shape index: {}]
  %s1 = inlined_call_operand.vmem [shape: f32[4,1], index: 1, kind: output, shape index: {}]
  %v2 = vstv %s0
  %3 = vst [vmem:[%s1] sm:$0xf] %v2

// kernel: depth_decoder_forward.18
$region0: #{depth_decoder_forward.18}
  #allocation0 [shape = 'u32[]', space=smem, size = 0x4, offset = 0x4, fixed_abs, tag = 'smem constant byte address 0x4 - core index']
  #allocation1 [shape = 'u32[144,128]{1,0:T(1,128)}', space=vmem, size = 0x12000, scoped, tag = 'internal scratch']
  #allocation2 [shape = 'f32[1,512]{1,0:T(1,128)}', space=vmem, size = 0x800, scoped, tag = 'scratch operand']
  #allocation3 [shape = 'bf16[1,1]{1,0:T(2,128)S(1)}', space=vmem, size = 0x200, scoped, tag = 'scoped memory for depth_decoder_forward.18']
  #allocation4 [shape = 'f32[1,1]{1,0:T(1,128)S(1)}', space=vmem, size = 0x200, scoped, tag = 'scoped memory for depth_decoder_forward.18']
  %s0 = inlined_call_operand.<no memory space> [shape: bf16[1,1], index: 0, kind: input, shape index: {}]
  %s1 = inlined_call_operand.vmem [shape: bf16[1,2048], index: 1, kind: input, shape index: {}]
  %s2 = inlined_call_operand.<no memory space> [shape: f32[1,1], index: 2, kind: input, shape index: {}]
  %s3 = inlined_call_operand.vmem [shape: bf16[1,2048], index: 3, kind: output, shape index: {}]
  %s4 = sld [smem:[#allocation0]]
  $region53: #{depth_decoder_forward.18} parent=0
    _
  %s6 = ssub.s32 1, %s4
  %s7 = scalar_select 0, %s6, %s4
  %v8 = vstv %s0
  %9 = vst [vmem:[#allocation3] sm:$0x1] %v8
  %v10 = vstv %s2
  %11 = vst [vmem:[#allocation4] sm:$0x1] %v10
  loop: start=0, step=1, limit=6
  $region2: #{depth_decoder_forward.18} parent=0 // loop_pre_header
    _
  $region3: #{depth_decoder_forward.18} parent=0 // loop_header
    %s13 = sphi 0, %s17
    %p14 = scmp.ge.s32.totalorder %s13, 6
    %s20 = sphi 0, %s32
    %s21 = sphi 0, %s28
    %s22 = sphi 0, %s20
    %s23 = sphi 0, %s21
    %s24 = sphi 0, %s22
    %s25 = sphi 0, %s23
    %s35 = sphi 0, %s37
    %s38 = sphi 0, %s35
    %s39 = sphi 0, %s38
    %s55 = sphi 0, %s39
    %s63 = sphi 0, %s65
    %s66 = sphi 0, %s63
    %s67 = sphi 0, %s66
    %s83 = sphi 0, %s67
    %s87 = sphi 0, %s87
    %s89 = sphi 0, %s87
    %s90 = sphi 0, %s89
    %s104 = sphi 0, %s90
    %s110 = sphi 0, %s112
    %s113 = sphi 0, %s110
    %s114 = sphi 0, %s113
    %s130 = sphi 0, %s114
  $region4: #{depth_decoder_forward.18} parent=0 // loop_header_branch
    %16 = sbr.rel (%p14) target = $region8
  $region5: #{depth_decoder_forward.18} parent=0 // loop_body
    %s18 = ssub.s32 %s13, 1
    %s19 = ssub.s32 %s13, 2
    %s26 = sadd.s32 1, %s21
    %p27 = scmp.ge.s32.totalorder %s26, 1
    %s28 = scalar_select %p27, 0, %s26
    %s29 = sadd.s32 1, %s20
    %s30 = scalar_select %p27, %s29, %s20
    %p31 = scmp.ge.s32.totalorder %s30, 4
    %s32 = scalar_select %p31, 0, %s30
    %s33 = ssub.s32 %s21, %s28
    %p34 = scmp.eq.s32.totalorder %s33, 0
    %s36 = sadd.s32 %s35, 1
    %s37 = scalar_select %p34, %s35, %s36
    %p40 = pneg %p34
    %p41 = scmp.eq.s32.totalorder %s13, 3
    %p42 = por %p40, %p41
    %p43 = scmp.ne.s32.totalorder %s35, %s38
    %p44 = scmp.eq.s32.totalorder %s13, 0
    %p45 = por %p43, %p44
    %p46 = scmp.ne.s32.totalorder %s35, %s38
    %p47 = scmp.eq.s32.totalorder %s18, 3
    %p48 = por %p46, %p47
    %p49 = scmp.ne.s32.totalorder %s38, %s39
    %p50 = scmp.eq.s32.totalorder %s18, 0
    %p51 = por %p49, %p50
    %p52 = scmp.ne.s32.totalorder %s38, %s39
    %p53 = scmp.eq.s32.totalorder %s19, 3
    %p54 = por %p52, %p53
    %p56 = scmp.ne.s32.totalorder %s39, %s55
    %p57 = scmp.eq.s32.totalorder %s19, 0
    %p58 = por %p56, %p57
    %s59 = ssub.s32 %s21, %s28
    %s60 = ssub.s32 %s20, %s32
    %s61 = sor.u32 %s59, %s60
    %p62 = scmp.eq.s32.totalorder %s61, 0
    %s64 = sadd.s32 %s63, 1
    %s65 = scalar_select %p62, %s63, %s64
    %p68 = pneg %p62
    %p69 = scmp.eq.s32.totalorder %s13, 3
    %p70 = por %p68, %p69
    %p71 = scmp.ne.s32.totalorder %s63, %s66
    %p72 = scmp.eq.s32.totalorder %s13, 0
    %p73 = por %p71, %p72
    %p74 = scmp.ne.s32.totalorder %s63, %s66
    %p75 = scmp.eq.s32.totalorder %s18, 3
    %p76 = por %p74, %p75
    %p77 = scmp.ne.s32.totalorder %s66, %s67
    %p78 = scmp.eq.s32.totalorder %s18, 0
    %p79 = por %p77, %p78
    %p80 = scmp.ne.s32.totalorder %s66, %s67
    %p81 = scmp.eq.s32.totalorder %s19, 3
    %p82 = por %p80, %p81
    %p84 = scmp.ne.s32.totalorder %s67, %s83
    %p85 = scmp.eq.s32.totalorder %s19, 0
    %p86 = por %p84, %p85
    %s88 = sadd.s32 %s87, 1
    %p91 = scmp.eq.s32.totalorder %s13, 3
    %p92 = scmp.ne.s32.totalorder %s87, %s89
    %p93 = scmp.eq.s32.totalorder %s13, 0
    %p94 = por %p92, %p93
    %p95 = scmp.ne.s32.totalorder %s87, %s89
    %p96 = scmp.eq.s32.totalorder %s18, 3
    %p97 = por %p95, %p96
    %p98 = scmp.ne.s32.totalorder %s89, %s90
    %p99 = scmp.eq.s32.totalorder %s18, 0
    %p100 = por %p98, %p99
    %p101 = scmp.ne.s32.totalorder %s89, %s90
    %p102 = scmp.eq.s32.totalorder %s19, 3
    %p103 = por %p101, %p102
    %p105 = scmp.ne.s32.totalorder %s90, %s104
    %p106 = scmp.eq.s32.totalorder %s19, 0
    %p107 = por %p105, %p106
    %s108 = ssub.s32 %s20, %s32
    %p109 = scmp.eq.s32.totalorder %s108, 0
    %s111 = sadd.s32 %s110, 1
    %s112 = scalar_select %p109, %s110, %s111
    %p115 = pneg %p109
    %p116 = scmp.eq.s32.totalorder %s13, 3
    %p117 = por %p115, %p116
    %p118 = scmp.ne.s32.totalorder %s110, %s113
    %p119 = scmp.eq.s32.totalorder %s13, 0
    %p120 = por %p118, %p119
    %p121 = scmp.ne.s32.totalorder %s110, %s113
    %p122 = scmp.eq.s32.totalorder %s18, 3
    %p123 = por %p121, %p122
    %p124 = scmp.ne.s32.totalorder %s113, %s114
    %p125 = scmp.eq.s32.totalorder %s18, 0
    %p126 = por %p124, %p125
    %p127 = scmp.ne.s32.totalorder %s113, %s114
    %p128 = scmp.eq.s32.totalorder %s19, 3
    %p129 = por %p127, %p128
    %p131 = scmp.ne.s32.totalorder %s114, %s130
    %p132 = scmp.eq.s32.totalorder %s19, 0
    %p133 = por %p131, %p132
    %p134 = scmp.le.s32.totalorder 1, %s13
    %p135 = scmp.lt.s32.totalorder %s13, 5
    %p136 = pnand %p134, %p135
    %p137 = pneg %p136
    // Predicated region
    $region9: #{depth_decoder_forward.18} parent=5 // pred_check
      _
    $region10: #{depth_decoder_forward.18} parent=5 // pred_check_branch
      %139 = sbr.rel (%p136) target = $region12
    $region11: #{depth_decoder_forward.18} parent=5 // pred_region
      %s140 = ssub.s32 %s13, 1
      // Predicated region
      $region13: #{depth_decoder_forward.18} parent=11 // pred_check
        %p141 = pneg %p51
      $region14: #{depth_decoder_forward.18} parent=11 // pred_check_branch
        %143 = sbr.rel (%p141) target = $region16
      $region15: #{depth_decoder_forward.18} parent=11 // pred_region
        %p144 = scmp.lt.s32.totalorder %s23, 0
        %s145 = scalar_select %p144, %s23, 0
        %s146 = scalar_lea.vmem [#allocation3], %s145
      $region16: #{depth_decoder_forward.18} parent=11 // pred_fallthru
        _
      // Predicated region
      $region17: #{depth_decoder_forward.18} parent=11 // pred_check
        %p147 = pneg %p100
      $region18: #{depth_decoder_forward.18} parent=11 // pred_check_branch
        %149 = sbr.rel (%p147) target = $region20
      $region19: #{depth_decoder_forward.18} parent=11 // pred_region
        _
      $region20: #{depth_decoder_forward.18} parent=11 // pred_fallthru
        _
    $region12: #{depth_decoder_forward.18} parent=5 // pred_fallthru
      _
    %p150 = scmp.lt.s32.totalorder %s13, 4
    // Predicated region
    $region21: #{depth_decoder_forward.18} parent=5 // pred_check
      %p151 = pneg %p150
    $region22: #{depth_decoder_forward.18} parent=5 // pred_check_branch
      %153 = sbr.rel (%p151) target = $region24
    $region23: #{depth_decoder_forward.18} parent=5 // pred_region
      // Predicated region
      $region25: #{depth_decoder_forward.18} parent=23 // pred_check
        %p154 = pneg %p73
      $region26: #{depth_decoder_forward.18} parent=23 // pred_check_branch
        %156 = sbr.rel (%p154) target = $region28
      $region27: #{depth_decoder_forward.18} parent=23 // pred_region
        %s157 = smul.u32 4, %s20
        %p158 = scmp.lt.s32.totalorder %s21, 0
        %s159 = scalar_select %p158, %s21, 0
        %p160 = scmp.lt.s32.totalorder %s157, 15
        %s161 = scalar_select %p160, %s157, 15
        %s162 = smul.addr %s159, 16
        %s163 = sadd.s32 %s161, %s162
        %s164 = scalar_lea.vmem %s1, %s163
        %s165 = smul.u32 4, %s20
      $region28: #{depth_decoder_forward.18} parent=23 // pred_fallthru
        _
    $region24: #{depth_decoder_forward.18} parent=5 // pred_fallthru
      _
    %p166 = scmp.le.s32.totalorder 1, %s13
    %p167 = scmp.lt.s32.totalorder %s13, 5
    %p168 = pnand %p166, %p167
    %p169 = pneg %p168
    // Predicated region
    $region29: #{depth_decoder_forward.18} parent=5 // pred_check
      _
    $region30: #{depth_decoder_forward.18} parent=5 // pred_check_branch
      %171 = sbr.rel (%p168) target = $region32
    $region31: #{depth_decoder_forward.18} parent=5 // pred_region
      %s172 = ssub.s32 %s13, 1
      %p173 = scmp.lt.s32.totalorder %s23, 0
      %s174 = scalar_select %p173, %s23, 0
      %s175 = scalar_lea.vmem [#allocation3], %s174
      %p176 = pneg %p51
      %p177 = pneg %p48
      %s178 = smul.u32 4, %s22
      %p179 = scmp.lt.s32.totalorder %s23, 0
      %s180 = scalar_select %p179, %s23, 0
      %p181 = scmp.lt.s32.totalorder %s178, 15
      %s182 = scalar_select %p181, %s178, 15
      %s183 = smul.addr %s180, 16
      %s184 = sadd.s32 %s182, %s183
      %s185 = scalar_lea.vmem %s1, %s184
      %p186 = pneg %p79
      %p187 = pneg %p76
      %p188 = pneg %p100
      %p189 = pneg %p97
      %p190 = pneg %p126
      %p191 = pneg %p123
      %s192 = smul.u32 4, %s22
      %p193 = scmp.lt.s32.totalorder %s192, 15
      %s194 = scalar_select %p193, %s192, 15
      %s195 = scalar_lea.vmem %s3, %s194
      %p196 = scmp.lt.s32.totalorder %s23, 0
      %s197 = scalar_select %p196, %s23, 0
      %s198 = scalar_lea.vmem [#allocation3], %s197
      %s199 = smul.u32 4, %s22
      %p200 = scmp.lt.s32.totalorder %s23, 0
      %s201 = scalar_select %p200, %s23, 0
      %p202 = scmp.lt.s32.totalorder %s199, 15
      %s203 = scalar_select %p202, %s199, 15
      %s204 = smul.addr %s201, 16
      %s205 = sadd.s32 %s203, %s204
      %s206 = scalar_lea.vmem %s1, %s205
      %s207 = smul.u32 4, %s22
      %s208 = smul.u32 4, %s22
      %p209 = scmp.lt.s32.totalorder %s208, 15
      %s210 = scalar_select %p209, %s208, 15
      %s211 = scalar_lea.vmem %s3, %s210
      %s212 = smul.u32 4, %s22
      %p214 = scmp.eq.s32.totalorder %s23, 0
      // Predicated region
      $region33: #{depth_decoder_forward.18} parent=31 // pred_check
        %p215 = pneg %p214
      $region34: #{depth_decoder_forward.18} parent=31 // pred_check_branch
        %217 = sbr.rel (%p215) target = $region36
      $region35: #{depth_decoder_forward.18} parent=31 // pred_region
        %v218 = vlaneseq
        %vm219 = vcmp.ge.s32.totalorder %v218, 0
        %vm220 = vcmp.lt.s32.totalorder %v218, 512
        %vm221 = vmand %vm219, %vm220
        %222 = vst.msk [vmem:[#allocation2] sm:$0xf] %vm221, 0.0
      $region36: #{depth_decoder_forward.18} parent=31 // pred_fallthru
        _
      %v223 = vld [vmem:[#allocation2] sm:$0xf]
      %v224 = vld [vmem:[%s198] sm:$0x1]
      %v225 = vld [vmem:[%s206] sm:$0xf]
      %v228 = vunpack.c.l.s4 1966171168
      %v229 = vunpack.c.0.s8 %v228
      %v230 = vlaneseq
      %v231 = vshrl.u32 %v230, 7
      %v232 = vsub.s32 %v229, %v231
      %v233 = vrot.slane %v225, %v232
      %v234 = vcombine.high %v233, %v233
      %v236 = vunpack.c.l.s4 1966171168
      %v237 = vunpack.c.0.s8 %v236
      %v238 = vlaneseq
      %v239 = vshrl.u32 %v238, 7
      %v240 = vsub.s32 %v237, %v239
      %v241 = vrot.slane %v233, %v240
      %v243 = vunpack.c.l.s4 1966171168
      %v244 = vunpack.c.0.s8 %v243
      %v245 = vlaneseq
      %v246 = vshrl.u32 %v245, 7
      %v247 = vsub.s32 %v244, %v246
      %v248 = vrot.slane %v234, %v247
      %v249 = vcombine.high %v241, %v241
      %v250 = vcombine.high %v248, %v248
      %vm251 = vcmask 7168
      %v253 = vsel %vm251, %v224, 0
      %vm255 = vcmask 1040384
      %v256 = vsel 0, 4294967295, 65535
      %v257 = vsel %vm255, %v256, 0
      %v259 = vand.u32 %v241, %v257
      %v262 = vand.u32 %v248, %v257
      %v265 = vand.u32 %v249, %v257
      %v268 = vand.u32 %v250, %v257
      %270 = vmatprep.subr.bf16.mxu0 %v262
      %271 = vmatpush1.bf16.msra.mxu0 %v259
      %272 = vmatprep.subr.bf16.mxu0 0
      %273 = vmatpush1.bf16.msra.mxu0 0
      %274 = vmatprep.subr.bf16.mxu0 0
      %275 = vmatpush1.bf16.msra.mxu0 0
      %276 = vmatprep.subr.bf16.mxu0 0
      %277 = vmatpush1.bf16.msra.mxu0 0
      %278 = vmatprep.subr.bf16.mxu0 0
      %279 = vmatpush1.bf16.msra.mxu0 0
      %280 = vmatprep.subr.bf16.mxu0 0
      %281 = vmatpush1.bf16.msra.mxu0 0
      %282 = vmatprep.subr.bf16.mxu0 0
      %283 = vmatpush1.bf16.msra.mxu0 0
      %284 = vmatprep.subr.bf16.mxu0 0
      %285 = vmatpush1.bf16.msra.mxu0 0
      %286 = vmatprep.subr.bf16.mxu0 0
      %287 = vmatpush1.bf16.msra.mxu0 0
      %288 = vmatprep.subr.bf16.mxu0 0
      %289 = vmatpush1.bf16.msra.mxu0 0
      %290 = vmatprep.subr.bf16.mxu0 0
      %291 = vmatpush1.bf16.msra.mxu0 0
      %292 = vmatprep.subr.bf16.mxu0 0
      %293 = vmatpush1.bf16.msra.mxu0 0
      %294 = vmatprep.subr.bf16.mxu0 0
      %295 = vmatpush1.bf16.msra.mxu0 0
      %296 = vmatprep.subr.bf16.mxu0 0
      %297 = vmatpush1.bf16.msra.mxu0 0
      %298 = vmatprep.subr.bf16.mxu0 0
      %299 = vmatpush1.bf16.msra.mxu0 0
      %300 = vmatprep.subr.bf16.mxu0 0
      %301 = vmatpush1.bf16.msra.mxu0 0
      %302 = vmatprep.mubr.bf16.mxu0 0
      %303 = vmatmul.mubr.bf16.gmra.mrb[0].mxu0 %v253
      %v304 = vpop.f32.mrb[0].mxu0
      %v305 = vadd.f32 0.0, %v304
      %v306 = vpop.f32.mrb[0].mxu0
      %v307 = vadd.f32 0.0, %v306
      %v308 = vpop.f32.mrb[0].mxu0
      %v309 = vpop.f32.mrb[0].mxu0
      %310 = vdwg.mxu0
      %311 = vmatprep.subr.bf16.mxu0 %v268
      %312 = vmatpush1.bf16.msra.mxu0 %v265
      %313 = vmatprep.subr.bf16.mxu0 0
      %314 = vmatpush1.bf16.msra.mxu0 0
      %315 = vmatprep.subr.bf16.mxu0 0
      %316 = vmatpush1.bf16.msra.mxu0 0
      %317 = vmatprep.subr.bf16.mxu0 0
      %318 = vmatpush1.bf16.msra.mxu0 0
      %319 = vmatprep.subr.bf16.mxu0 0
      %320 = vmatpush1.bf16.msra.mxu0 0
      %321 = vmatprep.subr.bf16.mxu0 0
      %322 = vmatpush1.bf16.msra.mxu0 0
      %323 = vmatprep.subr.bf16.mxu0 0
      %324 = vmatpush1.bf16.msra.mxu0 0
      %325 = vmatprep.subr.bf16.mxu0 0
      %326 = vmatpush1.bf16.msra.mxu0 0
      %327 = vmatprep.subr.bf16.mxu0 0
      %328 = vmatpush1.bf16.msra.mxu0 0
      %329 = vmatprep.subr.bf16.mxu0 0
      %330 = vmatpush1.bf16.msra.mxu0 0
      %331 = vmatprep.subr.bf16.mxu0 0
      %332 = vmatpush1.bf16.msra.mxu0 0
      %333 = vmatprep.subr.bf16.mxu0 0
      %334 = vmatpush1.bf16.msra.mxu0 0
      %335 = vmatprep.subr.bf16.mxu0 0
      %336 = vmatpush1.bf16.msra.mxu0 0
      %337 = vmatprep.subr.bf16.mxu0 0
      %338 = vmatpush1.bf16.msra.mxu0 0
      %339 = vmatprep.subr.bf16.mxu0 0
      %340 = vmatpush1.bf16.msra.mxu0 0
      %341 = vmatprep.subr.bf16.mxu0 0
      %342 = vmatpush1.bf16.msra.mxu0 0
      %343 = vmatprep.mubr.bf16.mxu0 0
      %344 = vmatmul.mubr.bf16.gmra.mrb[0].mxu0 %v253
      %v345 = vpop.f32.mrb[0].mxu0
      %v346 = vadd.f32 0.0, %v345
      %v347 = vpop.f32.mrb[0].mxu0
      %v348 = vadd.f32 0.0, %v347
      %v349 = vpop.f32.mrb[0].mxu0
      %v350 = vpop.f32.mrb[0].mxu0
      %351 = vdwg.mxu0
      %v356 = vcombine.low %v305, %v307
      %v357 = vcombine.low %v346, %v348
      %v359 = vunpack.c.l.s4 1966171168
      %v360 = vunpack.c.0.s8 %v359
      %v361 = vlaneseq
      %v362 = vshrl.u32 %v361, 7
      %v363 = vsub.s32 %v360, %v362
      %v364 = vrot.slane %v356, %v363
      %v366 = vunpack.c.l.s4 1966171168
      %v367 = vunpack.c.0.s8 %v366
      %v368 = vlaneseq
      %v369 = vshrl.u32 %v368, 7
      %v370 = vsub.s32 %v367, %v369
      %v371 = vrot.slane %v357, %v370
      %v372 = vcombine.low %v364, %v371
      %v374 = vunpack.c.l.s4 1966171168
      %v375 = vunpack.c.0.s8 %v374
      %v376 = vlaneseq
      %v377 = vshrl.u32 %v376, 7
      %v378 = vsub.s32 %v375, %v377
      %v379 = vrot.slane %v372, %v378
      %v381 = vadd.f32 %v223, %v379
      %v382 = vlaneseq
      %vm383 = vcmp.ge.s32.totalorder %v382, 0
      %vm384 = vcmp.lt.s32.totalorder %v382, 512
      %vm385 = vmand %vm383, %vm384
      %386 = vst.msk [vmem:[#allocation2] sm:$0xf] %vm385, %v381
      // Predicated region
      $region37: #{depth_decoder_forward.18} parent=31 // pred_check
        %p387 = pneg %p214
      $region38: #{depth_decoder_forward.18} parent=31 // pred_check_branch
        %389 = sbr.rel (%p387) target = $region40
      $region39: #{depth_decoder_forward.18} parent=31 // pred_region
        %v390 = vld [vmem:[#allocation2] sm:$0xf]
        %v391 = vld [vmem:[#allocation4] sm:$0x1]
        %393 = vset.pattern.permute.xlu0 0
        %394 = vperm.xlu0 %393, %v391
        %v395 = vpop.permute.xlu0 %394
        %v397 = vlaneseq
        %v398 = vshrl.u32 %v397, 7
        %v399 = vsub.s32 0, %v398
        %v400 = vrot.slane %v395, %v399
        %v401 = vadd.f32 %v390, %v400
        %v402 = vtanh.pop %v401
        %v404 = vlaneseq
        %v405 = vshrl.u32 %v404, 7
        %v406 = vsub.s32 0, %v405
        %v407 = vrot.slane %v402, %v406
        %v408 = vlaneseq
        %v409 = vshrl.u32 %v408, 7
        %v410 = vsub.s32 1, %v409
        %v411 = vrot.slane %v402, %v410
        %v412 = vlaneseq
        %v413 = vshrl.u32 %v412, 7
        %v414 = vsub.s32 2, %v413
        %v415 = vrot.slane %v402, %v414
        %v416 = vlaneseq
        %v417 = vshrl.u32 %v416, 7
        %v418 = vsub.s32 3, %v417
        %v419 = vrot.slane %v402, %v418
        %v424 = vpack.c.bf16 %v407, %v407
        %v425 = vpack.c.bf16 %v411, %v411
        %v426 = vpack.c.bf16 %v415, %v415
        %v427 = vpack.c.bf16 %v419, %v419
        %v432 = vcombine.low %v424, %v425
        %v433 = vcombine.low %v426, %v427
        %v435 = vunpack.c.l.s4 1966171168
        %v436 = vunpack.c.0.s8 %v435
        %v437 = vlaneseq
        %v438 = vshrl.u32 %v437, 7
        %v439 = vsub.s32 %v436, %v438
        %v440 = vrot.slane %v432, %v439
        %v442 = vunpack.c.l.s4 1966171168
        %v443 = vunpack.c.0.s8 %v442
        %v444 = vlaneseq
        %v445 = vshrl.u32 %v444, 7
        %v446 = vsub.s32 %v443, %v445
        %v447 = vrot.slane %v433, %v446
        %v448 = vcombine.low %v440, %v447
        %v450 = vunpack.c.l.s4 1966171168
        %v451 = vunpack.c.0.s8 %v450
        %v452 = vlaneseq
        %v453 = vshrl.u32 %v452, 7
        %v454 = vsub.s32 %v451, %v453
        %v455 = vrot.slane %v448, %v454
        %vm457 = vcmask 1040384
        %vm458 = vsmask.f32 256
        %vm459 = vmand %vm457, %vm458
        %vm460 = vcmask 1041409
        %vm461 = vsmask.f32 1280
        %vm462 = vmand %vm460, %vm461
        %vm463 = vmor %vm462, %vm459
        %vm464 = vcmask 1042434
        %vm465 = vsmask.f32 2304
        %vm466 = vmand %vm464, %vm465
        %vm467 = vmor %vm466, %vm463
        %vm468 = vcmask 1043459
        %vm469 = vsmask.f32 3328
        %vm470 = vmand %vm468, %vm469
        %vm471 = vmor %vm470, %vm467
        %v472 = vld [vmem:[%s211] sm:$0xf]
        %v473 = vsel %vm471, %v455, %v472
        %474 = vst [vmem:[%s211] sm:$0xf] %v473
      $region40: #{depth_decoder_forward.18} parent=31 // pred_fallthru
        _
      %s475 = smul.u32 4, %s22
      %p476 = scmp.lt.s32.totalorder %s475, 15
      %s477 = scalar_select %p476, %s475, 15
      %s478 = scalar_lea.vmem %s3, %s477
      // Predicated region
      $region41: #{depth_decoder_forward.18} parent=31 // pred_check
        %p479 = pneg %p123
      $region42: #{depth_decoder_forward.18} parent=31 // pred_check_branch
        %481 = sbr.rel (%p479) target = $region44
      $region43: #{depth_decoder_forward.18} parent=31 // pred_region
        %s482 = smul.u32 4, %s22
      $region44: #{depth_decoder_forward.18} parent=31 // pred_fallthru
        _
    $region32: #{depth_decoder_forward.18} parent=5 // pred_fallthru
      _
    %p483 = scmp.le.s32.totalorder 2, %s13
    // Predicated region
    $region45: #{depth_decoder_forward.18} parent=5 // pred_check
      %p484 = pneg %p483
    $region46: #{depth_decoder_forward.18} parent=5 // pred_check_branch
      %486 = sbr.rel (%p484) target = $region48
    $region47: #{depth_decoder_forward.18} parent=5 // pred_region
      %s487 = ssub.s32 %s13, 2
      // Predicated region
      $region49: #{depth_decoder_forward.18} parent=47 // pred_check
        %p488 = pneg %p129
      $region50: #{depth_decoder_forward.18} parent=47 // pred_check_branch
        %490 = sbr.rel (%p488) target = $region52
      $region51: #{depth_decoder_forward.18} parent=47 // pred_region
        %s491 = smul.u32 4, %s24
        %p492 = scmp.lt.s32.totalorder %s491, 15
        %s493 = scalar_select %p492, %s491, 15
        %s494 = scalar_lea.vmem %s3, %s493
      $region52: #{depth_decoder_forward.18} parent=47 // pred_fallthru
        _
    $region48: #{depth_decoder_forward.18} parent=5 // pred_fallthru
      _
  $region6: #{depth_decoder_forward.18} parent=0 // loop_footer
    %s17 = sadd.s32 1, %s13
  $region7: #{depth_decoder_forward.18} parent=0 // loop_footer_branch
    %12 = sbr.rel target = $region3
  $region8: #{depth_decoder_forward.18} parent=0 // loop_exit
    _

// kernel: depth_decoder_forward.16
$region0: #{depth_decoder_forward.16}
  #allocation0 [shape = 'u32[]', space=smem, size = 0x4, offset = 0x4, fixed_abs, tag = 'smem constant byte address 0x4 - core index']
  #allocation1 [shape = 'u32[144,128]{1,0:T(1,128)}', space=vmem, size = 0x12000, scoped, tag = 'internal scratch']
  #allocation2 [shape = 'f32[4,512]{1,0:T(4,128)}', space=vmem, size = 0x2000, scoped, tag = 'scratch operand']
  %s0 = inlined_call_operand.vmem [shape: bf16[4,36], index: 0, kind: input, shape index: {}]
  %s1 = inlined_call_operand.vmem [shape: bf16[36,512], index: 1, kind: input, shape index: {}]
  %s2 = inlined_call_operand.vmem [shape: f32[4,1], index: 2, kind: input, shape index: {}]
  %s3 = inlined_call_operand.vmem [shape: bf16[4,512], index: 3, kind: input, shape index: {}]
  %s4 = inlined_call_operand.vmem [shape: bf16[4,512], index: 4, kind: output, shape index: {}]
  %s5 = sld [smem:[#allocation0]]
  $region34: #{depth_decoder_forward.16} parent=0
    _
  %s7 = ssub.s32 1, %s5
  %s8 = scalar_select 0, %s7, %s5
  // Predicated region
  $region2: #{depth_decoder_forward.16} parent=0 // pred_check
    _
  $region3: #{depth_decoder_forward.16} parent=0 // pred_check_branch
    %10 = sbr.rel (0) target = $region5
  $region4: #{depth_decoder_forward.16} parent=0 // pred_region
    _
  $region5: #{depth_decoder_forward.16} parent=0 // pred_fallthru
    _
  // Predicated region
  $region6: #{depth_decoder_forward.16} parent=0 // pred_check
    _
  $region7: #{depth_decoder_forward.16} parent=0 // pred_check_branch
    %12 = sbr.rel (0) target = $region9
  $region8: #{depth_decoder_forward.16} parent=0 // pred_region
    _
  $region9: #{depth_decoder_forward.16} parent=0 // pred_fallthru
    _
  // Predicated region
  $region10: #{depth_decoder_forward.16} parent=0 // pred_check
    _
  $region11: #{depth_decoder_forward.16} parent=0 // pred_check_branch
    %14 = sbr.rel (0) target = $region13
  $region12: #{depth_decoder_forward.16} parent=0 // pred_region
    _
  $region13: #{depth_decoder_forward.16} parent=0 // pred_fallthru
    _
  // Predicated region
  $region14: #{depth_decoder_forward.16} parent=0 // pred_check
    _
  $region15: #{depth_decoder_forward.16} parent=0 // pred_check_branch
    %16 = sbr.rel (0) target = $region17
  $region16: #{depth_decoder_forward.16} parent=0 // pred_region
    _
  $region17: #{depth_decoder_forward.16} parent=0 // pred_fallthru
    _
  %p18 = scmp.eq.s32.totalorder 0, 0
  // Predicated region
  $region18: #{depth_decoder_forward.16} parent=0 // pred_check
    %p19 = pneg %p18
  $region19: #{depth_decoder_forward.16} parent=0 // pred_check_branch
    %21 = sbr.rel (%p19) target = $region21
  $region20: #{depth_decoder_forward.16} parent=0 // pred_region
    %22 = vst [vmem:[#allocation2] sm:$0xff] 0.0
    %23 = vst [vmem:[#allocation2 + $0x8] sm:$0xff] 0.0
  $region21: #{depth_decoder_forward.16} parent=0 // pred_fallthru
    _
  %v24 = vld [vmem:[#allocation2] sm:$0xff]
  %v25 = vld [vmem:[#allocation2 + $0x8] sm:$0xff]
  %v26 = vld [vmem:[%s0] sm:$0x3]
  %v27 = vld [vmem:[%s1] sm:$0xff]
  %v28 = vld [vmem:[%s1 + $0x8] sm:$0xff]
  %v29 = vld [vmem:[%s1 + $0x10] sm:$0xff]
  %v30 = vld [vmem:[%s1 + $0x18] sm:$0xff]
  %v31 = vld [vmem:[%s1 + $0x20] sm:$0xff]
  %v32 = vld [vmem:[%s1 + $0x28] sm:$0xff]
  %v33 = vld [vmem:[%s1 + $0x30] sm:$0xff]
  %v34 = vld [vmem:[%s1 + $0x38] sm:$0xff]
  %v35 = vld [vmem:[%s1 + $0x40] sm:$0x33]
  %v36 = vld [vmem:[%s1 + $0x48] sm:$0x33]
  %v47 = vunpack.c.l.b16 %v27
  %v48 = vunpack.c.h.b16 %v27
  %v49 = vunpack.c.l.b16 %v28
  %v50 = vunpack.c.h.b16 %v28
  %v51 = vunpack.c.l.b16 %v29
  %v52 = vunpack.c.h.b16 %v29
  %v53 = vunpack.c.l.b16 %v30
  %v54 = vunpack.c.h.b16 %v30
  %v55 = vunpack.c.l.b16 %v31
  %v56 = vunpack.c.h.b16 %v31
  %v57 = vunpack.c.l.b16 %v32
  %v58 = vunpack.c.h.b16 %v32
  %v59 = vunpack.c.l.b16 %v33
  %v60 = vunpack.c.h.b16 %v33
  %v61 = vunpack.c.l.b16 %v34
  %v62 = vunpack.c.h.b16 %v34
  %v63 = vunpack.c.l.b16 %v35
  %v64 = vunpack.c.h.b16 %v35
  %v65 = vunpack.c.l.b16 %v36
  %v66 = vunpack.c.h.b16 %v36
  %v67 = vpack.c.b16 %v51, %v47
  %v68 = vpack.c.b16 %v52, %v48
  %v69 = vpack.c.b16 %v53, %v49
  %v70 = vpack.c.b16 %v54, %v50
  %v71 = vpack.c.b16 %v59, %v55
  %v72 = vpack.c.b16 %v60, %v56
  %v73 = vpack.c.b16 %v61, %v57
  %v74 = vpack.c.b16 %v62, %v58
  %v75 = vpack.c.b16 %v63, %v63
  %v76 = vpack.c.b16 %v64, %v64
  %v77 = vpack.c.b16 %v65, %v65
  %v78 = vpack.c.b16 %v66, %v66
  %vm87 = vcmask 293888
  %v89 = vsel %vm87, %v26, 0
  %vm91 = vcmask 1041408
  %v93 = vsel %vm91, %v75, 0
  %v96 = vsel %vm91, %v76, 0
  %v99 = vsel %vm91, %v77, 0
  %v102 = vsel %vm91, %v78, 0
  %104 = vmatprep.subr.bf16.mxu0 %v68
  %105 = vmatpush1.bf16.msra.mxu0 %v67
  %106 = vmatprep.subr.bf16.mxu0 %v72
  %107 = vmatpush1.bf16.msra.mxu0 %v71
  %108 = vmatprep.subr.bf16.mxu0 %v96
  %109 = vmatpush1.bf16.msra.mxu0 %v93
  %110 = vmatprep.subr.bf16.mxu0 0
  %111 = vmatpush1.bf16.msra.mxu0 0
  %112 = vmatprep.subr.bf16.mxu0 0
  %113 = vmatpush1.bf16.msra.mxu0 0
  %114 = vmatprep.subr.bf16.mxu0 0
  %115 = vmatpush1.bf16.msra.mxu0 0
  %116 = vmatprep.subr.bf16.mxu0 0
  %117 = vmatpush1.bf16.msra.mxu0 0
  %118 = vmatprep.subr.bf16.mxu0 0
  %119 = vmatpush1.bf16.msra.mxu0 0
  %120 = vmatprep.subr.bf16.mxu0 0
  %121 = vmatpush1.bf16.msra.mxu0 0
  %122 = vmatprep.subr.bf16.mxu0 0
  %123 = vmatpush1.bf16.msra.mxu0 0
  %124 = vmatprep.subr.bf16.mxu0 0
  %125 = vmatpush1.bf16.msra.mxu0 0
  %126 = vmatprep.subr.bf16.mxu0 0
  %127 = vmatpush1.bf16.msra.mxu0 0
  %128 = vmatprep.subr.bf16.mxu0 0
  %129 = vmatpush1.bf16.msra.mxu0 0
  %130 = vmatprep.subr.bf16.mxu0 0
  %131 = vmatpush1.bf16.msra.mxu0 0
  %132 = vmatprep.subr.bf16.mxu0 0
  %133 = vmatpush1.bf16.msra.mxu0 0
  %134 = vmatprep.subr.bf16.mxu0 0
  %135 = vmatpush1.bf16.msra.mxu0 0
  %136 = vmatprep.mubr.bf16.mxu0 0
  %137 = vmatmul.mubr.bf16.gmra.mrb[0].mxu0 %v89
  %v138 = vpop.f32.mrb[0].mxu0
  %v139 = vadd.f32 0.0, %v138
  %v140 = vpop.f32.mrb[0].mxu0
  %v141 = vadd.f32 0.0, %v140
  %v142 = vpop.f32.mrb[0].mxu0
  %v143 = vpop.f32.mrb[0].mxu0
  %144 = vdwg.mxu0
  %145 = vmatprep.subr.bf16.mxu0 %v70
  %146 = vmatpush1.bf16.msra.mxu0 %v69
  %147 = vmatprep.subr.bf16.mxu0 %v74
  %148 = vmatpush1.bf16.msra.mxu0 %v73
  %149 = vmatprep.subr.bf16.mxu0 %v102
  %150 = vmatpush1.bf16.msra.mxu0 %v99
  %151 = vmatprep.subr.bf16.mxu0 0
  %152 = vmatpush1.bf16.msra.mxu0 0
  %153 = vmatprep.subr.bf16.mxu0 0
  %154 = vmatpush1.bf16.msra.mxu0 0
  %155 = vmatprep.subr.bf16.mxu0 0
  %156 = vmatpush1.bf16.msra.mxu0 0
  %157 = vmatprep.subr.bf16.mxu0 0
  %158 = vmatpush1.bf16.msra.mxu0 0
  %159 = vmatprep.subr.bf16.mxu0 0
  %160 = vmatpush1.bf16.msra.mxu0 0
  %161 = vmatprep.subr.bf16.mxu0 0
  %162 = vmatpush1.bf16.msra.mxu0 0
  %163 = vmatprep.subr.bf16.mxu0 0
  %164 = vmatpush1.bf16.msra.mxu0 0
  %165 = vmatprep.subr.bf16.mxu0 0
  %166 = vmatpush1.bf16.msra.mxu0 0
  %167 = vmatprep.subr.bf16.mxu0 0
  %168 = vmatpush1.bf16.msra.mxu0 0
  %169 = vmatprep.subr.bf16.mxu0 0
  %170 = vmatpush1.bf16.msra.mxu0 0
  %171 = vmatprep.subr.bf16.mxu0 0
  %172 = vmatpush1.bf16.msra.mxu0 0
  %173 = vmatprep.subr.bf16.mxu0 0
  %174 = vmatpush1.bf16.msra.mxu0 0
  %175 = vmatprep.subr.bf16.mxu0 0
  %176 = vmatpush1.bf16.msra.mxu0 0
  %177 = vmatprep.mubr.bf16.mxu0 0
  %178 = vmatmul.mubr.bf16.gmra.mrb[0].mxu0 %v89
  %v179 = vpop.f32.mrb[0].mxu0
  %v180 = vadd.f32 0.0, %v179
  %v181 = vpop.f32.mrb[0].mxu0
  %v182 = vadd.f32 0.0, %v181
  %v183 = vpop.f32.mrb[0].mxu0
  %v184 = vpop.f32.mrb[0].mxu0
  %185 = vdwg.mxu0
  %v190 = vcombine.low %v139, %v141
  %v191 = vcombine.low %v180, %v182
  %v194 = vadd.f32 %v24, %v190
  %v195 = vadd.f32 %v25, %v191
  %196 = vst [vmem:[#allocation2] sm:$0xff] %v194
  %197 = vst [vmem:[#allocation2 + $0x8] sm:$0xff] %v195
  // Predicated region
  $region22: #{depth_decoder_forward.16} parent=0 // pred_check
    %p198 = pneg %p18
  $region23: #{depth_decoder_forward.16} parent=0 // pred_check_branch
    %200 = sbr.rel (%p198) target = $region25
  $region24: #{depth_decoder_forward.16} parent=0 // pred_region
    %v201 = vld [vmem:[#allocation2] sm:$0xff]
    %v202 = vld [vmem:[#allocation2 + $0x8] sm:$0xff]
    %v203 = vld [vmem:[%s2] sm:$0xf]
    %205 = vset.pattern.permute.xlu0 0
    %206 = vperm.xlu0 %205, %v203
    %v207 = vpop.permute.xlu0 %206
    %v209 = vunpack.c.l.s4 839922192
    %v210 = vunpack.c.0.s8 %v209
    %v211 = vlaneseq
    %v212 = vshrl.u32 %v211, 7
    %v213 = vsub.s32 %v210, %v212
    %v214 = vrot.slane %v207, %v213
    %v216 = vadd.f32 %v201, %v214
    %v217 = vadd.f32 %v202, %v214
    %v218 = vld [vmem:[%s3] sm:$0xff]
    %v219 = vunpack.c.l.bf16 %v218
    %v220 = vunpack.c.h.bf16 %v218
    %v221 = vadd.f32 %v216, %v219
    %v222 = vadd.f32 %v217, %v220
    %v223 = vmax.f32 %v221, 0.0
    %v224 = vmax.f32 %v222, 0.0
    %v227 = vcombine.high %v223, %v223
    %v228 = vcombine.high %v224, %v224
    %v231 = vpack.c.bf16 %v223, %v223
    %v232 = vpack.c.bf16 %v227, %v227
    %v233 = vpack.c.bf16 %v224, %v224
    %v234 = vpack.c.bf16 %v228, %v228
    %v239 = vcombine.low %v231, %v232
    %v240 = vcombine.low %v233, %v234
    %v242 = vunpack.c.l.s4 1983009808
    %v243 = vunpack.c.0.s8 %v242
    %v244 = vlaneseq
    %v245 = vshrl.u32 %v244, 7
    %v246 = vsub.s32 %v243, %v245
    %v247 = vrot.slane %v239, %v246
    %v249 = vunpack.c.l.s4 1983009808
    %v250 = vunpack.c.0.s8 %v249
    %v251 = vlaneseq
    %v252 = vshrl.u32 %v251, 7
    %v253 = vsub.s32 %v250, %v252
    %v254 = vrot.slane %v240, %v253
    %v255 = vcombine.low %v247, %v254
    %257 = vst [vmem:[%s4] sm:$0xff] %v255
  $region25: #{depth_decoder_forward.16} parent=0 // pred_fallthru
    _
  // Predicated region
  $region26: #{depth_decoder_forward.16} parent=0 // pred_check
    _
  $region27: #{depth_decoder_forward.16} parent=0 // pred_check_branch
    %259 = sbr.rel (0) target = $region29
  $region28: #{depth_decoder_forward.16} parent=0 // pred_region
    _
  $region29: #{depth_decoder_forward.16} parent=0 // pred_fallthru
    _
  // Predicated region
  $region30: #{depth_decoder_forward.16} parent=0 // pred_check
    _
  $region31: #{depth_decoder_forward.16} parent=0 // pred_check_branch
    %261 = sbr.rel (0) target = $region33
  $region32: #{depth_decoder_forward.16} parent=0 // pred_region
    _
  $region33: #{depth_decoder_forward.16} parent=0 // pred_fallthru
    _

// kernel: depth_decoder_forward.20
$region0: #{depth_decoder_forward.20}
  #allocation0 [shape = 'u32[]', space=smem, size = 0x4, offset = 0x4, fixed_abs, tag = 'smem constant byte address 0x4 - core index']
  #allocation1 [shape = 'u32[144,128]{1,0:T(1,128)}', space=vmem, size = 0x12000, scoped, tag = 'internal scratch']
  #allocation2 [shape = 'f32[1,512]{1,0:T(1,128)}', space=vmem, size = 0x800, scoped, tag = 'scratch operand']
  #allocation3 [shape = 'f32[1,1]{1,0:T(1,128)S(1)}', space=vmem, size = 0x200, scoped, tag = 'scoped memory for depth_decoder_forward.20']
  %s0 = inlined_call_operand.vmem [shape: bf16[1,4], index: 0, kind: input, shape index: {}]
  %s1 = inlined_call_operand.vmem [shape: bf16[4,512], index: 1, kind: input, shape index: {}]
  %s2 = inlined_call_operand.<no memory space> [shape: f32[1,1], index: 2, kind: input, shape index: {}]
  %s3 = inlined_call_operand.vmem [shape: bf16[1,512], index: 3, kind: output, shape index: {}]
  %s4 = sld [smem:[#allocation0]]
  $region30: #{depth_decoder_forward.20} parent=0
    _
  %s6 = ssub.s32 1, %s4
  %s7 = scalar_select 0, %s6, %s4
  %v8 = vstv %s2
  %9 = vst [vmem:[#allocation3] sm:$0x1] %v8
  // Predicated region
  $region2: #{depth_decoder_forward.20} parent=0 // pred_check
    _
  $region3: #{depth_decoder_forward.20} parent=0 // pred_check_branch
    %11 = sbr.rel (0) target = $region5
  $region4: #{depth_decoder_forward.20} parent=0 // pred_region
    _
  $region5: #{depth_decoder_forward.20} parent=0 // pred_fallthru
    _
  // Predicated region
  $region6: #{depth_decoder_forward.20} parent=0 // pred_check
    _
  $region7: #{depth_decoder_forward.20} parent=0 // pred_check_branch
    %13 = sbr.rel (0) target = $region9
  $region8: #{depth_decoder_forward.20} parent=0 // pred_region
    _
  $region9: #{depth_decoder_forward.20} parent=0 // pred_fallthru
    _
  // Predicated region
  $region10: #{depth_decoder_forward.20} parent=0 // pred_check
    _
  $region11: #{depth_decoder_forward.20} parent=0 // pred_check_branch
    %15 = sbr.rel (0) target = $region13
  $region12: #{depth_decoder_forward.20} parent=0 // pred_region
    _
  $region13: #{depth_decoder_forward.20} parent=0 // pred_fallthru
    _
  %p17 = scmp.eq.s32.totalorder 0, 0
  // Predicated region
  $region14: #{depth_decoder_forward.20} parent=0 // pred_check
    %p18 = pneg %p17
  $region15: #{depth_decoder_forward.20} parent=0 // pred_check_branch
    %20 = sbr.rel (%p18) target = $region17
  $region16: #{depth_decoder_forward.20} parent=0 // pred_region
    %v21 = vlaneseq
    %vm22 = vcmp.ge.s32.totalorder %v21, 0
    %vm23 = vcmp.lt.s32.totalorder %v21, 512
    %vm24 = vmand %vm22, %vm23
    %25 = vst.msk [vmem:[#allocation2] sm:$0xf] %vm24, 0.0
  $region17: #{depth_decoder_forward.20} parent=0 // pred_fallthru
    _
  %v26 = vld [vmem:[#allocation2] sm:$0xf]
  %v27 = vld [vmem:[%s0] sm:$0x1]
  %v28 = vld [vmem:[%s1] sm:$0xff]
  %v30 = vcombine.high %v28, %v28
  %v32 = vunpack.c.l.s4 1983009808
  %v33 = vunpack.c.0.s8 %v32
  %v34 = vlaneseq
  %v35 = vshrl.u32 %v34, 7
  %v36 = vsub.s32 %v33, %v35
  %v37 = vrot.slane %v28, %v36
  %v39 = vunpack.c.l.s4 1983009808
  %v40 = vunpack.c.0.s8 %v39
  %v41 = vlaneseq
  %v42 = vshrl.u32 %v41, 7
  %v43 = vsub.s32 %v40, %v42
  %v44 = vrot.slane %v30, %v43
  %v45 = vcombine.high %v37, %v37
  %v46 = vcombine.high %v44, %v44
  %vm47 = vcmask 31744
  %v49 = vsel %vm47, %v27, 0
  %vm51 = vcmask 1041408
  %v53 = vsel %vm51, %v37, 0
  %v56 = vsel %vm51, %v45, 0
  %v59 = vsel %vm51, %v44, 0
  %v62 = vsel %vm51, %v46, 0
  %64 = vmatprep.subr.bf16.mxu0 %v56
  %65 = vmatpush1.bf16.msra.mxu0 %v53
  %66 = vmatprep.subr.bf16.mxu0 0
  %67 = vmatpush1.bf16.msra.mxu0 0
  %68 = vmatprep.subr.bf16.mxu0 0
  %69 = vmatpush1.bf16.msra.mxu0 0
  %70 = vmatprep.subr.bf16.mxu0 0
  %71 = vmatpush1.bf16.msra.mxu0 0
  %72 = vmatprep.subr.bf16.mxu0 0
  %73 = vmatpush1.bf16.msra.mxu0 0
  %74 = vmatprep.subr.bf16.mxu0 0
  %75 = vmatpush1.bf16.msra.mxu0 0
  %76 = vmatprep.subr.bf16.mxu0 0
  %77 = vmatpush1.bf16.msra.mxu0 0
  %78 = vmatprep.subr.bf16.mxu0 0
  %79 = vmatpush1.bf16.msra.mxu0 0
  %80 = vmatprep.subr.bf16.mxu0 0
  %81 = vmatpush1.bf16.msra.mxu0 0
  %82 = vmatprep.subr.bf16.mxu0 0
  %83 = vmatpush1.bf16.msra.mxu0 0
  %84 = vmatprep.subr.bf16.mxu0 0
  %85 = vmatpush1.bf16.msra.mxu0 0
  %86 = vmatprep.subr.bf16.mxu0 0
  %87 = vmatpush1.bf16.msra.mxu0 0
  %88 = vmatprep.subr.bf16.mxu0 0
  %89 = vmatpush1.bf16.msra.mxu0 0
  %90 = vmatprep.subr.bf16.mxu0 0
  %91 = vmatpush1.bf16.msra.mxu0 0
  %92 = vmatprep.subr.bf16.mxu0 0
  %93 = vmatpush1.bf16.msra.mxu0 0
  %94 = vmatprep.subr.bf16.mxu0 0
  %95 = vmatpush1.bf16.msra.mxu0 0
  %96 = vmatprep.mubr.bf16.mxu0 0
  %97 = vmatmul.mubr.bf16.gmra.mrb[0].mxu0 %v49
  %v98 = vpop.f32.mrb[0].mxu0
  %v99 = vadd.f32 0.0, %v98
  %v100 = vpop.f32.mrb[0].mxu0
  %v101 = vadd.f32 0.0, %v100
  %v102 = vpop.f32.mrb[0].mxu0
  %v103 = vpop.f32.mrb[0].mxu0
  %104 = vdwg.mxu0
  %105 = vmatprep.subr.bf16.mxu0 %v62
  %106 = vmatpush1.bf16.msra.mxu0 %v59
  %107 = vmatprep.subr.bf16.mxu0 0
  %108 = vmatpush1.bf16.msra.mxu0 0
  %109 = vmatprep.subr.bf16.mxu0 0
  %110 = vmatpush1.bf16.msra.mxu0 0
  %111 = vmatprep.subr.bf16.mxu0 0
  %112 = vmatpush1.bf16.msra.mxu0 0
  %113 = vmatprep.subr.bf16.mxu0 0
  %114 = vmatpush1.bf16.msra.mxu0 0
  %115 = vmatprep.subr.bf16.mxu0 0
  %116 = vmatpush1.bf16.msra.mxu0 0
  %117 = vmatprep.subr.bf16.mxu0 0
  %118 = vmatpush1.bf16.msra.mxu0 0
  %119 = vmatprep.subr.bf16.mxu0 0
  %120 = vmatpush1.bf16.msra.mxu0 0
  %121 = vmatprep.subr.bf16.mxu0 0
  %122 = vmatpush1.bf16.msra.mxu0 0
  %123 = vmatprep.subr.bf16.mxu0 0
  %124 = vmatpush1.bf16.msra.mxu0 0
  %125 = vmatprep.subr.bf16.mxu0 0
  %126 = vmatpush1.bf16.msra.mxu0 0
  %127 = vmatprep.subr.bf16.mxu0 0
  %128 = vmatpush1.bf16.msra.mxu0 0
  %129 = vmatprep.subr.bf16.mxu0 0
  %130 = vmatpush1.bf16.msra.mxu0 0
  %131 = vmatprep.subr.bf16.mxu0 0
  %132 = vmatpush1.bf16.msra.mxu0 0
  %133 = vmatprep.subr.bf16.mxu0 0
  %134 = vmatpush1.bf16.msra.mxu0 0
  %135 = vmatprep.subr.bf16.mxu0 0
  %136 = vmatpush1.bf16.msra.mxu0 0
  %137 = vmatprep.mubr.bf16.mxu0 0
  %138 = vmatmul.mubr.bf16.gmra.mrb[0].mxu0 %v49
  %v139 = vpop.f32.mrb[0].mxu0
  %v140 = vadd.f32 0.0, %v139
  %v141 = vpop.f32.mrb[0].mxu0
  %v142 = vadd.f32 0.0, %v141
  %v143 = vpop.f32.mrb[0].mxu0
  %v144 = vpop.f32.mrb[0].mxu0
  %145 = vdwg.mxu0
  %v150 = vcombine.low %v99, %v101
  %v151 = vcombine.low %v140, %v142
  %v153 = vunpack.c.l.s4 1966171168
  %v154 = vunpack.c.0.s8 %v153
  %v155 = vlaneseq
  %v156 = vshrl.u32 %v155, 7
  %v157 = vsub.s32 %v154, %v156
  %v158 = vrot.slane %v150, %v157
  %v160 = vunpack.c.l.s4 1966171168
  %v161 = vunpack.c.0.s8 %v160
  %v162 = vlaneseq
  %v163 = vshrl.u32 %v162, 7
  %v164 = vsub.s32 %v161, %v163
  %v165 = vrot.slane %v151, %v164
  %v166 = vcombine.low %v158, %v165
  %v168 = vunpack.c.l.s4 1966171168
  %v169 = vunpack.c.0.s8 %v168
  %v170 = vlaneseq
  %v171 = vshrl.u32 %v170, 7
  %v172 = vsub.s32 %v169, %v171
  %v173 = vrot.slane %v166, %v172
  %v175 = vadd.f32 %v26, %v173
  %v176 = vlaneseq
  %vm177 = vcmp.ge.s32.totalorder %v176, 0
  %vm178 = vcmp.lt.s32.totalorder %v176, 512
  %vm179 = vmand %vm177, %vm178
  %180 = vst.msk [vmem:[#allocation2] sm:$0xf] %vm179, %v175
  // Predicated region
  $region18: #{depth_decoder_forward.20} parent=0 // pred_check
    %p181 = pneg %p17
  $region19: #{depth_decoder_forward.20} parent=0 // pred_check_branch
    %183 = sbr.rel (%p181) target = $region21
  $region20: #{depth_decoder_forward.20} parent=0 // pred_region
    %v184 = vld [vmem:[#allocation2] sm:$0xf]
    %v185 = vld [vmem:[#allocation3] sm:$0x1]
    %187 = vset.pattern.permute.xlu0 0
    %188 = vperm.xlu0 %187, %v185
    %v189 = vpop.permute.xlu0 %188
    %v191 = vlaneseq
    %v192 = vshrl.u32 %v191, 7
    %v193 = vsub.s32 0, %v192
    %v194 = vrot.slane %v189, %v193
    %v195 = vadd.f32 %v184, %v194
    %v196 = vtanh.pop %v195
    %v198 = vlaneseq
    %v199 = vshrl.u32 %v198, 7
    %v200 = vsub.s32 0, %v199
    %v201 = vrot.slane %v196, %v200
    %v202 = vlaneseq
    %v203 = vshrl.u32 %v202, 7
    %v204 = vsub.s32 1, %v203
    %v205 = vrot.slane %v196, %v204
    %v206 = vlaneseq
    %v207 = vshrl.u32 %v206, 7
    %v208 = vsub.s32 2, %v207
    %v209 = vrot.slane %v196, %v208
    %v210 = vlaneseq
    %v211 = vshrl.u32 %v210, 7
    %v212 = vsub.s32 3, %v211
    %v213 = vrot.slane %v196, %v212
    %v218 = vpack.c.bf16 %v201, %v201
    %v219 = vpack.c.bf16 %v205, %v205
    %v220 = vpack.c.bf16 %v209, %v209
    %v221 = vpack.c.bf16 %v213, %v213
    %v226 = vcombine.low %v218, %v219
    %v227 = vcombine.low %v220, %v221
    %v229 = vunpack.c.l.s4 1966171168
    %v230 = vunpack.c.0.s8 %v229
    %v231 = vlaneseq
    %v232 = vshrl.u32 %v231, 7
    %v233 = vsub.s32 %v230, %v232
    %v234 = vrot.slane %v226, %v233
    %v236 = vunpack.c.l.s4 1966171168
    %v237 = vunpack.c.0.s8 %v236
    %v238 = vlaneseq
    %v239 = vshrl.u32 %v238, 7
    %v240 = vsub.s32 %v237, %v239
    %v241 = vrot.slane %v227, %v240
    %v242 = vcombine.low %v234, %v241
    %v244 = vunpack.c.l.s4 1966171168
    %v245 = vunpack.c.0.s8 %v244
    %v246 = vlaneseq
    %v247 = vshrl.u32 %v246, 7
    %v248 = vsub.s32 %v245, %v247
    %v249 = vrot.slane %v242, %v248
    %vm251 = vcmask 1040384
    %vm252 = vsmask.f32 256
    %vm253 = vmand %vm251, %vm252
    %vm254 = vcmask 1041409
    %vm255 = vsmask.f32 1280
    %vm256 = vmand %vm254, %vm255
    %vm257 = vmor %vm256, %vm253
    %vm258 = vcmask 1042434
    %vm259 = vsmask.f32 2304
    %vm260 = vmand %vm258, %vm259
    %vm261 = vmor %vm260, %vm257
    %vm262 = vcmask 1043459
    %vm263 = vsmask.f32 3328
    %vm264 = vmand %vm262, %vm263
    %vm265 = vmor %vm264, %vm261
    %v266 = vld [vmem:[%s3] sm:$0xf]
    %v267 = vsel %vm265, %v249, %v266
    %268 = vst [vmem:[%s3] sm:$0xf] %v267
  $region21: #{depth_decoder_forward.20} parent=0 // pred_fallthru
    _
  // Predicated region
  $region22: #{depth_decoder_forward.20} parent=0 // pred_check
    _
  $region23: #{depth_decoder_forward.20} parent=0 // pred_check_branch
    %270 = sbr.rel (0) target = $region25
  $region24: #{depth_decoder_forward.20} parent=0 // pred_region
    _
  $region25: #{depth_decoder_forward.20} parent=0 // pred_fallthru
    _
  // Predicated region
  $region26: #{depth_decoder_forward.20} parent=0 // pred_check
    _
  $region27: #{depth_decoder_forward.20} parent=0 // pred_check_branch
    %272 = sbr.rel (0) target = $region29
  $region28: #{depth_decoder_forward.20} parent=0 // pred_region
    _
  $region29: #{depth_decoder_forward.20} parent=0 // pred_fallthru
    _

// kernel: depth_decoder_forward.21
$region0: #{depth_decoder_forward.21}
  #allocation0 [shape = 'u32[]', space=smem, size = 0x4, offset = 0x4, fixed_abs, tag = 'smem constant byte address 0x4 - core index']
  #allocation1 [shape = 'u32[144,128]{1,0:T(1,128)}', space=vmem, size = 0x12000, scoped, tag = 'internal scratch']
  #allocation2 [shape = 'f32[2,256]{1,0:T(2,128)}', space=vmem, size = 0x800, scoped, tag = 'scratch operand']
  %s0 = inlined_call_operand.vmem [shape: bf16[2,256], index: 0, kind: input, shape index: {}]
  %s1 = inlined_call_operand.vmem [shape: bf16[256,256], index: 1, kind: input, shape index: {}]
  %s2 = inlined_call_operand.vmem [shape: f32[2,256], index: 2, kind: output, shape index: {}]
  %s3 = sld [smem:[#allocation0]]
  $region26: #{depth_decoder_forward.21} parent=0
    _
  %s5 = ssub.s32 1, %s3
  %s6 = scalar_select 0, %s5, %s3
  // Predicated region
  $region2: #{depth_decoder_forward.21} parent=0 // pred_check
    _
  $region3: #{depth_decoder_forward.21} parent=0 // pred_check_branch
    %8 = sbr.rel (0) target = $region5
  $region4: #{depth_decoder_forward.21} parent=0 // pred_region
    _
  $region5: #{depth_decoder_forward.21} parent=0 // pred_fallthru
    _
  // Predicated region
  $region6: #{depth_decoder_forward.21} parent=0 // pred_check
    _
  $region7: #{depth_decoder_forward.21} parent=0 // pred_check_branch
    %10 = sbr.rel (0) target = $region9
  $region8: #{depth_decoder_forward.21} parent=0 // pred_region
    _
  $region9: #{depth_decoder_forward.21} parent=0 // pred_fallthru
    _
  %p11 = scmp.eq.s32.totalorder 0, 0
  // Predicated region
  $region10: #{depth_decoder_forward.21} parent=0 // pred_check
    %p12 = pneg %p11
  $region11: #{depth_decoder_forward.21} parent=0 // pred_check_branch
    %14 = sbr.rel (%p12) target = $region13
  $region12: #{depth_decoder_forward.21} parent=0 // pred_region
    %15 = vst [vmem:[#allocation2] sm:$0xf] 0.0
  $region13: #{depth_decoder_forward.21} parent=0 // pred_fallthru
    _
  %v16 = vld [vmem:[#allocation2] sm:$0xf]
  %v17 = vld [vmem:[%s0] sm:$0x3]
  %v18 = vld [vmem:[%s1] sm:$0xff]
  %v19 = vld [vmem:[%s1 + $0x8] sm:$0xff]
  %v20 = vld [vmem:[%s1 + $0x10] sm:$0xff]
  %v21 = vld [vmem:[%s1 + $0x18] sm:$0xff]
  %v22 = vld [vmem:[%s1 + $0x20] sm:$0xff]
  %v23 = vld [vmem:[%s1 + $0x28] sm:$0xff]
  %v24 = vld [vmem:[%s1 + $0x30] sm:$0xff]
  %v25 = vld [vmem:[%s1 + $0x38] sm:$0xff]
  %v26 = vld [vmem:[%s1 + $0x40] sm:$0xff]
  %v27 = vld [vmem:[%s1 + $0x48] sm:$0xff]
  %v28 = vld [vmem:[%s1 + $0x50] sm:$0xff]
  %v29 = vld [vmem:[%s1 + $0x58] sm:$0xff]
  %v30 = vld [vmem:[%s1 + $0x60] sm:$0xff]
  %v31 = vld [vmem:[%s1 + $0x68] sm:$0xff]
  %v32 = vld [vmem:[%s1 + $0x70] sm:$0xff]
  %v33 = vld [vmem:[%s1 + $0x78] sm:$0xff]
  %v34 = vld [vmem:[%s1 + $0x80] sm:$0xff]
  %v35 = vld [vmem:[%s1 + $0x88] sm:$0xff]
  %v36 = vld [vmem:[%s1 + $0x90] sm:$0xff]
  %v37 = vld [vmem:[%s1 + $0x98] sm:$0xff]
  %v38 = vld [vmem:[%s1 + $0xa0] sm:$0xff]
  %v39 = vld [vmem:[%s1 + $0xa8] sm:$0xff]
  %v40 = vld [vmem:[%s1 + $0xb0] sm:$0xff]
  %v41 = vld [vmem:[%s1 + $0xb8] sm:$0xff]
  %v42 = vld [vmem:[%s1 + $0xc0] sm:$0xff]
  %v43 = vld [vmem:[%s1 + $0xc8] sm:$0xff]
  %v44 = vld [vmem:[%s1 + $0xd0] sm:$0xff]
  %v45 = vld [vmem:[%s1 + $0xd8] sm:$0xff]
  %v46 = vld [vmem:[%s1 + $0xe0] sm:$0xff]
  %v47 = vld [vmem:[%s1 + $0xe8] sm:$0xff]
  %v48 = vld [vmem:[%s1 + $0xf0] sm:$0xff]
  %v49 = vld [vmem:[%s1 + $0xf8] sm:$0xff]
  %v52 = vunpack.c.l.s4 1966171168
  %v53 = vunpack.c.0.s8 %v52
  %v54 = vlaneseq
  %v55 = vshrl.u32 %v54, 7
  %v56 = vsub.s32 %v53, %v55
  %v57 = vrot.slane %v17, %v56
  %v58 = vcombine.high %v57, %v57
  %v60 = vunpack.c.l.s4 1966171168
  %v61 = vunpack.c.0.s8 %v60
  %v62 = vlaneseq
  %v63 = vshrl.u32 %v62, 7
  %v64 = vsub.s32 %v61, %v63
  %v65 = vrot.slane %v57, %v64
  %v67 = vunpack.c.l.s4 1966171168
  %v68 = vunpack.c.0.s8 %v67
  %v69 = vlaneseq
  %v70 = vshrl.u32 %v69, 7
  %v71 = vsub.s32 %v68, %v70
  %v72 = vrot.slane %v58, %v71
  %v107 = vunpack.c.l.b16 %v18
  %v108 = vunpack.c.h.b16 %v18
  %v109 = vunpack.c.l.b16 %v19
  %v110 = vunpack.c.h.b16 %v19
  %v111 = vunpack.c.l.b16 %v20
  %v112 = vunpack.c.h.b16 %v20
  %v113 = vunpack.c.l.b16 %v21
  %v114 = vunpack.c.h.b16 %v21
  %v115 = vunpack.c.l.b16 %v22
  %v116 = vunpack.c.h.b16 %v22
  %v117 = vunpack.c.l.b16 %v23
  %v118 = vunpack.c.h.b16 %v23
  %v119 = vunpack.c.l.b16 %v24
  %v120 = vunpack.c.h.b16 %v24
  %v121 = vunpack.c.l.b16 %v25
  %v122 = vunpack.c.h.b16 %v25
  %v123 = vunpack.c.l.b16 %v26
  %v124 = vunpack.c.h.b16 %v26
  %v125 = vunpack.c.l.b16 %v27
  %v126 = vunpack.c.h.b16 %v27
  %v127 = vunpack.c.l.b16 %v28
  %v128 = vunpack.c.h.b16 %v28
  %v129 = vunpack.c.l.b16 %v29
  %v130 = vunpack.c.h.b16 %v29
  %v131 = vunpack.c.l.b16 %v30
  %v132 = vunpack.c.h.b16 %v30
  %v133 = vunpack.c.l.b16 %v31
  %v134 = vunpack.c.h.b16 %v31
  %v135 = vunpack.c.l.b16 %v32
  %v136 = vunpack.c.h.b16 %v32
  %v137 = vunpack.c.l.b16 %v33
  %v138 = vunpack.c.h.b16 %v33
  %v139 = vunpack.c.l.b16 %v34
  %v140 = vunpack.c.h.b16 %v34
  %v141 = vunpack.c.l.b16 %v35
  %v142 = vunpack.c.h.b16 %v35
  %v143 = vunpack.c.l.b16 %v36
  %v144 = vunpack.c.h.b16 %v36
  %v145 = vunpack.c.l.b16 %v37
  %v146 = vunpack.c.h.b16 %v37
  %v147 = vunpack.c.l.b16 %v38
  %v148 = vunpack.c.h.b16 %v38
  %v149 = vunpack.c.l.b16 %v39
  %v150 = vunpack.c.h.b16 %v39
  %v151 = vunpack.c.l.b16 %v40
  %v152 = vunpack.c.h.b16 %v40
  %v153 = vunpack.c.l.b16 %v41
  %v154 = vunpack.c.h.b16 %v41
  %v155 = vunpack.c.l.b16 %v42
  %v156 = vunpack.c.h.b16 %v42
  %v157 = vunpack.c.l.b16 %v43
  %v158 = vunpack.c.h.b16 %v43
  %v159 = vunpack.c.l.b16 %v44
  %v160 = vunpack.c.h.b16 %v44
  %v161 = vunpack.c.l.b16 %v45
  %v162 = vunpack.c.h.b16 %v45
  %v163 = vunpack.c.l.b16 %v46
  %v164 = vunpack.c.h.b16 %v46
  %v165 = vunpack.c.l.b16 %v47
  %v166 = vunpack.c.h.b16 %v47
  %v167 = vunpack.c.l.b16 %v48
  %v168 = vunpack.c.h.b16 %v48
  %v169 = vunpack.c.l.b16 %v49
  %v170 = vunpack.c.h.b16 %v49
  %v171 = vpack.c.b16 %v109, %v107
  %v172 = vpack.c.b16 %v110, %v108
  %v173 = vpack.c.b16 %v113, %v111
  %v174 = vpack.c.b16 %v114, %v112
  %v175 = vpack.c.b16 %v117, %v115
  %v176 = vpack.c.b16 %v118, %v116
  %v177 = vpack.c.b16 %v121, %v119
  %v178 = vpack.c.b16 %v122, %v120
  %v179 = vpack.c.b16 %v125, %v123
  %v180 = vpack.c.b16 %v126, %v124
  %v181 = vpack.c.b16 %v129, %v127
  %v182 = vpack.c.b16 %v130, %v128
  %v183 = vpack.c.b16 %v133, %v131
  %v184 = vpack.c.b16 %v134, %v132
  %v185 = vpack.c.b16 %v137, %v135
  %v186 = vpack.c.b16 %v138, %v136
  %v187 = vpack.c.b16 %v141, %v139
  %v188 = vpack.c.b16 %v142, %v140
  %v189 = vpack.c.b16 %v145, %v143
  %v190 = vpack.c.b16 %v146, %v144
  %v191 = vpack.c.b16 %v149, %v147
  %v192 = vpack.c.b16 %v150, %v148
  %v193 = vpack.c.b16 %v153, %v151
  %v194 = vpack.c.b16 %v154, %v152
  %v195 = vpack.c.b16 %v157, %v155
  %v196 = vpack.c.b16 %v158, %v156
  %v197 = vpack.c.b16 %v161, %v159
  %v198 = vpack.c.b16 %v162, %v160
  %v199 = vpack.c.b16 %v165, %v163
  %v200 = vpack.c.b16 %v166, %v164
  %v201 = vpack.c.b16 %v169, %v167
  %v202 = vpack.c.b16 %v170, %v168
  %235 = vmatprep.subr.bf16.mxu0 %v172
  %236 = vmatpush1.bf16.msra.mxu0 %v171
  %237 = vmatprep.subr.bf16.mxu0 %v174
  %238 = vmatpush1.bf16.msra.mxu0 %v173
  %239 = vmatprep.subr.bf16.mxu0 %v176
  %240 = vmatpush1.bf16.msra.mxu0 %v175
  %241 = vmatprep.subr.bf16.mxu0 %v178
  %242 = vmatpush1.bf16.msra.mxu0 %v177
  %243 = vmatprep.subr.bf16.mxu0 %v180
  %244 = vmatpush1.bf16.msra.mxu0 %v179
  %245 = vmatprep.subr.bf16.mxu0 %v182
  %246 = vmatpush1.bf16.msra.mxu0 %v181
  %247 = vmatprep.subr.bf16.mxu0 %v184
  %248 = vmatpush1.bf16.msra.mxu0 %v183
  %249 = vmatprep.subr.bf16.mxu0 %v186
  %250 = vmatpush1.bf16.msra.mxu0 %v185
  %251 = vmatprep.subr.bf16.mxu0 %v188
  %252 = vmatpush1.bf16.msra.mxu0 %v187
  %253 = vmatprep.subr.bf16.mxu0 %v190
  %254 = vmatpush1.bf16.msra.mxu0 %v189
  %255 = vmatprep.subr.bf16.mxu0 %v192
  %256 = vmatpush1.bf16.msra.mxu0 %v191
  %257 = vmatprep.subr.bf16.mxu0 %v194
  %258 = vmatpush1.bf16.msra.mxu0 %v193
  %259 = vmatprep.subr.bf16.mxu0 %v196
  %260 = vmatpush1.bf16.msra.mxu0 %v195
  %261 = vmatprep.subr.bf16.mxu0 %v198
  %262 = vmatpush1.bf16.msra.mxu0 %v197
  %263 = vmatprep.subr.bf16.mxu0 %v200
  %264 = vmatpush1.bf16.msra.mxu0 %v199
  %265 = vmatprep.subr.bf16.mxu0 %v202
  %266 = vmatpush1.bf16.msra.mxu0 %v201
  %267 = vmatprep.mubr.bf16.mxu0 %v72
  %268 = vmatmul.mubr.bf16.gmra.mrb[0].mxu0 %v65
  %v269 = vpop.f32.mrb[0].mxu0
  %v270 = vadd.f32 0.0, %v269
  %v271 = vpop.f32.mrb[0].mxu0
  %v272 = vadd.f32 0.0, %v271
  %v273 = vpop.f32.mrb[0].mxu0
  %v274 = vpop.f32.mrb[0].mxu0
  %275 = vdwg.mxu0
  %v278 = vcombine.low %v270, %v272
  %v280 = vunpack.c.l.s4 1983009808
  %v281 = vunpack.c.0.s8 %v280
  %v282 = vlaneseq
  %v283 = vshrl.u32 %v282, 7
  %v284 = vsub.s32 %v281, %v283
  %v285 = vrot.slane %v278, %v284
  %v287 = vadd.f32 %v16, %v285
  %288 = vst [vmem:[#allocation2] sm:$0xf] %v287
  // Predicated region
  $region14: #{depth_decoder_forward.21} parent=0 // pred_check
    %p289 = pneg %p11
  $region15: #{depth_decoder_forward.21} parent=0 // pred_check_branch
    %291 = sbr.rel (%p289) target = $region17
  $region16: #{depth_decoder_forward.21} parent=0 // pred_region
    %v292 = vld [vmem:[#allocation2] sm:$0xf]
    %293 = vst [vmem:[%s2] sm:$0xf] %v292
  $region17: #{depth_decoder_forward.21} parent=0 // pred_fallthru
    _
  // Predicated region
  $region18: #{depth_decoder_forward.21} parent=0 // pred_check
    _
  $region19: #{depth_decoder_forward.21} parent=0 // pred_check_branch
    %295 = sbr.rel (0) target = $region21
  $region20: #{depth_decoder_forward.21} parent=0 // pred_region
    _
  $region21: #{depth_decoder_forward.21} parent=0 // pred_fallthru
    _
  // Predicated region
  $region22: #{depth_decoder_forward.21} parent=0 // pred_check
    _
  $region23: #{depth_decoder_forward.21} parent=0 // pred_check_branch
    %297 = sbr.rel (0) target = $region25
  $region24: #{depth_decoder_forward.21} parent=0 // pred_region
    _
  $region25: #{depth_decoder_forward.21} parent=0 // pred_fallthru
    _

// kernel: depth_decoder_forward.19
$region0: #{depth_decoder_forward.19}
  #allocation0 [shape = 'u32[]', space=smem, size = 0x4, offset = 0x4, fixed_abs, tag = 'smem constant byte address 0x4 - core index']
  #allocation1 [shape = 'u32[144,128]{1,0:T(1,128)}', space=vmem, size = 0x12000, scoped, tag = 'internal scratch']
  #allocation2 [shape = 'f32[2,256]{1,0:T(2,128)}', space=vmem, size = 0x800, scoped, tag = 'scratch operand']
  %s0 = inlined_call_operand.vmem [shape: bf16[2,1024], index: 0, kind: input, shape index: {}]
  %s1 = inlined_call_operand.vmem [shape: bf16[1024,256], index: 1, kind: input, shape index: {}]
  %s2 = inlined_call_operand.vmem [shape: f32[2,256], index: 2, kind: output, shape index: {}]
  %s3 = sld [smem:[#allocation0]]
  $region26: #{depth_decoder_forward.19} parent=0
    _
  %s5 = ssub.s32 1, %s3
  %s6 = scalar_select 0, %s5, %s3
  // Predicated region
  $region2: #{depth_decoder_forward.19} parent=0 // pred_check
    _
  $region3: #{depth_decoder_forward.19} parent=0 // pred_check_branch
    %8 = sbr.rel (0) target = $region5
  $region4: #{depth_decoder_forward.19} parent=0 // pred_region
    _
  $region5: #{depth_decoder_forward.19} parent=0 // pred_fallthru
    _
  // Predicated region
  $region6: #{depth_decoder_forward.19} parent=0 // pred_check
    _
  $region7: #{depth_decoder_forward.19} parent=0 // pred_check_branch
    %10 = sbr.rel (0) target = $region9
  $region8: #{depth_decoder_forward.19} parent=0 // pred_region
    _
  $region9: #{depth_decoder_forward.19} parent=0 // pred_fallthru
    _
  %p11 = scmp.eq.s32.totalorder 0, 0
  // Predicated region
  $region10: #{depth_decoder_forward.19} parent=0 // pred_check
    %p12 = pneg %p11
  $region11: #{depth_decoder_forward.19} parent=0 // pred_check_branch
    %14 = sbr.rel (%p12) target = $region13
  $region12: #{depth_decoder_forward.19} parent=0 // pred_region
    %15 = vst [vmem:[#allocation2] sm:$0xf] 0.0
  $region13: #{depth_decoder_forward.19} parent=0 // pred_fallthru
    _
  %v16 = vld [vmem:[#allocation2] sm:$0xf]
  %v17 = vld [vmem:[%s0] sm:$0xff]
  %v18 = vld [vmem:[%s1] sm:$0xff]
  %v19 = vld [vmem:[%s1 + $0x8] sm:$0xff]
  %v20 = vld [vmem:[%s1 + $0x10] sm:$0xff]
  %v21 = vld [vmem:[%s1 + $0x18] sm:$0xff]
  %v22 = vld [vmem:[%s1 + $0x20] sm:$0xff]
  %v23 = vld [vmem:[%s1 + $0x28] sm:$0xff]
  %v24 = vld [vmem:[%s1 + $0x30] sm:$0xff]
  %v25 = vld [vmem:[%s1 + $0x38] sm:$0xff]
  %v26 = vld [vmem:[%s1 + $0x40] sm:$0xff]
  %v27 = vld [vmem:[%s1 + $0x48] sm:$0xff]
  %v28 = vld [vmem:[%s1 + $0x50] sm:$0xff]
  %v29 = vld [vmem:[%s1 + $0x58] sm:$0xff]
  %v30 = vld [vmem:[%s1 + $0x60] sm:$0xff]
  %v31 = vld [vmem:[%s1 + $0x68] sm:$0xff]
  %v32 = vld [vmem:[%s1 + $0x70] sm:$0xff]
  %v33 = vld [vmem:[%s1 + $0x78] sm:$0xff]
  %v34 = vld [vmem:[%s1 + $0x80] sm:$0xff]
  %v35 = vld [vmem:[%s1 + $0x88] sm:$0xff]
  %v36 = vld [vmem:[%s1 + $0x90] sm:$0xff]
  %v37 = vld [vmem:[%s1 + $0x98] sm:$0xff]
  %v38 = vld [vmem:[%s1 + $0xa0] sm:$0xff]
  %v39 = vld [vmem:[%s1 + $0xa8] sm:$0xff]
  %v40 = vld [vmem:[%s1 + $0xb0] sm:$0xff]
  %v41 = vld [vmem:[%s1 + $0xb8] sm:$0xff]
  %v42 = vld [vmem:[%s1 + $0xc0] sm:$0xff]
  %v43 = vld [vmem:[%s1 + $0xc8] sm:$0xff]
  %v44 = vld [vmem:[%s1 + $0xd0] sm:$0xff]
  %v45 = vld [vmem:[%s1 + $0xd8] sm:$0xff]
  %v46 = vld [vmem:[%s1 + $0xe0] sm:$0xff]
  %v47 = vld [vmem:[%s1 + $0xe8] sm:$0xff]
  %v48 = vld [vmem:[%s1 + $0xf0] sm:$0xff]
  %v49 = vld [vmem:[%s1 + $0xf8] sm:$0xff]
  %v50 = vld [vmem:[%s1 + $0x100] sm:$0xff]
  %v51 = vld [vmem:[%s1 + $0x108] sm:$0xff]
  %v52 = vld [vmem:[%s1 + $0x110] sm:$0xff]
  %v53 = vld [vmem:[%s1 + $0x118] sm:$0xff]
  %v54 = vld [vmem:[%s1 + $0x120] sm:$0xff]
  %v55 = vld [vmem:[%s1 + $0x128] sm:$0xff]
  %v56 = vld [vmem:[%s1 + $0x130] sm:$0xff]
  %v57 = vld [vmem:[%s1 + $0x138] sm:$0xff]
  %v58 = vld [vmem:[%s1 + $0x140] sm:$0xff]
  %v59 = vld [vmem:[%s1 + $0x148] sm:$0xff]
  %v60 = vld [vmem:[%s1 + $0x150] sm:$0xff]
  %v61 = vld [vmem:[%s1 + $0x158] sm:$0xff]
  %v62 = vld [vmem:[%s1 + $0x160] sm:$0xff]
  %v63 = vld [vmem:[%s1 + $0x168] sm:$0xff]
  %v64 = vld [vmem:[%s1 + $0x170] sm:$0xff]
  %v65 = vld [vmem:[%s1 + $0x178] sm:$0xff]
  %v66 = vld [vmem:[%s1 + $0x180] sm:$0xff]
  %v67 = vld [vmem:[%s1 + $0x188] sm:$0xff]
  %v68 = vld [vmem:[%s1 + $0x190] sm:$0xff]
  %v69 = vld [vmem:[%s1 + $0x198] sm:$0xff]
  %v70 = vld [vmem:[%s1 + $0x1a0] sm:$0xff]
  %v71 = vld [vmem:[%s1 + $0x1a8] sm:$0xff]
  %v72 = vld [vmem:[%s1 + $0x1b0] sm:$0xff]
  %v73 = vld [vmem:[%s1 + $0x1b8] sm:$0xff]
  %v74 = vld [vmem:[%s1 + $0x1c0] sm:$0xff]
  %v75 = vld [vmem:[%s1 + $0x1c8] sm:$0xff]
  %v76 = vld [vmem:[%s1 + $0x1d0] sm:$0xff]
  %v77 = vld [vmem:[%s1 + $0x1d8] sm:$0xff]
  %v78 = vld [vmem:[%s1 + $0x1e0] sm:$0xff]
  %v79 = vld [vmem:[%s1 + $0x1e8] sm:$0xff]
  %v80 = vld [vmem:[%s1 + $0x1f0] sm:$0xff]
  %v81 = vld [vmem:[%s1 + $0x1f8] sm:$0xff]
  %v82 = vld [vmem:[%s1 + $0x200] sm:$0xff]
  %v83 = vld [vmem:[%s1 + $0x208] sm:$0xff]
  %v84 = vld [vmem:[%s1 + $0x210] sm:$0xff]
  %v85 = vld [vmem:[%s1 + $0x218] sm:$0xff]
  %v86 = vld [vmem:[%s1 + $0x220] sm:$0xff]
  %v87 = vld [vmem:[%s1 + $0x228] sm:$0xff]
  %v88 = vld [vmem:[%s1 + $0x230] sm:$0xff]
  %v89 = vld [vmem:[%s1 + $0x238] sm:$0xff]
  %v90 = vld [vmem:[%s1 + $0x240] sm:$0xff]
  %v91 = vld [vmem:[%s1 + $0x248] sm:$0xff]
  %v92 = vld [vmem:[%s1 + $0x250] sm:$0xff]
  %v93 = vld [vmem:[%s1 + $0x258] sm:$0xff]
  %v94 = vld [vmem:[%s1 + $0x260] sm:$0xff]
  %v95 = vld [vmem:[%s1 + $0x268] sm:$0xff]
  %v96 = vld [vmem:[%s1 + $0x270] sm:$0xff]
  %v97 = vld [vmem:[%s1 + $0x278] sm:$0xff]
  %v98 = vld [vmem:[%s1 + $0x280] sm:$0xff]
  %v99 = vld [vmem:[%s1 + $0x288] sm:$0xff]
  %v100 = vld [vmem:[%s1 + $0x290] sm:$0xff]
  %v101 = vld [vmem:[%s1 + $0x298] sm:$0xff]
  %v102 = vld [vmem:[%s1 + $0x2a0] sm:$0xff]
  %v103 = vld [vmem:[%s1 + $0x2a8] sm:$0xff]
  %v104 = vld [vmem:[%s1 + $0x2b0] sm:$0xff]
  %v105 = vld [vmem:[%s1 + $0x2b8] sm:$0xff]
  %v106 = vld [vmem:[%s1 + $0x2c0] sm:$0xff]
  %v107 = vld [vmem:[%s1 + $0x2c8] sm:$0xff]
  %v108 = vld [vmem:[%s1 + $0x2d0] sm:$0xff]
  %v109 = vld [vmem:[%s1 + $0x2d8] sm:$0xff]
  %v110 = vld [vmem:[%s1 + $0x2e0] sm:$0xff]
  %v111 = vld [vmem:[%s1 + $0x2e8] sm:$0xff]
  %v112 = vld [vmem:[%s1 + $0x2f0] sm:$0xff]
  %v113 = vld [vmem:[%s1 + $0x2f8] sm:$0xff]
  %v114 = vld [vmem:[%s1 + $0x300] sm:$0xff]
  %v115 = vld [vmem:[%s1 + $0x308] sm:$0xff]
  %v116 = vld [vmem:[%s1 + $0x310] sm:$0xff]
  %v117 = vld [vmem:[%s1 + $0x318] sm:$0xff]
  %v118 = vld [vmem:[%s1 + $0x320] sm:$0xff]
  %v119 = vld [vmem:[%s1 + $0x328] sm:$0xff]
  %v120 = vld [vmem:[%s1 + $0x330] sm:$0xff]
  %v121 = vld [vmem:[%s1 + $0x338] sm:$0xff]
  %v122 = vld [vmem:[%s1 + $0x340] sm:$0xff]
  %v123 = vld [vmem:[%s1 + $0x348] sm:$0xff]
  %v124 = vld [vmem:[%s1 + $0x350] sm:$0xff]
  %v125 = vld [vmem:[%s1 + $0x358] sm:$0xff]
  %v126 = vld [vmem:[%s1 + $0x360] sm:$0xff]
  %v127 = vld [vmem:[%s1 + $0x368] sm:$0xff]
  %v128 = vld [vmem:[%s1 + $0x370] sm:$0xff]
  %v129 = vld [vmem:[%s1 + $0x378] sm:$0xff]
  %v130 = vld [vmem:[%s1 + $0x380] sm:$0xff]
  %v131 = vld [vmem:[%s1 + $0x388] sm:$0xff]
  %v132 = vld [vmem:[%s1 + $0x390] sm:$0xff]
  %v133 = vld [vmem:[%s1 + $0x398] sm:$0xff]
  %v134 = vld [vmem:[%s1 + $0x3a0] sm:$0xff]
  %v135 = vld [vmem:[%s1 + $0x3a8] sm:$0xff]
  %v136 = vld [vmem:[%s1 + $0x3b0] sm:$0xff]
  %v137 = vld [vmem:[%s1 + $0x3b8] sm:$0xff]
  %v138 = vld [vmem:[%s1 + $0x3c0] sm:$0xff]
  %v139 = vld [vmem:[%s1 + $0x3c8] sm:$0xff]
  %v140 = vld [vmem:[%s1 + $0x3d0] sm:$0xff]
  %v141 = vld [vmem:[%s1 + $0x3d8] sm:$0xff]
  %v142 = vld [vmem:[%s1 + $0x3e0] sm:$0xff]
  %v143 = vld [vmem:[%s1 + $0x3e8] sm:$0xff]
  %v144 = vld [vmem:[%s1 + $0x3f0] sm:$0xff]
  %v145 = vld [vmem:[%s1 + $0x3f8] sm:$0xff]
  %v147 = vcombine.high %v17, %v17
  %v149 = vunpack.c.l.s4 1966171168
  %v150 = vunpack.c.0.s8 %v149
  %v151 = vlaneseq
  %v152 = vshrl.u32 %v151, 7
  %v153 = vsub.s32 %v150, %v152
  %v154 = vrot.slane %v17, %v153
  %v156 = vunpack.c.l.s4 1966171168
  %v157 = vunpack.c.0.s8 %v156
  %v158 = vlaneseq
  %v159 = vshrl.u32 %v158, 7
  %v160 = vsub.s32 %v157, %v159
  %v161 = vrot.slane %v147, %v160
  %v162 = vcombine.high %v154, %v154
  %v163 = vcombine.high %v161, %v161
  %v165 = vunpack.c.l.s4 1966171168
  %v166 = vunpack.c.0.s8 %v165
  %v167 = vlaneseq
  %v168 = vshrl.u32 %v167, 7
  %v169 = vsub.s32 %v166, %v168
  %v170 = vrot.slane %v154, %v169
  %v172 = vunpack.c.l.s4 1966171168
  %v173 = vunpack.c.0.s8 %v172
  %v174 = vlaneseq
  %v175 = vshrl.u32 %v174, 7
  %v176 = vsub.s32 %v173, %v175
  %v177 = vrot.slane %v161, %v176
  %v179 = vunpack.c.l.s4 1966171168
  %v180 = vunpack.c.0.s8 %v179
  %v181 = vlaneseq
  %v182 = vshrl.u32 %v181, 7
  %v183 = vsub.s32 %v180, %v182
  %v184 = vrot.slane %v162, %v183
  %v186 = vunpack.c.l.s4 1966171168
  %v187 = vunpack.c.0.s8 %v186
  %v188 = vlaneseq
  %v189 = vshrl.u32 %v188, 7
  %v190 = vsub.s32 %v187, %v189
  %v191 = vrot.slane %v163, %v190
  %v192 = vcombine.high %v170, %v170
  %v193 = vcombine.high %v177, %v177
  %v194 = vcombine.high %v184, %v184
  %v195 = vcombine.high %v191, %v191
  %v332 = vunpack.c.l.b16 %v18
  %v333 = vunpack.c.h.b16 %v18
  %v334 = vunpack.c.l.b16 %v19
  %v335 = vunpack.c.h.b16 %v19
  %v336 = vunpack.c.l.b16 %v20
  %v337 = vunpack.c.h.b16 %v20
  %v338 = vunpack.c.l.b16 %v21
  %v339 = vunpack.c.h.b16 %v21
  %v340 = vunpack.c.l.b16 %v22
  %v341 = vunpack.c.h.b16 %v22
  %v342 = vunpack.c.l.b16 %v23
  %v343 = vunpack.c.h.b16 %v23
  %v344 = vunpack.c.l.b16 %v24
  %v345 = vunpack.c.h.b16 %v24
  %v346 = vunpack.c.l.b16 %v25
  %v347 = vunpack.c.h.b16 %v25
  %v348 = vunpack.c.l.b16 %v26
  %v349 = vunpack.c.h.b16 %v26
  %v350 = vunpack.c.l.b16 %v27
  %v351 = vunpack.c.h.b16 %v27
  %v352 = vunpack.c.l.b16 %v28
  %v353 = vunpack.c.h.b16 %v28
  %v354 = vunpack.c.l.b16 %v29
  %v355 = vunpack.c.h.b16 %v29
  %v356 = vunpack.c.l.b16 %v30
  %v357 = vunpack.c.h.b16 %v30
  %v358 = vunpack.c.l.b16 %v31
  %v359 = vunpack.c.h.b16 %v31
  %v360 = vunpack.c.l.b16 %v32
  %v361 = vunpack.c.h.b16 %v32
  %v362 = vunpack.c.l.b16 %v33
  %v363 = vunpack.c.h.b16 %v33
  %v364 = vunpack.c.l.b16 %v34
  %v365 = vunpack.c.h.b16 %v34
  %v366 = vunpack.c.l.b16 %v35
  %v367 = vunpack.c.h.b16 %v35
  %v368 = vunpack.c.l.b16 %v36
  %v369 = vunpack.c.h.b16 %v36
  %v370 = vunpack.c.l.b16 %v37
  %v371 = vunpack.c.h.b16 %v37
  %v372 = vunpack.c.l.b16 %v38
  %v373 = vunpack.c.h.b16 %v38
  %v374 = vunpack.c.l.b16 %v39
  %v375 = vunpack.c.h.b16 %v39
  %v376 = vunpack.c.l.b16 %v40
  %v377 = vunpack.c.h.b16 %v40
  %v378 = vunpack.c.l.b16 %v41
  %v379 = vunpack.c.h.b16 %v41
  %v380 = vunpack.c.l.b16 %v42
  %v381 = vunpack.c.h.b16 %v42
  %v382 = vunpack.c.l.b16 %v43
  %v383 = vunpack.c.h.b16 %v43
  %v384 = vunpack.c.l.b16 %v44
  %v385 = vunpack.c.h.b16 %v44
  %v386 = vunpack.c.l.b16 %v45
  %v387 = vunpack.c.h.b16 %v45
  %v388 = vunpack.c.l.b16 %v46
  %v389 = vunpack.c.h.b16 %v46
  %v390 = vunpack.c.l.b16 %v47
  %v391 = vunpack.c.h.b16 %v47
  %v392 = vunpack.c.l.b16 %v48
  %v393 = vunpack.c.h.b16 %v48
  %v394 = vunpack.c.l.b16 %v49
  %v395 = vunpack.c.h.b16 %v49
  %v396 = vunpack.c.l.b16 %v50
  %v397 = vunpack.c.h.b16 %v50
  %v398 = vunpack.c.l.b16 %v51
  %v399 = vunpack.c.h.b16 %v51
  %v400 = vunpack.c.l.b16 %v52
  %v401 = vunpack.c.h.b16 %v52
  %v402 = vunpack.c.l.b16 %v53
  %v403 = vunpack.c.h.b16 %v53
  %v404 = vunpack.c.l.b16 %v54
  %v405 = vunpack.c.h.b16 %v54
  %v406 = vunpack.c.l.b16 %v55
  %v407 = vunpack.c.h.b16 %v55
  %v408 = vunpack.c.l.b16 %v56
  %v409 = vunpack.c.h.b16 %v56
  %v410 = vunpack.c.l.b16 %v57
  %v411 = vunpack.c.h.b16 %v57
  %v412 = vunpack.c.l.b16 %v58
  %v413 = vunpack.c.h.b16 %v58
  %v414 = vunpack.c.l.b16 %v59
  %v415 = vunpack.c.h.b16 %v59
  %v416 = vunpack.c.l.b16 %v60
  %v417 = vunpack.c.h.b16 %v60
  %v418 = vunpack.c.l.b16 %v61
  %v419 = vunpack.c.h.b16 %v61
  %v420 = vunpack.c.l.b16 %v62
  %v421 = vunpack.c.h.b16 %v62
  %v422 = vunpack.c.l.b16 %v63
  %v423 = vunpack.c.h.b16 %v63
  %v424 = vunpack.c.l.b16 %v64
  %v425 = vunpack.c.h.b16 %v64
  %v426 = vunpack.c.l.b16 %v65
  %v427 = vunpack.c.h.b16 %v65
  %v428 = vunpack.c.l.b16 %v66
  %v429 = vunpack.c.h.b16 %v66
  %v430 = vunpack.c.l.b16 %v67
  %v431 = vunpack.c.h.b16 %v67
  %v432 = vunpack.c.l.b16 %v68
  %v433 = vunpack.c.h.b16 %v68
  %v434 = vunpack.c.l.b16 %v69
  %v435 = vunpack.c.h.b16 %v69
  %v436 = vunpack.c.l.b16 %v70
  %v437 = vunpack.c.h.b16 %v70
  %v438 = vunpack.c.l.b16 %v71
  %v439 = vunpack.c.h.b16 %v71
  %v440 = vunpack.c.l.b16 %v72
  %v441 = vunpack.c.h.b16 %v72
  %v442 = vunpack.c.l.b16 %v73
  %v443 = vunpack.c.h.b16 %v73
  %v444 = vunpack.c.l.b16 %v74
  %v445 = vunpack.c.h.b16 %v74
  %v446 = vunpack.c.l.b16 %v75
  %v447 = vunpack.c.h.b16 %v75
  %v448 = vunpack.c.l.b16 %v76
  %v449 = vunpack.c.h.b16 %v76
  %v450 = vunpack.c.l.b16 %v77
  %v451 = vunpack.c.h.b16 %v77
  %v452 = vunpack.c.l.b16 %v78
  %v453 = vunpack.c.h.b16 %v78
  %v454 = vunpack.c.l.b16 %v79
  %v455 = vunpack.c.h.b16 %v79
  %v456 = vunpack.c.l.b16 %v80
  %v457 = vunpack.c.h.b16 %v80
  %v458 = vunpack.c.l.b16 %v81
  %v459 = vunpack.c.h.b16 %v81
  %v460 = vunpack.c.l.b16 %v82
  %v461 = vunpack.c.h.b16 %v82
  %v462 = vunpack.c.l.b16 %v83
  %v463 = vunpack.c.h.b16 %v83
  %v464 = vunpack.c.l.b16 %v84
  %v465 = vunpack.c.h.b16 %v84
  %v466 = vunpack.c.l.b16 %v85
  %v467 = vunpack.c.h.b16 %v85
  %v468 = vunpack.c.l.b16 %v86
  %v469 = vunpack.c.h.b16 %v86
  %v470 = vunpack.c.l.b16 %v87
  %v471 = vunpack.c.h.b16 %v87
  %v472 = vunpack.c.l.b16 %v88
  %v473 = vunpack.c.h.b16 %v88
  %v474 = vunpack.c.l.b16 %v89
  %v475 = vunpack.c.h.b16 %v89
  %v476 = vunpack.c.l.b16 %v90
  %v477 = vunpack.c.h.b16 %v90
  %v478 = vunpack.c.l.b16 %v91
  %v479 = vunpack.c.h.b16 %v91
  %v480 = vunpack.c.l.b16 %v92
  %v481 = vunpack.c.h.b16 %v92
  %v482 = vunpack.c.l.b16 %v93
  %v483 = vunpack.c.h.b16 %v93
  %v484 = vunpack.c.l.b16 %v94
  %v485 = vunpack.c.h.b16 %v94
  %v486 = vunpack.c.l.b16 %v95
  %v487 = vunpack.c.h.b16 %v95
  %v488 = vunpack.c.l.b16 %v96
  %v489 = vunpack.c.h.b16 %v96
  %v490 = vunpack.c.l.b16 %v97
  %v491 = vunpack.c.h.b16 %v97
  %v492 = vunpack.c.l.b16 %v98
  %v493 = vunpack.c.h.b16 %v98
  %v494 = vunpack.c.l.b16 %v99
  %v495 = vunpack.c.h.b16 %v99
  %v496 = vunpack.c.l.b16 %v100
  %v497 = vunpack.c.h.b16 %v100
  %v498 = vunpack.c.l.b16 %v101
  %v499 = vunpack.c.h.b16 %v101
  %v500 = vunpack.c.l.b16 %v102
  %v501 = vunpack.c.h.b16 %v102
  %v502 = vunpack.c.l.b16 %v103
  %v503 = vunpack.c.h.b16 %v103
  %v504 = vunpack.c.l.b16 %v104
  %v505 = vunpack.c.h.b16 %v104
  %v506 = vunpack.c.l.b16 %v105
  %v507 = vunpack.c.h.b16 %v105
  %v508 = vunpack.c.l.b16 %v106
  %v509 = vunpack.c.h.b16 %v106
  %v510 = vunpack.c.l.b16 %v107
  %v511 = vunpack.c.h.b16 %v107
  %v512 = vunpack.c.l.b16 %v108
  %v513 = vunpack.c.h.b16 %v108
  %v514 = vunpack.c.l.b16 %v109
  %v515 = vunpack.c.h.b16 %v109
  %v516 = vunpack.c.l.b16 %v110
  %v517 = vunpack.c.h.b16 %v110
  %v518 = vunpack.c.l.b16 %v111
  %v519 = vunpack.c.h.b16 %v111
  %v520 = vunpack.c.l.b16 %v112
  %v521 = vunpack.c.h.b16 %v112
  %v522 = vunpack.c.l.b16 %v113
  %v523 = vunpack.c.h.b16 %v113
  %v524 = vunpack.c.l.b16 %v114
  %v525 = vunpack.c.h.b16 %v114
  %v526 = vunpack.c.l.b16 %v115
  %v527 = vunpack.c.h.b16 %v115
  %v528 = vunpack.c.l.b16 %v116
  %v529 = vunpack.c.h.b16 %v116
  %v530 = vunpack.c.l.b16 %v117
  %v531 = vunpack.c.h.b16 %v117
  %v532 = vunpack.c.l.b16 %v118
  %v533 = vunpack.c.h.b16 %v118
  %v534 = vunpack.c.l.b16 %v119
  %v535 = vunpack.c.h.b16 %v119
  %v536 = vunpack.c.l.b16 %v120
  %v537 = vunpack.c.h.b16 %v120
  %v538 = vunpack.c.l.b16 %v121
  %v539 = vunpack.c.h.b16 %v121
  %v540 = vunpack.c.l.b16 %v122
  %v541 = vunpack.c.h.b16 %v122
  %v542 = vunpack.c.l.b16 %v123
  %v543 = vunpack.c.h.b16 %v123
  %v544 = vunpack.c.l.b16 %v124
  %v545 = vunpack.c.h.b16 %v124
  %v546 = vunpack.c.l.b16 %v125
  %v547 = vunpack.c.h.b16 %v125
  %v548 = vunpack.c.l.b16 %v126
  %v549 = vunpack.c.h.b16 %v126
  %v550 = vunpack.c.l.b16 %v127
  %v551 = vunpack.c.h.b16 %v127
  %v552 = vunpack.c.l.b16 %v128
  %v553 = vunpack.c.h.b16 %v128
  %v554 = vunpack.c.l.b16 %v129
  %v555 = vunpack.c.h.b16 %v129
  %v556 = vunpack.c.l.b16 %v130
  %v557 = vunpack.c.h.b16 %v130
  %v558 = vunpack.c.l.b16 %v131
  %v559 = vunpack.c.h.b16 %v131
  %v560 = vunpack.c.l.b16 %v132
  %v561 = vunpack.c.h.b16 %v132
  %v562 = vunpack.c.l.b16 %v133
  %v563 = vunpack.c.h.b16 %v133
  %v564 = vunpack.c.l.b16 %v134
  %v565 = vunpack.c.h.b16 %v134
  %v566 = vunpack.c.l.b16 %v135
  %v567 = vunpack.c.h.b16 %v135
  %v568 = vunpack.c.l.b16 %v136
  %v569 = vunpack.c.h.b16 %v136
  %v570 = vunpack.c.l.b16 %v137
  %v571 = vunpack.c.h.b16 %v137
  %v572 = vunpack.c.l.b16 %v138
  %v573 = vunpack.c.h.b16 %v138
  %v574 = vunpack.c.l.b16 %v139
  %v575 = vunpack.c.h.b16 %v139
  %v576 = vunpack.c.l.b16 %v140
  %v577 = vunpack.c.h.b16 %v140
  %v578 = vunpack.c.l.b16 %v141
  %v579 = vunpack.c.h.b16 %v141
  %v580 = vunpack.c.l.b16 %v142
  %v581 = vunpack.c.h.b16 %v142
  %v582 = vunpack.c.l.b16 %v143
  %v583 = vunpack.c.h.b16 %v143
  %v584 = vunpack.c.l.b16 %v144
  %v585 = vunpack.c.h.b16 %v144
  %v586 = vunpack.c.l.b16 %v145
  %v587 = vunpack.c.h.b16 %v145
  %v588 = vpack.c.b16 %v334, %v332
  %v589 = vpack.c.b16 %v335, %v333
  %v590 = vpack.c.b16 %v338, %v336
  %v591 = vpack.c.b16 %v339, %v337
  %v592 = vpack.c.b16 %v342, %v340
  %v593 = vpack.c.b16 %v343, %v341
  %v594 = vpack.c.b16 %v346, %v344
  %v595 = vpack.c.b16 %v347, %v345
  %v596 = vpack.c.b16 %v350, %v348
  %v597 = vpack.c.b16 %v351, %v349
  %v598 = vpack.c.b16 %v354, %v352
  %v599 = vpack.c.b16 %v355, %v353
  %v600 = vpack.c.b16 %v358, %v356
  %v601 = vpack.c.b16 %v359, %v357
  %v602 = vpack.c.b16 %v362, %v360
  %v603 = vpack.c.b16 %v363, %v361
  %v604 = vpack.c.b16 %v366, %v364
  %v605 = vpack.c.b16 %v367, %v365
  %v606 = vpack.c.b16 %v370, %v368
  %v607 = vpack.c.b16 %v371, %v369
  %v608 = vpack.c.b16 %v374, %v372
  %v609 = vpack.c.b16 %v375, %v373
  %v610 = vpack.c.b16 %v378, %v376
  %v611 = vpack.c.b16 %v379, %v377
  %v612 = vpack.c.b16 %v382, %v380
  %v613 = vpack.c.b16 %v383, %v381
  %v614 = vpack.c.b16 %v386, %v384
  %v615 = vpack.c.b16 %v387, %v385
  %v616 = vpack.c.b16 %v390, %v388
  %v617 = vpack.c.b16 %v391, %v389
  %v618 = vpack.c.b16 %v394, %v392
  %v619 = vpack.c.b16 %v395, %v393
  %v620 = vpack.c.b16 %v398, %v396
  %v621 = vpack.c.b16 %v399, %v397
  %v622 = vpack.c.b16 %v402, %v400
  %v623 = vpack.c.b16 %v403, %v401
  %v624 = vpack.c.b16 %v406, %v404
  %v625 = vpack.c.b16 %v407, %v405
  %v626 = vpack.c.b16 %v410, %v408
  %v627 = vpack.c.b16 %v411, %v409
  %v628 = vpack.c.b16 %v414, %v412
  %v629 = vpack.c.b16 %v415, %v413
  %v630 = vpack.c.b16 %v418, %v416
  %v631 = vpack.c.b16 %v419, %v417
  %v632 = vpack.c.b16 %v422, %v420
  %v633 = vpack.c.b16 %v423, %v421
  %v634 = vpack.c.b16 %v426, %v424
  %v635 = vpack.c.b16 %v427, %v425
  %v636 = vpack.c.b16 %v430, %v428
  %v637 = vpack.c.b16 %v431, %v429
  %v638 = vpack.c.b16 %v434, %v432
  %v639 = vpack.c.b16 %v435, %v433
  %v640 = vpack.c.b16 %v438, %v436
  %v641 = vpack.c.b16 %v439, %v437
  %v642 = vpack.c.b16 %v442, %v440
  %v643 = vpack.c.b16 %v443, %v441
  %v644 = vpack.c.b16 %v446, %v444
  %v645 = vpack.c.b16 %v447, %v445
  %v646 = vpack.c.b16 %v450, %v448
  %v647 = vpack.c.b16 %v451, %v449
  %v648 = vpack.c.b16 %v454, %v452
  %v649 = vpack.c.b16 %v455, %v453
  %v650 = vpack.c.b16 %v458, %v456
  %v651 = vpack.c.b16 %v459, %v457
  %v652 = vpack.c.b16 %v462, %v460
  %v653 = vpack.c.b16 %v463, %v461
  %v654 = vpack.c.b16 %v466, %v464
  %v655 = vpack.c.b16 %v467, %v465
  %v656 = vpack.c.b16 %v470, %v468
  %v657 = vpack.c.b16 %v471, %v469
  %v658 = vpack.c.b16 %v474, %v472
  %v659 = vpack.c.b16 %v475, %v473
  %v660 = vpack.c.b16 %v478, %v476
  %v661 = vpack.c.b16 %v479, %v477
  %v662 = vpack.c.b16 %v482, %v480
  %v663 = vpack.c.b16 %v483, %v481
  %v664 = vpack.c.b16 %v486, %v484
  %v665 = vpack.c.b16 %v487, %v485
  %v666 = vpack.c.b16 %v490, %v488
  %v667 = vpack.c.b16 %v491, %v489
  %v668 = vpack.c.b16 %v494, %v492
  %v669 = vpack.c.b16 %v495, %v493
  %v670 = vpack.c.b16 %v498, %v496
  %v671 = vpack.c.b16 %v499, %v497
  %v672 = vpack.c.b16 %v502, %v500
  %v673 = vpack.c.b16 %v503, %v501
  %v674 = vpack.c.b16 %v506, %v504
  %v675 = vpack.c.b16 %v507, %v505
  %v676 = vpack.c.b16 %v510, %v508
  %v677 = vpack.c.b16 %v511, %v509
  %v678 = vpack.c.b16 %v514, %v512
  %v679 = vpack.c.b16 %v515, %v513
  %v680 = vpack.c.b16 %v518, %v516
  %v681 = vpack.c.b16 %v519, %v517
  %v682 = vpack.c.b16 %v522, %v520
  %v683 = vpack.c.b16 %v523, %v521
  %v684 = vpack.c.b16 %v526, %v524
  %v685 = vpack.c.b16 %v527, %v525
  %v686 = vpack.c.b16 %v530, %v528
  %v687 = vpack.c.b16 %v531, %v529
  %v688 = vpack.c.b16 %v534, %v532
  %v689 = vpack.c.b16 %v535, %v533
  %v690 = vpack.c.b16 %v538, %v536
  %v691 = vpack.c.b16 %v539, %v537
  %v692 = vpack.c.b16 %v542, %v540
  %v693 = vpack.c.b16 %v543, %v541
  %v694 = vpack.c.b16 %v546, %v544
  %v695 = vpack.c.b16 %v547, %v545
  %v696 = vpack.c.b16 %v550, %v548
  %v697 = vpack.c.b16 %v551, %v549
  %v698 = vpack.c.b16 %v554, %v552
  %v699 = vpack.c.b16 %v555, %v553
  %v700 = vpack.c.b16 %v558, %v556
  %v701 = vpack.c.b16 %v559, %v557
  %v702 = vpack.c.b16 %v562, %v560
  %v703 = vpack.c.b16 %v563, %v561
  %v704 = vpack.c.b16 %v566, %v564
  %v705 = vpack.c.b16 %v567, %v565
  %v706 = vpack.c.b16 %v570, %v568
  %v707 = vpack.c.b16 %v571, %v569
  %v708 = vpack.c.b16 %v574, %v572
  %v709 = vpack.c.b16 %v575, %v573
  %v710 = vpack.c.b16 %v578, %v576
  %v711 = vpack.c.b16 %v579, %v577
  %v712 = vpack.c.b16 %v582, %v580
  %v713 = vpack.c.b16 %v583, %v581
  %v714 = vpack.c.b16 %v586, %v584
  %v715 = vpack.c.b16 %v587, %v585
  %844 = vmatprep.subr.bf16.mxu0 %v589
  %845 = vmatpush1.bf16.msra.mxu0 %v588
  %846 = vmatprep.subr.bf16.mxu0 %v591
  %847 = vmatpush1.bf16.msra.mxu0 %v590
  %848 = vmatprep.subr.bf16.mxu0 %v593
  %849 = vmatpush1.bf16.msra.mxu0 %v592
  %850 = vmatprep.subr.bf16.mxu0 %v595
  %851 = vmatpush1.bf16.msra.mxu0 %v594
  %852 = vmatprep.subr.bf16.mxu0 %v597
  %853 = vmatpush1.bf16.msra.mxu0 %v596
  %854 = vmatprep.subr.bf16.mxu0 %v599
  %855 = vmatpush1.bf16.msra.mxu0 %v598
  %856 = vmatprep.subr.bf16.mxu0 %v601
  %857 = vmatpush1.bf16.msra.mxu0 %v600
  %858 = vmatprep.subr.bf16.mxu0 %v603
  %859 = vmatpush1.bf16.msra.mxu0 %v602
  %860 = vmatprep.subr.bf16.mxu0 %v605
  %861 = vmatpush1.bf16.msra.mxu0 %v604
  %862 = vmatprep.subr.bf16.mxu0 %v607
  %863 = vmatpush1.bf16.msra.mxu0 %v606
  %864 = vmatprep.subr.bf16.mxu0 %v609
  %865 = vmatpush1.bf16.msra.mxu0 %v608
  %866 = vmatprep.subr.bf16.mxu0 %v611
  %867 = vmatpush1.bf16.msra.mxu0 %v610
  %868 = vmatprep.subr.bf16.mxu0 %v613
  %869 = vmatpush1.bf16.msra.mxu0 %v612
  %870 = vmatprep.subr.bf16.mxu0 %v615
  %871 = vmatpush1.bf16.msra.mxu0 %v614
  %872 = vmatprep.subr.bf16.mxu0 %v617
  %873 = vmatpush1.bf16.msra.mxu0 %v616
  %874 = vmatprep.subr.bf16.mxu0 %v619
  %875 = vmatpush1.bf16.msra.mxu0 %v618
  %876 = vmatprep.mubr.bf16.mxu0 %v184
  %877 = vmatmul.mubr.bf16.gmra.mrb[0].mxu0 %v170
  %v878 = vpop.f32.mrb[0].mxu0
  %v879 = vadd.f32 0.0, %v878
  %v880 = vpop.f32.mrb[0].mxu0
  %v881 = vadd.f32 0.0, %v880
  %v882 = vpop.f32.mrb[0].mxu0
  %v883 = vpop.f32.mrb[0].mxu0
  %884 = vdwg.mxu0
  %885 = vmatprep.subr.bf16.mxu0 %v621
  %886 = vmatpush1.bf16.msra.mxu0 %v620
  %887 = vmatprep.subr.bf16.mxu0 %v623
  %888 = vmatpush1.bf16.msra.mxu0 %v622
  %889 = vmatprep.subr.bf16.mxu0 %v625
  %890 = vmatpush1.bf16.msra.mxu0 %v624
  %891 = vmatprep.subr.bf16.mxu0 %v627
  %892 = vmatpush1.bf16.msra.mxu0 %v626
  %893 = vmatprep.subr.bf16.mxu0 %v629
  %894 = vmatpush1.bf16.msra.mxu0 %v628
  %895 = vmatprep.subr.bf16.mxu0 %v631
  %896 = vmatpush1.bf16.msra.mxu0 %v630
  %897 = vmatprep.subr.bf16.mxu0 %v633
  %898 = vmatpush1.bf16.msra.mxu0 %v632
  %899 = vmatprep.subr.bf16.mxu0 %v635
  %900 = vmatpush1.bf16.msra.mxu0 %v634
  %901 = vmatprep.subr.bf16.mxu0 %v637
  %902 = vmatpush1.bf16.msra.mxu0 %v636
  %903 = vmatprep.subr.bf16.mxu0 %v639
  %904 = vmatpush1.bf16.msra.mxu0 %v638
  %905 = vmatprep.subr.bf16.mxu0 %v641
  %906 = vmatpush1.bf16.msra.mxu0 %v640
  %907 = vmatprep.subr.bf16.mxu0 %v643
  %908 = vmatpush1.bf16.msra.mxu0 %v642
  %909 = vmatprep.subr.bf16.mxu0 %v645
  %910 = vmatpush1.bf16.msra.mxu0 %v644
  %911 = vmatprep.subr.bf16.mxu0 %v647
  %912 = vmatpush1.bf16.msra.mxu0 %v646
  %913 = vmatprep.subr.bf16.mxu0 %v649
  %914 = vmatpush1.bf16.msra.mxu0 %v648
  %915 = vmatprep.subr.bf16.mxu0 %v651
  %916 = vmatpush1.bf16.msra.mxu0 %v650
  %917 = vmatprep.mubr.bf16.mxu0 %v194
  %918 = vmatmul.mubr.bf16.gmra.mrb[0].mxu0 %v192
  %v919 = vpop.f32.mrb[0].mxu0
  %v920 = vadd.f32 %v879, %v919
  %v921 = vpop.f32.mrb[0].mxu0
  %v922 = vadd.f32 %v881, %v921
  %v923 = vpop.f32.mrb[0].mxu0
  %v924 = vpop.f32.mrb[0].mxu0
  %925 = vdwg.mxu0
  %926 = vmatprep.subr.bf16.mxu0 %v653
  %927 = vmatpush1.bf16.msra.mxu0 %v652
  %928 = vmatprep.subr.bf16.mxu0 %v655
  %929 = vmatpush1.bf16.msra.mxu0 %v654
  %930 = vmatprep.subr.bf16.mxu0 %v657
  %931 = vmatpush1.bf16.msra.mxu0 %v656
  %932 = vmatprep.subr.bf16.mxu0 %v659
  %933 = vmatpush1.bf16.msra.mxu0 %v658
  %934 = vmatprep.subr.bf16.mxu0 %v661
  %935 = vmatpush1.bf16.msra.mxu0 %v660
  %936 = vmatprep.subr.bf16.mxu0 %v663
  %937 = vmatpush1.bf16.msra.mxu0 %v662
  %938 = vmatprep.subr.bf16.mxu0 %v665
  %939 = vmatpush1.bf16.msra.mxu0 %v664
  %940 = vmatprep.subr.bf16.mxu0 %v667
  %941 = vmatpush1.bf16.msra.mxu0 %v666
  %942 = vmatprep.subr.bf16.mxu0 %v669
  %943 = vmatpush1.bf16.msra.mxu0 %v668
  %944 = vmatprep.subr.bf16.mxu0 %v671
  %945 = vmatpush1.bf16.msra.mxu0 %v670
  %946 = vmatprep.subr.bf16.mxu0 %v673
  %947 = vmatpush1.bf16.msra.mxu0 %v672
  %948 = vmatprep.subr.bf16.mxu0 %v675
  %949 = vmatpush1.bf16.msra.mxu0 %v674
  %950 = vmatprep.subr.bf16.mxu0 %v677
  %951 = vmatpush1.bf16.msra.mxu0 %v676
  %952 = vmatprep.subr.bf16.mxu0 %v679
  %953 = vmatpush1.bf16.msra.mxu0 %v678
  %954 = vmatprep.subr.bf16.mxu0 %v681
  %955 = vmatpush1.bf16.msra.mxu0 %v680
  %956 = vmatprep.subr.bf16.mxu0 %v683
  %957 = vmatpush1.bf16.msra.mxu0 %v682
  %958 = vmatprep.mubr.bf16.mxu0 %v191
  %959 = vmatmul.mubr.bf16.gmra.mrb[0].mxu0 %v177
  %v960 = vpop.f32.mrb[0].mxu0
  %v961 = vadd.f32 %v920, %v960
  %v962 = vpop.f32.mrb[0].mxu0
  %v963 = vadd.f32 %v922, %v962
  %v964 = vpop.f32.mrb[0].mxu0
  %v965 = vpop.f32.mrb[0].mxu0
  %966 = vdwg.mxu0
  %967 = vmatprep.subr.bf16.mxu0 %v685
  %968 = vmatpush1.bf16.msra.mxu0 %v684
  %969 = vmatprep.subr.bf16.mxu0 %v687
  %970 = vmatpush1.bf16.msra.mxu0 %v686
  %971 = vmatprep.subr.bf16.mxu0 %v689
  %972 = vmatpush1.bf16.msra.mxu0 %v688
  %973 = vmatprep.subr.bf16.mxu0 %v691
  %974 = vmatpush1.bf16.msra.mxu0 %v690
  %975 = vmatprep.subr.bf16.mxu0 %v693
  %976 = vmatpush1.bf16.msra.mxu0 %v692
  %977 = vmatprep.subr.bf16.mxu0 %v695
  %978 = vmatpush1.bf16.msra.mxu0 %v694
  %979 = vmatprep.subr.bf16.mxu0 %v697
  %980 = vmatpush1.bf16.msra.mxu0 %v696
  %981 = vmatprep.subr.bf16.mxu0 %v699
  %982 = vmatpush1.bf16.msra.mxu0 %v698
  %983 = vmatprep.subr.bf16.mxu0 %v701
  %984 = vmatpush1.bf16.msra.mxu0 %v700
  %985 = vmatprep.subr.bf16.mxu0 %v703
  %986 = vmatpush1.bf16.msra.mxu0 %v702
  %987 = vmatprep.subr.bf16.mxu0 %v705
  %988 = vmatpush1.bf16.msra.mxu0 %v704
  %989 = vmatprep.subr.bf16.mxu0 %v707
  %990 = vmatpush1.bf16.msra.mxu0 %v706
  %991 = vmatprep.subr.bf16.mxu0 %v709
  %992 = vmatpush1.bf16.msra.mxu0 %v708
  %993 = vmatprep.subr.bf16.mxu0 %v711
  %994 = vmatpush1.bf16.msra.mxu0 %v710
  %995 = vmatprep.subr.bf16.mxu0 %v713
  %996 = vmatpush1.bf16.msra.mxu0 %v712
  %997 = vmatprep.subr.bf16.mxu0 %v715
  %998 = vmatpush1.bf16.msra.mxu0 %v714
  %999 = vmatprep.mubr.bf16.mxu0 %v195
  %1000 = vmatmul.mubr.bf16.gmra.mrb[0].mxu0 %v193
  %v1001 = vpop.f32.mrb[0].mxu0
  %v1002 = vadd.f32 %v961, %v1001
  %v1003 = vpop.f32.mrb[0].mxu0
  %v1004 = vadd.f32 %v963, %v1003
  %v1005 = vpop.f32.mrb[0].mxu0
  %v1006 = vpop.f32.mrb[0].mxu0
  %1007 = vdwg.mxu0
  %v1010 = vcombine.low %v1002, %v1004
  %v1012 = vunpack.c.l.s4 1983009808
  %v1013 = vunpack.c.0.s8 %v1012
  %v1014 = vlaneseq
  %v1015 = vshrl.u32 %v1014, 7
  %v1016 = vsub.s32 %v1013, %v1015
  %v1017 = vrot.slane %v1010, %v1016
  %v1019 = vadd.f32 %v16, %v1017
  %1020 = vst [vmem:[#allocation2] sm:$0xf] %v1019
  // Predicated region
  $region14: #{depth_decoder_forward.19} parent=0 // pred_check
    %p1021 = pneg %p11
  $region15: #{depth_decoder_forward.19} parent=0 // pred_check_branch
    %1023 = sbr.rel (%p1021) target = $region17
  $region16: #{depth_decoder_forward.19} parent=0 // pred_region
    %v1024 = vld [vmem:[#allocation2] sm:$0xf]
    %1025 = vst [vmem:[%s2] sm:$0xf] %v1024
  $region17: #{depth_decoder_forward.19} parent=0 // pred_fallthru
    _
  // Predicated region
  $region18: #{depth_decoder_forward.19} parent=0 // pred_check
    _
  $region19: #{depth_decoder_forward.19} parent=0 // pred_check_branch
    %1027 = sbr.rel (0) target = $region21
  $region20: #{depth_decoder_forward.19} parent=0 // pred_region
    _
  $region21: #{depth_decoder_forward.19} parent=0 // pred_fallthru
    _
  // Predicated region
  $region22: #{depth_decoder_forward.19} parent=0 // pred_check
    _
  $region23: #{depth_decoder_forward.19} parent=0 // pred_check_branch
    %1029 = sbr.rel (0) target = $region25
  $region24: #{depth_decoder_forward.19} parent=0 // pred_region
    _
  $region25: #{depth_decoder_forward.19} parent=0 // pred_fallthru
    _

</llo_original>
